<compile_context>
chip_gen: v5e
topology: v5e:2x2
jax: 0.10.0
libtpu: 0.0.40
codegen_flags: <defaults>
</compile_context>

<pallas_src>
import functools

import jax
import jax.numpy as jnp
from jax.experimental import pallas as pl
from jax.experimental.pallas import tpu as pltpu


# ----------------------------------------------------------------------------
# Pallas kernel: stacked GRU (batch_first, zero initial state) + Linear+Sigmoid
# ----------------------------------------------------------------------------
def gru_classifier_kernel(lens_ref, x_ref, wih_ref, whh_ref, b_ref,
                          wfc_ref, bfc_ref, out_ref,
                          *, seq_len, rnn_layers, hidden_size, batch_pad):
    T, L, H, BS = seq_len, rnn_layers, hidden_size, batch_pad
    f32 = jnp.float32
    bf16 = jnp.bfloat16

    lens = lens_ref[...]                                   # (BS, 1) int32

    # ---- Hoisted layer-0 input projection: one matmul per gate over ALL T ----
    # x_ref is (T*BS, E) bf16; result gi0[g] is (T*BS, H) f32.
    x2d = x_ref[...]
    gi0 = [jnp.dot(x2d, wih_ref[0, g], preferred_element_type=f32)
           for g in range(3)]                              # gate order: r, z, n

    # ---- Hoist GRU bias tiles out of the recurrence (loaded once, resident).
    #   bias[l] == [b_ir+b_hr, b_iz+b_hz, b_in, b_hn], each (1, H) f32.
    bias = [[b_ref[l, g] for g in range(4)] for l in range(L)]

    # reset_state(): zero hidden state for every layer (carried as SSA values).
    h = [jnp.zeros((BS, H), f32) for _ in range(L)]

    # Fully unrolled recurrence (T and L are small static ints).
    for t in range(T):
        # pack_padded_sequence semantics: sequence b only advances while t < len_b.
        valid = t < lens                                   # (BS, 1) bool
        layer_in = None
        for l in range(L):
            h_prev = h[l]                                  # (BS, H) f32
            h_bf = h_prev.astype(bf16)

            if l == 0:
                # Static, sublane-aligned slices (start multiples of BS >= 8).
                gi_r = gi0[0][t * BS:(t + 1) * BS, :]
                gi_z = gi0[1][t * BS:(t + 1) * BS, :]
                gi_n = gi0[2][t * BS:(t + 1) * BS, :]
            else:
                xin = layer_in.astype(bf16)
                gi_r = jnp.dot(xin, wih_ref[l, 0], preferred_element_type=f32)
                gi_z = jnp.dot(xin, wih_ref[l, 1], preferred_element_type=f32)
                gi_n = jnp.dot(xin, wih_ref[l, 2], preferred_element_type=f32)

            gh_r = jnp.dot(h_bf, whh_ref[l, 0], preferred_element_type=f32)
            gh_z = jnp.dot(h_bf, whh_ref[l, 1], preferred_element_type=f32)
            gh_n = jnp.dot(h_bf, whh_ref[l, 2], preferred_element_type=f32)

            # PyTorch GRU gate order: r, z, n.
            r = jax.nn.sigmoid(gi_r + gh_r + bias[l][0])
            z = jax.nn.sigmoid(gi_z + gh_z + bias[l][1])
            n = jnp.tanh(gi_n + bias[l][2] + r * (gh_n + bias[l][3]))
            h_new = (1.0 - z) * n + z * h_prev

            # Freeze hidden state past the true sequence length, so the final
            # top-layer hidden equals z[b, actual_lengths[b]-1, :].
            h_new = jnp.where(valid, h_new, h_prev)
            h[l] = h_new
            layer_in = h_new

    # last_z = z[range(bs), actual_lengths - 1, :]  (== final top-layer hidden)
    h_top = h[L - 1]                                       # (BS, H) f32

    # TODO(synk): Dropout layers omitted — inference/eval semantics (identity).
    logits = jnp.dot(h_top.astype(bf16), wfc_ref[...],
                     preferred_element_type=f32) + bfc_ref[...]  # (BS, NT_pad)
    out_ref[...] = jax.nn.sigmoid(logits)                  # lane-dense (NT_pad=128k) store


# ----------------------------------------------------------------------------
# Wrapper: embedding gather + padding + weight packing (glue) + pallas_call
# ----------------------------------------------------------------------------
def rnn_multibinary_forward(batch_ids, actual_lengths, params):
    bs, T = batch_ids.shape
    emb_table = params["embedding"]                        # (V, E) f32
    w_ih, w_hh, b = params["w_ih"], params["w_hh"], params["b"]
    w_fc, b_fc = params["w_fc"], params["b_fc"]            # (H, num_tasks), (1, num_tasks)

    L, _, E, H = w_ih.shape
    num_tasks = w_fc.shape[1]

    # Pad batch to a sublane multiple (>= 8). For throughput, pack real
    # sequences toward the MXU row count (128 on v5e, 256 on v6e/v7x).
    BS = max(8, ((bs + 7) // 8) * 8)
    # Pad the output feature dim to a 128-lane multiple for an unmasked store.
    NT = max(128, ((num_tasks + 127) // 128) * 128)

    # nn.Embedding lookup (gather) — glue outside the kernel.
    x = jnp.take(emb_table, batch_ids, axis=0).astype(jnp.float32)   # (bs, T, E)
    x = jnp.pad(x, ((0, BS - bs), (0, 0), (0, 0)))                   # (BS, T, E)
    # Time-major, flattened so layer-0 projection is one big MXU matmul.
    x2d = jnp.transpose(x, (1, 0, 2)).reshape(T * BS, E).astype(jnp.bfloat16)

    # Padded rows get length 0 -> their hidden state never updates (stays zero).
    lens = jnp.pad(actual_lengths.astype(jnp.int32), (0, BS - bs)).reshape(BS, 1)

    w_fc_p = jnp.pad(w_fc, ((0, 0), (0, NT - num_tasks))).astype(jnp.bfloat16)
    b_fc_p = jnp.pad(b_fc, ((0, 0), (0, NT - num_tasks)))

    kernel = functools.partial(gru_classifier_kernel,
                               seq_len=T, rnn_layers=L,
                               hidden_size=H, batch_pad=BS)

    vmem = pl.BlockSpec(memory_space=pltpu.MemorySpace.VMEM)
    out = pl.pallas_call(
        kernel,
        out_shape=jax.ShapeDtypeStruct((BS, NT), jnp.float32),
        in_specs=[vmem] * 7,
        out_specs=vmem,
    )(lens, x2d,
      w_ih.astype(jnp.bfloat16), w_hh.astype(jnp.bfloat16), b,
      w_fc_p, b_fc_p)

    # Drop batch padding and output-lane padding.
    return out[:bs, :num_tasks]


# ----------------------------------------------------------------------------
# Deterministic parameter initialization (mirrors kaiming_init in nets.py)
# ----------------------------------------------------------------------------
def _kaiming_normal(key, shape, fan_in):
    return jax.random.normal(key, shape, dtype=jnp.float32) * jnp.sqrt(2.0 / fan_in)


def init_params(key, *, num_tasks, num_embeddings, embedding_dim, hidden_size,
                rnn_layers, padding_idx):
    assert embedding_dim == hidden_size, "demo stacks per-layer GRU weights uniformly"
    E, H, L, V = embedding_dim, hidden_size, rnn_layers, num_embeddings

    keys = jax.random.split(key, 2 + 2 * L)

    # nn.Embedding default init ~ N(0,1); padding_idx row zeroed.
    emb = jax.random.normal(keys[0], (V, E), dtype=jnp.float32)
    emb = emb.at[padding_idx].set(0.0)

    w_ih_l, w_hh_l = [], []
    for l in range(L):
        in_sz = E if l == 0 else H
        # torch weight_ih_l{l}: (3H, in_sz), gates stacked [r; z; n], kaiming_normal.
        wi = _kaiming_normal(keys[1 + 2 * l], (3 * H, in_sz), in_sz)
        wh = _kaiming_normal(keys[2 + 2 * l], (3 * H, H), H)
        # Repack gate-split & transposed for right-multiply: (3, in, H).
        w_ih_l.append(jnp.transpose(wi.reshape(3, H, in_sz), (0, 2, 1)))
        w_hh_l.append(jnp.transpose(wh.reshape(3, H, H), (0, 2, 1)))
    w_ih = jnp.stack(w_ih_l)                               # (L, 3, E, H)
    w_hh = jnp.stack(w_hh_l)                               # (L, 3, H, H)

    # kaiming_init: GRU biases -> 0.  Keep general packing anyway:
    # pre-sum r/z biases, keep n-gate input/hidden biases separate.
    b_ih = jnp.zeros((L, 3, 1, H), jnp.float32)
    b_hh = jnp.zeros((L, 3, 1, H), jnp.float32)
    b = jnp.concatenate([b_ih[:, 0:1] + b_hh[:, 0:1],      # b_ir + b_hr
                         b_ih[:, 1:2] + b_hh[:, 1:2],      # b_iz + b_hz
                         b_ih[:, 2:3],                     # b_in
                         b_hh[:, 2:3]], axis=1)            # b_hn    -> (L, 4, 1, H)

    # nn.Linear(hidden_size, num_tasks): kaiming_normal weight, zero bias.
    w_fc = _kaiming_normal(keys[-1], (num_tasks, H), H).T  # (H, num_tasks)
    b_fc = jnp.zeros((1, num_tasks), jnp.float32)

    return dict(embedding=emb, w_ih=w_ih, w_hh=w_hh, b=b, w_fc=w_fc, b_fc=b_fc)


if __name__ == "__main__":
    # Module hyperparameters (small, consistent with the forward pass).
    num_tasks = 4
    num_embeddings = 32
    embedding_dim = 32
    hidden_size = 32
    rnn_layers = 2
    padding_idx = 0

    bs, T = 2, 8

    key = jax.random.PRNGKey(0)
    pkey, dkey = jax.random.split(key)
    params = init_params(pkey,
                         num_tasks=num_tasks,
                         num_embeddings=num_embeddings,
                         embedding_dim=embedding_dim,
                         hidden_size=hidden_size,
                         rnn_layers=rnn_layers,
                         padding_idx=padding_idx)

    # Token ids in [1, V); lengths sorted descending (pack_padded_sequence default).
    batch_ids = jax.random.randint(dkey, (bs, T), 1, num_embeddings, dtype=jnp.int32)
    actual_lengths = jnp.array([T, 5], dtype=jnp.int32)
    # Zero out (pad) positions past each sequence's length, like padded input.
    pad_mask = jnp.arange(T)[None, :] < actual_lengths[:, None]
    batch_ids = jnp.where(pad_mask, batch_ids, padding_idx)

    out = rnn_multibinary_forward(batch_ids, actual_lengths, params)
    out = jax.block_until_ready(out)

    assert out.shape == (bs, num_tasks)
    assert bool(jnp.all((out >= 0.0) & (out <= 1.0)))
    print("KERNEL_OK")
</pallas_src>

<mosaic_0001>
module attributes {stable_mosaic.version = 11 : i64} {
  func.func @gru_classifier_kernel(%arg0: memref<8x1xi32, #tpu.memory_space<vmem>>, %arg1: memref<64x32xbf16, #tpu.memory_space<vmem>>, %arg2: memref<2x3x32x32xbf16, #tpu.memory_space<vmem>>, %arg3: memref<2x3x32x32xbf16, #tpu.memory_space<vmem>>, %arg4: memref<2x4x1x32xf32, #tpu.memory_space<vmem>>, %arg5: memref<32x128xbf16, #tpu.memory_space<vmem>>, %arg6: memref<1x128xf32, #tpu.memory_space<vmem>>, %arg7: memref<8x128xf32, #tpu.memory_space<vmem>>) attributes {dimension_semantics = [], scalar_prefetch = 0 : i64, scratch_operands = 0 : i64, tpu.core_type = #tpu.core_type<tc>} {
    %c0 = arith.constant 0 : index
    %c0_0 = arith.constant 0 : index
    %0 = vector.load %arg0[%c0, %c0_0] : memref<8x1xi32, #tpu.memory_space<vmem>>, vector<8x1xi32>
    %c0_1 = arith.constant 0 : index
    %c0_2 = arith.constant 0 : index
    %1 = vector.load %arg1[%c0_1, %c0_2] : memref<64x32xbf16, #tpu.memory_space<vmem>>, vector<64x32xbf16>
    %c0_3 = arith.constant 0 : index
    %c0_4 = arith.constant 0 : index
    %c0_5 = arith.constant 0 : index
    %c0_6 = arith.constant 0 : index
    %2 = vector.load %arg2[%c0_3, %c0_4, %c0_5, %c0_6] : memref<2x3x32x32xbf16, #tpu.memory_space<vmem>>, vector<1x1x32x32xbf16>
    %3 = vector.shape_cast %2 : vector<1x1x32x32xbf16> to vector<32x32xbf16>
    %cst = arith.constant dense<0.000000e+00> : vector<64x32xf32>
    %4 = tpu.matmul %1, %3, %cst {dimension_numbers = #tpu.dot_dimension_numbers<[1], [0], [0], [1], [0, 0, 1, 1], [], []>} : vector<64x32xbf16>, vector<32x32xbf16>, vector<64x32xf32> -> vector<64x32xf32>
    %c0_7 = arith.constant 0 : index
    %c1 = arith.constant 1 : index
    %c0_8 = arith.constant 0 : index
    %c0_9 = arith.constant 0 : index
    %5 = vector.load %arg2[%c0_7, %c1, %c0_8, %c0_9] : memref<2x3x32x32xbf16, #tpu.memory_space<vmem>>, vector<1x1x32x32xbf16>
    %6 = vector.shape_cast %5 : vector<1x1x32x32xbf16> to vector<32x32xbf16>
    %cst_10 = arith.constant dense<0.000000e+00> : vector<64x32xf32>
    %7 = tpu.matmul %1, %6, %cst_10 {dimension_numbers = #tpu.dot_dimension_numbers<[1], [0], [0], [1], [0, 0, 1, 1], [], []>} : vector<64x32xbf16>, vector<32x32xbf16>, vector<64x32xf32> -> vector<64x32xf32>
    %c0_11 = arith.constant 0 : index
    %c2 = arith.constant 2 : index
    %c0_12 = arith.constant 0 : index
    %c0_13 = arith.constant 0 : index
    %8 = vector.load %arg2[%c0_11, %c2, %c0_12, %c0_13] : memref<2x3x32x32xbf16, #tpu.memory_space<vmem>>, vector<1x1x32x32xbf16>
    %9 = vector.shape_cast %8 : vector<1x1x32x32xbf16> to vector<32x32xbf16>
    %cst_14 = arith.constant dense<0.000000e+00> : vector<64x32xf32>
    %10 = tpu.matmul %1, %9, %cst_14 {dimension_numbers = #tpu.dot_dimension_numbers<[1], [0], [0], [1], [0, 0, 1, 1], [], []>} : vector<64x32xbf16>, vector<32x32xbf16>, vector<64x32xf32> -> vector<64x32xf32>
    %c0_15 = arith.constant 0 : index
    %c0_16 = arith.constant 0 : index
    %c0_17 = arith.constant 0 : index
    %c0_18 = arith.constant 0 : index
    %11 = vector.load %arg4[%c0_15, %c0_16, %c0_17, %c0_18] : memref<2x4x1x32xf32, #tpu.memory_space<vmem>>, vector<1x1x1x32xf32>
    %12 = vector.shape_cast %11 : vector<1x1x1x32xf32> to vector<1x32xf32>
    %c0_19 = arith.constant 0 : index
    %c1_20 = arith.constant 1 : index
    %c0_21 = arith.constant 0 : index
    %c0_22 = arith.constant 0 : index
    %13 = vector.load %arg4[%c0_19, %c1_20, %c0_21, %c0_22] : memref<2x4x1x32xf32, #tpu.memory_space<vmem>>, vector<1x1x1x32xf32>
    %14 = vector.shape_cast %13 : vector<1x1x1x32xf32> to vector<1x32xf32>
    %c0_23 = arith.constant 0 : index
    %c2_24 = arith.constant 2 : index
    %c0_25 = arith.constant 0 : index
    %c0_26 = arith.constant 0 : index
    %15 = vector.load %arg4[%c0_23, %c2_24, %c0_25, %c0_26] : memref<2x4x1x32xf32, #tpu.memory_space<vmem>>, vector<1x1x1x32xf32>
    %16 = vector.shape_cast %15 : vector<1x1x1x32xf32> to vector<1x32xf32>
    %c0_27 = arith.constant 0 : index
    %c3 = arith.constant 3 : index
    %c0_28 = arith.constant 0 : index
    %c0_29 = arith.constant 0 : index
    %17 = vector.load %arg4[%c0_27, %c3, %c0_28, %c0_29] : memref<2x4x1x32xf32, #tpu.memory_space<vmem>>, vector<1x1x1x32xf32>
    %18 = vector.shape_cast %17 : vector<1x1x1x32xf32> to vector<1x32xf32>
    %c1_30 = arith.constant 1 : index
    %c0_31 = arith.constant 0 : index
    %c0_32 = arith.constant 0 : index
    %c0_33 = arith.constant 0 : index
    %19 = vector.load %arg4[%c1_30, %c0_31, %c0_32, %c0_33] : memref<2x4x1x32xf32, #tpu.memory_space<vmem>>, vector<1x1x1x32xf32>
    %20 = vector.shape_cast %19 : vector<1x1x1x32xf32> to vector<1x32xf32>
    %c1_34 = arith.constant 1 : index
    %c1_35 = arith.constant 1 : index
    %c0_36 = arith.constant 0 : index
    %c0_37 = arith.constant 0 : index
    %21 = vector.load %arg4[%c1_34, %c1_35, %c0_36, %c0_37] : memref<2x4x1x32xf32, #tpu.memory_space<vmem>>, vector<1x1x1x32xf32>
    %22 = vector.shape_cast %21 : vector<1x1x1x32xf32> to vector<1x32xf32>
    %c1_38 = arith.constant 1 : index
    %c2_39 = arith.constant 2 : index
    %c0_40 = arith.constant 0 : index
    %c0_41 = arith.constant 0 : index
    %23 = vector.load %arg4[%c1_38, %c2_39, %c0_40, %c0_41] : memref<2x4x1x32xf32, #tpu.memory_space<vmem>>, vector<1x1x1x32xf32>
    %24 = vector.shape_cast %23 : vector<1x1x1x32xf32> to vector<1x32xf32>
    %c1_42 = arith.constant 1 : index
    %c3_43 = arith.constant 3 : index
    %c0_44 = arith.constant 0 : index
    %c0_45 = arith.constant 0 : index
    %25 = vector.load %arg4[%c1_42, %c3_43, %c0_44, %c0_45] : memref<2x4x1x32xf32, #tpu.memory_space<vmem>>, vector<1x1x1x32xf32>
    %26 = vector.shape_cast %25 : vector<1x1x1x32xf32> to vector<1x32xf32>
    %cst_46 = arith.constant 0.000000e+00 : f32
    %27 = vector.broadcast %cst_46 : f32 to vector<8x32xf32>
    %cst_47 = arith.constant 0.000000e+00 : f32
    %28 = vector.broadcast %cst_47 : f32 to vector<8x32xf32>
    %c0_i32 = arith.constant 0 : i32
    %29 = vector.broadcast %c0_i32 : i32 to vector<8x1xi32>
    %30 = arith.cmpi sgt, %0, %29 : vector<8x1xi32>
    %31 = arith.truncf %27 : vector<8x32xf32> to vector<8x32xbf16>
    %32 = vector.extract_strided_slice %4 {offsets = [0, 0], sizes = [8, 32], strides = [1, 1]} : vector<64x32xf32> to vector<8x32xf32>
    %33 = vector.extract_strided_slice %7 {offsets = [0, 0], sizes = [8, 32], strides = [1, 1]} : vector<64x32xf32> to vector<8x32xf32>
    %34 = vector.extract_strided_slice %10 {offsets = [0, 0], sizes = [8, 32], strides = [1, 1]} : vector<64x32xf32> to vector<8x32xf32>
    %c0_48 = arith.constant 0 : index
    %c0_49 = arith.constant 0 : index
    %c0_50 = arith.constant 0 : index
    %c0_51 = arith.constant 0 : index
    %35 = vector.load %arg3[%c0_48, %c0_49, %c0_50, %c0_51] : memref<2x3x32x32xbf16, #tpu.memory_space<vmem>>, vector<1x1x32x32xbf16>
    %36 = vector.shape_cast %35 : vector<1x1x32x32xbf16> to vector<32x32xbf16>
    %cst_52 = arith.constant dense<0.000000e+00> : vector<8x32xf32>
    %37 = tpu.matmul %31, %36, %cst_52 {dimension_numbers = #tpu.dot_dimension_numbers<[1], [0], [0], [1], [0, 0, 1, 1], [], []>} : vector<8x32xbf16>, vector<32x32xbf16>, vector<8x32xf32> -> vector<8x32xf32>
    %c0_53 = arith.constant 0 : index
    %c1_54 = arith.constant 1 : index
    %c0_55 = arith.constant 0 : index
    %c0_56 = arith.constant 0 : index
    %38 = vector.load %arg3[%c0_53, %c1_54, %c0_55, %c0_56] : memref<2x3x32x32xbf16, #tpu.memory_space<vmem>>, vector<1x1x32x32xbf16>
    %39 = vector.shape_cast %38 : vector<1x1x32x32xbf16> to vector<32x32xbf16>
    %cst_57 = arith.constant dense<0.000000e+00> : vector<8x32xf32>
    %40 = tpu.matmul %31, %39, %cst_57 {dimension_numbers = #tpu.dot_dimension_numbers<[1], [0], [0], [1], [0, 0, 1, 1], [], []>} : vector<8x32xbf16>, vector<32x32xbf16>, vector<8x32xf32> -> vector<8x32xf32>
    %c0_58 = arith.constant 0 : index
    %c2_59 = arith.constant 2 : index
    %c0_60 = arith.constant 0 : index
    %c0_61 = arith.constant 0 : index
    %41 = vector.load %arg3[%c0_58, %c2_59, %c0_60, %c0_61] : memref<2x3x32x32xbf16, #tpu.memory_space<vmem>>, vector<1x1x32x32xbf16>
    %42 = vector.shape_cast %41 : vector<1x1x32x32xbf16> to vector<32x32xbf16>
    %cst_62 = arith.constant dense<0.000000e+00> : vector<8x32xf32>
    %43 = tpu.matmul %31, %42, %cst_62 {dimension_numbers = #tpu.dot_dimension_numbers<[1], [0], [0], [1], [0, 0, 1, 1], [], []>} : vector<8x32xbf16>, vector<32x32xbf16>, vector<8x32xf32> -> vector<8x32xf32>
    %44 = arith.addf %32, %37 : vector<8x32xf32>
    %45 = vector.broadcast %12 : vector<1x32xf32> to vector<8x32xf32>
    %46 = arith.addf %44, %45 : vector<8x32xf32>
    %47 = arith.negf %46 : vector<8x32xf32>
    %48 = math.exp %47 : vector<8x32xf32>
    %cst_63 = arith.constant 1.000000e+00 : f32
    %49 = vector.broadcast %cst_63 : f32 to vector<8x32xf32>
    %50 = arith.addf %49, %48 : vector<8x32xf32>
    %51 = arith.divf %49, %50 : vector<8x32xf32>
    %52 = arith.addf %33, %40 : vector<8x32xf32>
    %53 = vector.broadcast %14 : vector<1x32xf32> to vector<8x32xf32>
    %54 = arith.addf %52, %53 : vector<8x32xf32>
    %55 = arith.negf %54 : vector<8x32xf32>
    %56 = math.exp %55 : vector<8x32xf32>
    %cst_64 = arith.constant 1.000000e+00 : f32
    %57 = vector.broadcast %cst_64 : f32 to vector<8x32xf32>
    %58 = arith.addf %57, %56 : vector<8x32xf32>
    %59 = arith.divf %57, %58 : vector<8x32xf32>
    %60 = vector.broadcast %16 : vector<1x32xf32> to vector<8x32xf32>
    %61 = arith.addf %34, %60 : vector<8x32xf32>
    %62 = vector.broadcast %18 : vector<1x32xf32> to vector<8x32xf32>
    %63 = arith.addf %43, %62 : vector<8x32xf32>
    %64 = arith.mulf %51, %63 : vector<8x32xf32>
    %65 = arith.addf %61, %64 : vector<8x32xf32>
    %66 = math.tanh %65 : vector<8x32xf32>
    %cst_65 = arith.constant 1.000000e+00 : f32
    %67 = vector.broadcast %cst_65 : f32 to vector<8x32xf32>
    %68 = arith.subf %67, %59 : vector<8x32xf32>
    %69 = arith.mulf %68, %66 : vector<8x32xf32>
    %70 = arith.mulf %59, %27 : vector<8x32xf32>
    %71 = arith.addf %69, %70 : vector<8x32xf32>
    %72 = vector.shape_cast %30 : vector<8x1xi1> to vector<8x1xi1>
    %73 = vector.broadcast %72 : vector<8x1xi1> to vector<8x32xi1>
    %74 = arith.select %73, %71, %27 : vector<8x32xi1>, vector<8x32xf32>
    %75 = arith.truncf %28 : vector<8x32xf32> to vector<8x32xbf16>
    %76 = arith.truncf %74 : vector<8x32xf32> to vector<8x32xbf16>
    %c1_66 = arith.constant 1 : index
    %c0_67 = arith.constant 0 : index
    %c0_68 = arith.constant 0 : index
    %c0_69 = arith.constant 0 : index
    %77 = vector.load %arg2[%c1_66, %c0_67, %c0_68, %c0_69] : memref<2x3x32x32xbf16, #tpu.memory_space<vmem>>, vector<1x1x32x32xbf16>
    %78 = vector.shape_cast %77 : vector<1x1x32x32xbf16> to vector<32x32xbf16>
    %cst_70 = arith.constant dense<0.000000e+00> : vector<8x32xf32>
    %79 = tpu.matmul %76, %78, %cst_70 {dimension_numbers = #tpu.dot_dimension_numbers<[1], [0], [0], [1], [0, 0, 1, 1], [], []>} : vector<8x32xbf16>, vector<32x32xbf16>, vector<8x32xf32> -> vector<8x32xf32>
    %c1_71 = arith.constant 1 : index
    %c1_72 = arith.constant 1 : index
    %c0_73 = arith.constant 0 : index
    %c0_74 = arith.constant 0 : index
    %80 = vector.load %arg2[%c1_71, %c1_72, %c0_73, %c0_74] : memref<2x3x32x32xbf16, #tpu.memory_space<vmem>>, vector<1x1x32x32xbf16>
    %81 = vector.shape_cast %80 : vector<1x1x32x32xbf16> to vector<32x32xbf16>
    %cst_75 = arith.constant dense<0.000000e+00> : vector<8x32xf32>
    %82 = tpu.matmul %76, %81, %cst_75 {dimension_numbers = #tpu.dot_dimension_numbers<[1], [0], [0], [1], [0, 0, 1, 1], [], []>} : vector<8x32xbf16>, vector<32x32xbf16>, vector<8x32xf32> -> vector<8x32xf32>
    %c1_76 = arith.constant 1 : index
    %c2_77 = arith.constant 2 : index
    %c0_78 = arith.constant 0 : index
    %c0_79 = arith.constant 0 : index
    %83 = vector.load %arg2[%c1_76, %c2_77, %c0_78, %c0_79] : memref<2x3x32x32xbf16, #tpu.memory_space<vmem>>, vector<1x1x32x32xbf16>
    %84 = vector.shape_cast %83 : vector<1x1x32x32xbf16> to vector<32x32xbf16>
    %cst_80 = arith.constant dense<0.000000e+00> : vector<8x32xf32>
    %85 = tpu.matmul %76, %84, %cst_80 {dimension_numbers = #tpu.dot_dimension_numbers<[1], [0], [0], [1], [0, 0, 1, 1], [], []>} : vector<8x32xbf16>, vector<32x32xbf16>, vector<8x32xf32> -> vector<8x32xf32>
    %c1_81 = arith.constant 1 : index
    %c0_82 = arith.constant 0 : index
    %c0_83 = arith.constant 0 : index
    %c0_84 = arith.constant 0 : index
    %86 = vector.load %arg3[%c1_81, %c0_82, %c0_83, %c0_84] : memref<2x3x32x32xbf16, #tpu.memory_space<vmem>>, vector<1x1x32x32xbf16>
    %87 = vector.shape_cast %86 : vector<1x1x32x32xbf16> to vector<32x32xbf16>
    %cst_85 = arith.constant dense<0.000000e+00> : vector<8x32xf32>
    %88 = tpu.matmul %75, %87, %cst_85 {dimension_numbers = #tpu.dot_dimension_numbers<[1], [0], [0], [1], [0, 0, 1, 1], [], []>} : vector<8x32xbf16>, vector<32x32xbf16>, vector<8x32xf32> -> vector<8x32xf32>
    %c1_86 = arith.constant 1 : index
    %c1_87 = arith.constant 1 : index
    %c0_88 = arith.constant 0 : index
    %c0_89 = arith.constant 0 : index
    %89 = vector.load %arg3[%c1_86, %c1_87, %c0_88, %c0_89] : memref<2x3x32x32xbf16, #tpu.memory_space<vmem>>, vector<1x1x32x32xbf16>
    %90 = vector.shape_cast %89 : vector<1x1x32x32xbf16> to vector<32x32xbf16>
    %cst_90 = arith.constant dense<0.000000e+00> : vector<8x32xf32>
    %91 = tpu.matmul %75, %90, %cst_90 {dimension_numbers = #tpu.dot_dimension_numbers<[1], [0], [0], [1], [0, 0, 1, 1], [], []>} : vector<8x32xbf16>, vector<32x32xbf16>, vector<8x32xf32> -> vector<8x32xf32>
    %c1_91 = arith.constant 1 : index
    %c2_92 = arith.constant 2 : index
    %c0_93 = arith.constant 0 : index
    %c0_94 = arith.constant 0 : index
    %92 = vector.load %arg3[%c1_91, %c2_92, %c0_93, %c0_94] : memref<2x3x32x32xbf16, #tpu.memory_space<vmem>>, vector<1x1x32x32xbf16>
    %93 = vector.shape_cast %92 : vector<1x1x32x32xbf16> to vector<32x32xbf16>
    %cst_95 = arith.constant dense<0.000000e+00> : vector<8x32xf32>
    %94 = tpu.matmul %75, %93, %cst_95 {dimension_numbers = #tpu.dot_dimension_numbers<[1], [0], [0], [1], [0, 0, 1, 1], [], []>} : vector<8x32xbf16>, vector<32x32xbf16>, vector<8x32xf32> -> vector<8x32xf32>
    %95 = arith.addf %79, %88 : vector<8x32xf32>
    %96 = vector.broadcast %20 : vector<1x32xf32> to vector<8x32xf32>
    %97 = arith.addf %95, %96 : vector<8x32xf32>
    %98 = arith.negf %97 : vector<8x32xf32>
    %99 = math.exp %98 : vector<8x32xf32>
    %cst_96 = arith.constant 1.000000e+00 : f32
    %100 = vector.broadcast %cst_96 : f32 to vector<8x32xf32>
    %101 = arith.addf %100, %99 : vector<8x32xf32>
    %102 = arith.divf %100, %101 : vector<8x32xf32>
    %103 = arith.addf %82, %91 : vector<8x32xf32>
    %104 = vector.broadcast %22 : vector<1x32xf32> to vector<8x32xf32>
    %105 = arith.addf %103, %104 : vector<8x32xf32>
    %106 = arith.negf %105 : vector<8x32xf32>
    %107 = math.exp %106 : vector<8x32xf32>
    %cst_97 = arith.constant 1.000000e+00 : f32
    %108 = vector.broadcast %cst_97 : f32 to vector<8x32xf32>
    %109 = arith.addf %108, %107 : vector<8x32xf32>
    %110 = arith.divf %108, %109 : vector<8x32xf32>
    %111 = vector.broadcast %24 : vector<1x32xf32> to vector<8x32xf32>
    %112 = arith.addf %85, %111 : vector<8x32xf32>
    %113 = vector.broadcast %26 : vector<1x32xf32> to vector<8x32xf32>
    %114 = arith.addf %94, %113 : vector<8x32xf32>
    %115 = arith.mulf %102, %114 : vector<8x32xf32>
    %116 = arith.addf %112, %115 : vector<8x32xf32>
    %117 = math.tanh %116 : vector<8x32xf32>
    %cst_98 = arith.constant 1.000000e+00 : f32
    %118 = vector.broadcast %cst_98 : f32 to vector<8x32xf32>
    %119 = arith.subf %118, %110 : vector<8x32xf32>
    %120 = arith.mulf %119, %117 : vector<8x32xf32>
    %121 = arith.mulf %110, %28 : vector<8x32xf32>
    %122 = arith.addf %120, %121 : vector<8x32xf32>
    %123 = vector.shape_cast %30 : vector<8x1xi1> to vector<8x1xi1>
    %124 = vector.broadcast %123 : vector<8x1xi1> to vector<8x32xi1>
    %125 = arith.select %124, %122, %28 : vector<8x32xi1>, vector<8x32xf32>
    %c1_i32 = arith.constant 1 : i32
    %126 = vector.broadcast %c1_i32 : i32 to vector<8x1xi32>
    %127 = arith.cmpi sgt, %0, %126 : vector<8x1xi32>
    %128 = arith.truncf %74 : vector<8x32xf32> to vector<8x32xbf16>
    %129 = vector.extract_strided_slice %4 {offsets = [8, 0], sizes = [8, 32], strides = [1, 1]} : vector<64x32xf32> to vector<8x32xf32>
    %130 = vector.extract_strided_slice %7 {offsets = [8, 0], sizes = [8, 32], strides = [1, 1]} : vector<64x32xf32> to vector<8x32xf32>
    %131 = vector.extract_strided_slice %10 {offsets = [8, 0], sizes = [8, 32], strides = [1, 1]} : vector<64x32xf32> to vector<8x32xf32>
    %c0_99 = arith.constant 0 : index
    %c0_100 = arith.constant 0 : index
    %c0_101 = arith.constant 0 : index
    %c0_102 = arith.constant 0 : index
    %132 = vector.load %arg3[%c0_99, %c0_100, %c0_101, %c0_102] : memref<2x3x32x32xbf16, #tpu.memory_space<vmem>>, vector<1x1x32x32xbf16>
    %133 = vector.shape_cast %132 : vector<1x1x32x32xbf16> to vector<32x32xbf16>
    %cst_103 = arith.constant dense<0.000000e+00> : vector<8x32xf32>
    %134 = tpu.matmul %128, %133, %cst_103 {dimension_numbers = #tpu.dot_dimension_numbers<[1], [0], [0], [1], [0, 0, 1, 1], [], []>} : vector<8x32xbf16>, vector<32x32xbf16>, vector<8x32xf32> -> vector<8x32xf32>
    %c0_104 = arith.constant 0 : index
    %c1_105 = arith.constant 1 : index
    %c0_106 = arith.constant 0 : index
    %c0_107 = arith.constant 0 : index
    %135 = vector.load %arg3[%c0_104, %c1_105, %c0_106, %c0_107] : memref<2x3x32x32xbf16, #tpu.memory_space<vmem>>, vector<1x1x32x32xbf16>
    %136 = vector.shape_cast %135 : vector<1x1x32x32xbf16> to vector<32x32xbf16>
    %cst_108 = arith.constant dense<0.000000e+00> : vector<8x32xf32>
    %137 = tpu.matmul %128, %136, %cst_108 {dimension_numbers = #tpu.dot_dimension_numbers<[1], [0], [0], [1], [0, 0, 1, 1], [], []>} : vector<8x32xbf16>, vector<32x32xbf16>, vector<8x32xf32> -> vector<8x32xf32>
    %c0_109 = arith.constant 0 : index
    %c2_110 = arith.constant 2 : index
    %c0_111 = arith.constant 0 : index
    %c0_112 = arith.constant 0 : index
    %138 = vector.load %arg3[%c0_109, %c2_110, %c0_111, %c0_112] : memref<2x3x32x32xbf16, #tpu.memory_space<vmem>>, vector<1x1x32x32xbf16>
    %139 = vector.shape_cast %138 : vector<1x1x32x32xbf16> to vector<32x32xbf16>
    %cst_113 = arith.constant dense<0.000000e+00> : vector<8x32xf32>
    %140 = tpu.matmul %128, %139, %cst_113 {dimension_numbers = #tpu.dot_dimension_numbers<[1], [0], [0], [1], [0, 0, 1, 1], [], []>} : vector<8x32xbf16>, vector<32x32xbf16>, vector<8x32xf32> -> vector<8x32xf32>
    %141 = arith.addf %129, %134 : vector<8x32xf32>
    %142 = vector.broadcast %12 : vector<1x32xf32> to vector<8x32xf32>
    %143 = arith.addf %141, %142 : vector<8x32xf32>
    %144 = arith.negf %143 : vector<8x32xf32>
    %145 = math.exp %144 : vector<8x32xf32>
    %cst_114 = arith.constant 1.000000e+00 : f32
    %146 = vector.broadcast %cst_114 : f32 to vector<8x32xf32>
    %147 = arith.addf %146, %145 : vector<8x32xf32>
    %148 = arith.divf %146, %147 : vector<8x32xf32>
    %149 = arith.addf %130, %137 : vector<8x32xf32>
    %150 = vector.broadcast %14 : vector<1x32xf32> to vector<8x32xf32>
    %151 = arith.addf %149, %150 : vector<8x32xf32>
    %152 = arith.negf %151 : vector<8x32xf32>
    %153 = math.exp %152 : vector<8x32xf32>
    %cst_115 = arith.constant 1.000000e+00 : f32
    %154 = vector.broadcast %cst_115 : f32 to vector<8x32xf32>
    %155 = arith.addf %154, %153 : vector<8x32xf32>
    %156 = arith.divf %154, %155 : vector<8x32xf32>
    %157 = vector.broadcast %16 : vector<1x32xf32> to vector<8x32xf32>
    %158 = arith.addf %131, %157 : vector<8x32xf32>
    %159 = vector.broadcast %18 : vector<1x32xf32> to vector<8x32xf32>
    %160 = arith.addf %140, %159 : vector<8x32xf32>
    %161 = arith.mulf %148, %160 : vector<8x32xf32>
    %162 = arith.addf %158, %161 : vector<8x32xf32>
    %163 = math.tanh %162 : vector<8x32xf32>
    %cst_116 = arith.constant 1.000000e+00 : f32
    %164 = vector.broadcast %cst_116 : f32 to vector<8x32xf32>
    %165 = arith.subf %164, %156 : vector<8x32xf32>
    %166 = arith.mulf %165, %163 : vector<8x32xf32>
    %167 = arith.mulf %156, %74 : vector<8x32xf32>
    %168 = arith.addf %166, %167 : vector<8x32xf32>
    %169 = vector.shape_cast %127 : vector<8x1xi1> to vector<8x1xi1>
    %170 = vector.broadcast %169 : vector<8x1xi1> to vector<8x32xi1>
    %171 = arith.select %170, %168, %74 : vector<8x32xi1>, vector<8x32xf32>
    %172 = arith.truncf %125 : vector<8x32xf32> to vector<8x32xbf16>
    %173 = arith.truncf %171 : vector<8x32xf32> to vector<8x32xbf16>
    %c1_117 = arith.constant 1 : index
    %c0_118 = arith.constant 0 : index
    %c0_119 = arith.constant 0 : index
    %c0_120 = arith.constant 0 : index
    %174 = vector.load %arg2[%c1_117, %c0_118, %c0_119, %c0_120] : memref<2x3x32x32xbf16, #tpu.memory_space<vmem>>, vector<1x1x32x32xbf16>
    %175 = vector.shape_cast %174 : vector<1x1x32x32xbf16> to vector<32x32xbf16>
    %cst_121 = arith.constant dense<0.000000e+00> : vector<8x32xf32>
    %176 = tpu.matmul %173, %175, %cst_121 {dimension_numbers = #tpu.dot_dimension_numbers<[1], [0], [0], [1], [0, 0, 1, 1], [], []>} : vector<8x32xbf16>, vector<32x32xbf16>, vector<8x32xf32> -> vector<8x32xf32>
    %c1_122 = arith.constant 1 : index
    %c1_123 = arith.constant 1 : index
    %c0_124 = arith.constant 0 : index
    %c0_125 = arith.constant 0 : index
    %177 = vector.load %arg2[%c1_122, %c1_123, %c0_124, %c0_125] : memref<2x3x32x32xbf16, #tpu.memory_space<vmem>>, vector<1x1x32x32xbf16>
    %178 = vector.shape_cast %177 : vector<1x1x32x32xbf16> to vector<32x32xbf16>
    %cst_126 = arith.constant dense<0.000000e+00> : vector<8x32xf32>
    %179 = tpu.matmul %173, %178, %cst_126 {dimension_numbers = #tpu.dot_dimension_numbers<[1], [0], [0], [1], [0, 0, 1, 1], [], []>} : vector<8x32xbf16>, vector<32x32xbf16>, vector<8x32xf32> -> vector<8x32xf32>
    %c1_127 = arith.constant 1 : index
    %c2_128 = arith.constant 2 : index
    %c0_129 = arith.constant 0 : index
    %c0_130 = arith.constant 0 : index
    %180 = vector.load %arg2[%c1_127, %c2_128, %c0_129, %c0_130] : memref<2x3x32x32xbf16, #tpu.memory_space<vmem>>, vector<1x1x32x32xbf16>
    %181 = vector.shape_cast %180 : vector<1x1x32x32xbf16> to vector<32x32xbf16>
    %cst_131 = arith.constant dense<0.000000e+00> : vector<8x32xf32>
    %182 = tpu.matmul %173, %181, %cst_131 {dimension_numbers = #tpu.dot_dimension_numbers<[1], [0], [0], [1], [0, 0, 1, 1], [], []>} : vector<8x32xbf16>, vector<32x32xbf16>, vector<8x32xf32> -> vector<8x32xf32>
    %c1_132 = arith.constant 1 : index
    %c0_133 = arith.constant 0 : index
    %c0_134 = arith.constant 0 : index
    %c0_135 = arith.constant 0 : index
    %183 = vector.load %arg3[%c1_132, %c0_133, %c0_134, %c0_135] : memref<2x3x32x32xbf16, #tpu.memory_space<vmem>>, vector<1x1x32x32xbf16>
    %184 = vector.shape_cast %183 : vector<1x1x32x32xbf16> to vector<32x32xbf16>
    %cst_136 = arith.constant dense<0.000000e+00> : vector<8x32xf32>
    %185 = tpu.matmul %172, %184, %cst_136 {dimension_numbers = #tpu.dot_dimension_numbers<[1], [0], [0], [1], [0, 0, 1, 1], [], []>} : vector<8x32xbf16>, vector<32x32xbf16>, vector<8x32xf32> -> vector<8x32xf32>
    %c1_137 = arith.constant 1 : index
    %c1_138 = arith.constant 1 : index
    %c0_139 = arith.constant 0 : index
    %c0_140 = arith.constant 0 : index
    %186 = vector.load %arg3[%c1_137, %c1_138, %c0_139, %c0_140] : memref<2x3x32x32xbf16, #tpu.memory_space<vmem>>, vector<1x1x32x32xbf16>
    %187 = vector.shape_cast %186 : vector<1x1x32x32xbf16> to vector<32x32xbf16>
    %cst_141 = arith.constant dense<0.000000e+00> : vector<8x32xf32>
    %188 = tpu.matmul %172, %187, %cst_141 {dimension_numbers = #tpu.dot_dimension_numbers<[1], [0], [0], [1], [0, 0, 1, 1], [], []>} : vector<8x32xbf16>, vector<32x32xbf16>, vector<8x32xf32> -> vector<8x32xf32>
    %c1_142 = arith.constant 1 : index
    %c2_143 = arith.constant 2 : index
    %c0_144 = arith.constant 0 : index
    %c0_145 = arith.constant 0 : index
    %189 = vector.load %arg3[%c1_142, %c2_143, %c0_144, %c0_145] : memref<2x3x32x32xbf16, #tpu.memory_space<vmem>>, vector<1x1x32x32xbf16>
    %190 = vector.shape_cast %189 : vector<1x1x32x32xbf16> to vector<32x32xbf16>
    %cst_146 = arith.constant dense<0.000000e+00> : vector<8x32xf32>
    %191 = tpu.matmul %172, %190, %cst_146 {dimension_numbers = #tpu.dot_dimension_numbers<[1], [0], [0], [1], [0, 0, 1, 1], [], []>} : vector<8x32xbf16>, vector<32x32xbf16>, vector<8x32xf32> -> vector<8x32xf32>
    %192 = arith.addf %176, %185 : vector<8x32xf32>
    %193 = vector.broadcast %20 : vector<1x32xf32> to vector<8x32xf32>
    %194 = arith.addf %192, %193 : vector<8x32xf32>
    %195 = arith.negf %194 : vector<8x32xf32>
    %196 = math.exp %195 : vector<8x32xf32>
    %cst_147 = arith.constant 1.000000e+00 : f32
    %197 = vector.broadcast %cst_147 : f32 to vector<8x32xf32>
    %198 = arith.addf %197, %196 : vector<8x32xf32>
    %199 = arith.divf %197, %198 : vector<8x32xf32>
    %200 = arith.addf %179, %188 : vector<8x32xf32>
    %201 = vector.broadcast %22 : vector<1x32xf32> to vector<8x32xf32>
    %202 = arith.addf %200, %201 : vector<8x32xf32>
    %203 = arith.negf %202 : vector<8x32xf32>
    %204 = math.exp %203 : vector<8x32xf32>
    %cst_148 = arith.constant 1.000000e+00 : f32
    %205 = vector.broadcast %cst_148 : f32 to vector<8x32xf32>
    %206 = arith.addf %205, %204 : vector<8x32xf32>
    %207 = arith.divf %205, %206 : vector<8x32xf32>
    %208 = vector.broadcast %24 : vector<1x32xf32> to vector<8x32xf32>
    %209 = arith.addf %182, %208 : vector<8x32xf32>
    %210 = vector.broadcast %26 : vector<1x32xf32> to vector<8x32xf32>
    %211 = arith.addf %191, %210 : vector<8x32xf32>
    %212 = arith.mulf %199, %211 : vector<8x32xf32>
    %213 = arith.addf %209, %212 : vector<8x32xf32>
    %214 = math.tanh %213 : vector<8x32xf32>
    %cst_149 = arith.constant 1.000000e+00 : f32
    %215 = vector.broadcast %cst_149 : f32 to vector<8x32xf32>
    %216 = arith.subf %215, %207 : vector<8x32xf32>
    %217 = arith.mulf %216, %214 : vector<8x32xf32>
    %218 = arith.mulf %207, %125 : vector<8x32xf32>
    %219 = arith.addf %217, %218 : vector<8x32xf32>
    %220 = vector.shape_cast %127 : vector<8x1xi1> to vector<8x1xi1>
    %221 = vector.broadcast %220 : vector<8x1xi1> to vector<8x32xi1>
    %222 = arith.select %221, %219, %125 : vector<8x32xi1>, vector<8x32xf32>
    %c2_i32 = arith.constant 2 : i32
    %223 = vector.broadcast %c2_i32 : i32 to vector<8x1xi32>
    %224 = arith.cmpi sgt, %0, %223 : vector<8x1xi32>
    %225 = arith.truncf %171 : vector<8x32xf32> to vector<8x32xbf16>
    %226 = vector.extract_strided_slice %4 {offsets = [16, 0], sizes = [8, 32], strides = [1, 1]} : vector<64x32xf32> to vector<8x32xf32>
    %227 = vector.extract_strided_slice %7 {offsets = [16, 0], sizes = [8, 32], strides = [1, 1]} : vector<64x32xf32> to vector<8x32xf32>
    %228 = vector.extract_strided_slice %10 {offsets = [16, 0], sizes = [8, 32], strides = [1, 1]} : vector<64x32xf32> to vector<8x32xf32>
    %c0_150 = arith.constant 0 : index
    %c0_151 = arith.constant 0 : index
    %c0_152 = arith.constant 0 : index
    %c0_153 = arith.constant 0 : index
    %229 = vector.load %arg3[%c0_150, %c0_151, %c0_152, %c0_153] : memref<2x3x32x32xbf16, #tpu.memory_space<vmem>>, vector<1x1x32x32xbf16>
    %230 = vector.shape_cast %229 : vector<1x1x32x32xbf16> to vector<32x32xbf16>
    %cst_154 = arith.constant dense<0.000000e+00> : vector<8x32xf32>
    %231 = tpu.matmul %225, %230, %cst_154 {dimension_numbers = #tpu.dot_dimension_numbers<[1], [0], [0], [1], [0, 0, 1, 1], [], []>} : vector<8x32xbf16>, vector<32x32xbf16>, vector<8x32xf32> -> vector<8x32xf32>
    %c0_155 = arith.constant 0 : index
    %c1_156 = arith.constant 1 : index
    %c0_157 = arith.constant 0 : index
    %c0_158 = arith.constant 0 : index
    %232 = vector.load %arg3[%c0_155, %c1_156, %c0_157, %c0_158] : memref<2x3x32x32xbf16, #tpu.memory_space<vmem>>, vector<1x1x32x32xbf16>
    %233 = vector.shape_cast %232 : vector<1x1x32x32xbf16> to vector<32x32xbf16>
    %cst_159 = arith.constant dense<0.000000e+00> : vector<8x32xf32>
    %234 = tpu.matmul %225, %233, %cst_159 {dimension_numbers = #tpu.dot_dimension_numbers<[1], [0], [0], [1], [0, 0, 1, 1], [], []>} : vector<8x32xbf16>, vector<32x32xbf16>, vector<8x32xf32> -> vector<8x32xf32>
    %c0_160 = arith.constant 0 : index
    %c2_161 = arith.constant 2 : index
    %c0_162 = arith.constant 0 : index
    %c0_163 = arith.constant 0 : index
    %235 = vector.load %arg3[%c0_160, %c2_161, %c0_162, %c0_163] : memref<2x3x32x32xbf16, #tpu.memory_space<vmem>>, vector<1x1x32x32xbf16>
    %236 = vector.shape_cast %235 : vector<1x1x32x32xbf16> to vector<32x32xbf16>
    %cst_164 = arith.constant dense<0.000000e+00> : vector<8x32xf32>
    %237 = tpu.matmul %225, %236, %cst_164 {dimension_numbers = #tpu.dot_dimension_numbers<[1], [0], [0], [1], [0, 0, 1, 1], [], []>} : vector<8x32xbf16>, vector<32x32xbf16>, vector<8x32xf32> -> vector<8x32xf32>
    %238 = arith.addf %226, %231 : vector<8x32xf32>
    %239 = vector.broadcast %12 : vector<1x32xf32> to vector<8x32xf32>
    %240 = arith.addf %238, %239 : vector<8x32xf32>
    %241 = arith.negf %240 : vector<8x32xf32>
    %242 = math.exp %241 : vector<8x32xf32>
    %cst_165 = arith.constant 1.000000e+00 : f32
    %243 = vector.broadcast %cst_165 : f32 to vector<8x32xf32>
    %244 = arith.addf %243, %242 : vector<8x32xf32>
    %245 = arith.divf %243, %244 : vector<8x32xf32>
    %246 = arith.addf %227, %234 : vector<8x32xf32>
    %247 = vector.broadcast %14 : vector<1x32xf32> to vector<8x32xf32>
    %248 = arith.addf %246, %247 : vector<8x32xf32>
    %249 = arith.negf %248 : vector<8x32xf32>
    %250 = math.exp %249 : vector<8x32xf32>
    %cst_166 = arith.constant 1.000000e+00 : f32
    %251 = vector.broadcast %cst_166 : f32 to vector<8x32xf32>
    %252 = arith.addf %251, %250 : vector<8x32xf32>
    %253 = arith.divf %251, %252 : vector<8x32xf32>
    %254 = vector.broadcast %16 : vector<1x32xf32> to vector<8x32xf32>
    %255 = arith.addf %228, %254 : vector<8x32xf32>
    %256 = vector.broadcast %18 : vector<1x32xf32> to vector<8x32xf32>
    %257 = arith.addf %237, %256 : vector<8x32xf32>
    %258 = arith.mulf %245, %257 : vector<8x32xf32>
    %259 = arith.addf %255, %258 : vector<8x32xf32>
    %260 = math.tanh %259 : vector<8x32xf32>
    %cst_167 = arith.constant 1.000000e+00 : f32
    %261 = vector.broadcast %cst_167 : f32 to vector<8x32xf32>
    %262 = arith.subf %261, %253 : vector<8x32xf32>
    %263 = arith.mulf %262, %260 : vector<8x32xf32>
    %264 = arith.mulf %253, %171 : vector<8x32xf32>
    %265 = arith.addf %263, %264 : vector<8x32xf32>
    %266 = vector.shape_cast %224 : vector<8x1xi1> to vector<8x1xi1>
    %267 = vector.broadcast %266 : vector<8x1xi1> to vector<8x32xi1>
    %268 = arith.select %267, %265, %171 : vector<8x32xi1>, vector<8x32xf32>
    %269 = arith.truncf %222 : vector<8x32xf32> to vector<8x32xbf16>
    %270 = arith.truncf %268 : vector<8x32xf32> to vector<8x32xbf16>
    %c1_168 = arith.constant 1 : index
    %c0_169 = arith.constant 0 : index
    %c0_170 = arith.constant 0 : index
    %c0_171 = arith.constant 0 : index
    %271 = vector.load %arg2[%c1_168, %c0_169, %c0_170, %c0_171] : memref<2x3x32x32xbf16, #tpu.memory_space<vmem>>, vector<1x1x32x32xbf16>
    %272 = vector.shape_cast %271 : vector<1x1x32x32xbf16> to vector<32x32xbf16>
    %cst_172 = arith.constant dense<0.000000e+00> : vector<8x32xf32>
    %273 = tpu.matmul %270, %272, %cst_172 {dimension_numbers = #tpu.dot_dimension_numbers<[1], [0], [0], [1], [0, 0, 1, 1], [], []>} : vector<8x32xbf16>, vector<32x32xbf16>, vector<8x32xf32> -> vector<8x32xf32>
    %c1_173 = arith.constant 1 : index
    %c1_174 = arith.constant 1 : index
    %c0_175 = arith.constant 0 : index
    %c0_176 = arith.constant 0 : index
    %274 = vector.load %arg2[%c1_173, %c1_174, %c0_175, %c0_176] : memref<2x3x32x32xbf16, #tpu.memory_space<vmem>>, vector<1x1x32x32xbf16>
    %275 = vector.shape_cast %274 : vector<1x1x32x32xbf16> to vector<32x32xbf16>
    %cst_177 = arith.constant dense<0.000000e+00> : vector<8x32xf32>
    %276 = tpu.matmul %270, %275, %cst_177 {dimension_numbers = #tpu.dot_dimension_numbers<[1], [0], [0], [1], [0, 0, 1, 1], [], []>} : vector<8x32xbf16>, vector<32x32xbf16>, vector<8x32xf32> -> vector<8x32xf32>
    %c1_178 = arith.constant 1 : index
    %c2_179 = arith.constant 2 : index
    %c0_180 = arith.constant 0 : index
    %c0_181 = arith.constant 0 : index
    %277 = vector.load %arg2[%c1_178, %c2_179, %c0_180, %c0_181] : memref<2x3x32x32xbf16, #tpu.memory_space<vmem>>, vector<1x1x32x32xbf16>
    %278 = vector.shape_cast %277 : vector<1x1x32x32xbf16> to vector<32x32xbf16>
    %cst_182 = arith.constant dense<0.000000e+00> : vector<8x32xf32>
    %279 = tpu.matmul %270, %278, %cst_182 {dimension_numbers = #tpu.dot_dimension_numbers<[1], [0], [0], [1], [0, 0, 1, 1], [], []>} : vector<8x32xbf16>, vector<32x32xbf16>, vector<8x32xf32> -> vector<8x32xf32>
    %c1_183 = arith.constant 1 : index
    %c0_184 = arith.constant 0 : index
    %c0_185 = arith.constant 0 : index
    %c0_186 = arith.constant 0 : index
    %280 = vector.load %arg3[%c1_183, %c0_184, %c0_185, %c0_186] : memref<2x3x32x32xbf16, #tpu.memory_space<vmem>>, vector<1x1x32x32xbf16>
    %281 = vector.shape_cast %280 : vector<1x1x32x32xbf16> to vector<32x32xbf16>
    %cst_187 = arith.constant dense<0.000000e+00> : vector<8x32xf32>
    %282 = tpu.matmul %269, %281, %cst_187 {dimension_numbers = #tpu.dot_dimension_numbers<[1], [0], [0], [1], [0, 0, 1, 1], [], []>} : vector<8x32xbf16>, vector<32x32xbf16>, vector<8x32xf32> -> vector<8x32xf32>
    %c1_188 = arith.constant 1 : index
    %c1_189 = arith.constant 1 : index
    %c0_190 = arith.constant 0 : index
    %c0_191 = arith.constant 0 : index
    %283 = vector.load %arg3[%c1_188, %c1_189, %c0_190, %c0_191] : memref<2x3x32x32xbf16, #tpu.memory_space<vmem>>, vector<1x1x32x32xbf16>
    %284 = vector.shape_cast %283 : vector<1x1x32x32xbf16> to vector<32x32xbf16>
    %cst_192 = arith.constant dense<0.000000e+00> : vector<8x32xf32>
    %285 = tpu.matmul %269, %284, %cst_192 {dimension_numbers = #tpu.dot_dimension_numbers<[1], [0], [0], [1], [0, 0, 1, 1], [], []>} : vector<8x32xbf16>, vector<32x32xbf16>, vector<8x32xf32> -> vector<8x32xf32>
    %c1_193 = arith.constant 1 : index
    %c2_194 = arith.constant 2 : index
    %c0_195 = arith.constant 0 : index
    %c0_196 = arith.constant 0 : index
    %286 = vector.load %arg3[%c1_193, %c2_194, %c0_195, %c0_196] : memref<2x3x32x32xbf16, #tpu.memory_space<vmem>>, vector<1x1x32x32xbf16>
    %287 = vector.shape_cast %286 : vector<1x1x32x32xbf16> to vector<32x32xbf16>
    %cst_197 = arith.constant dense<0.000000e+00> : vector<8x32xf32>
    %288 = tpu.matmul %269, %287, %cst_197 {dimension_numbers = #tpu.dot_dimension_numbers<[1], [0], [0], [1], [0, 0, 1, 1], [], []>} : vector<8x32xbf16>, vector<32x32xbf16>, vector<8x32xf32> -> vector<8x32xf32>
    %289 = arith.addf %273, %282 : vector<8x32xf32>
    %290 = vector.broadcast %20 : vector<1x32xf32> to vector<8x32xf32>
    %291 = arith.addf %289, %290 : vector<8x32xf32>
    %292 = arith.negf %291 : vector<8x32xf32>
    %293 = math.exp %292 : vector<8x32xf32>
    %cst_198 = arith.constant 1.000000e+00 : f32
    %294 = vector.broadcast %cst_198 : f32 to vector<8x32xf32>
    %295 = arith.addf %294, %293 : vector<8x32xf32>
    %296 = arith.divf %294, %295 : vector<8x32xf32>
    %297 = arith.addf %276, %285 : vector<8x32xf32>
    %298 = vector.broadcast %22 : vector<1x32xf32> to vector<8x32xf32>
    %299 = arith.addf %297, %298 : vector<8x32xf32>
    %300 = arith.negf %299 : vector<8x32xf32>
    %301 = math.exp %300 : vector<8x32xf32>
    %cst_199 = arith.constant 1.000000e+00 : f32
    %302 = vector.broadcast %cst_199 : f32 to vector<8x32xf32>
    %303 = arith.addf %302, %301 : vector<8x32xf32>
    %304 = arith.divf %302, %303 : vector<8x32xf32>
    %305 = vector.broadcast %24 : vector<1x32xf32> to vector<8x32xf32>
    %306 = arith.addf %279, %305 : vector<8x32xf32>
    %307 = vector.broadcast %26 : vector<1x32xf32> to vector<8x32xf32>
    %308 = arith.addf %288, %307 : vector<8x32xf32>
    %309 = arith.mulf %296, %308 : vector<8x32xf32>
    %310 = arith.addf %306, %309 : vector<8x32xf32>
    %311 = math.tanh %310 : vector<8x32xf32>
    %cst_200 = arith.constant 1.000000e+00 : f32
    %312 = vector.broadcast %cst_200 : f32 to vector<8x32xf32>
    %313 = arith.subf %312, %304 : vector<8x32xf32>
    %314 = arith.mulf %313, %311 : vector<8x32xf32>
    %315 = arith.mulf %304, %222 : vector<8x32xf32>
    %316 = arith.addf %314, %315 : vector<8x32xf32>
    %317 = vector.shape_cast %224 : vector<8x1xi1> to vector<8x1xi1>
    %318 = vector.broadcast %317 : vector<8x1xi1> to vector<8x32xi1>
    %319 = arith.select %318, %316, %222 : vector<8x32xi1>, vector<8x32xf32>
    %c3_i32 = arith.constant 3 : i32
    %320 = vector.broadcast %c3_i32 : i32 to vector<8x1xi32>
    %321 = arith.cmpi sgt, %0, %320 : vector<8x1xi32>
    %322 = arith.truncf %268 : vector<8x32xf32> to vector<8x32xbf16>
    %323 = vector.extract_strided_slice %4 {offsets = [24, 0], sizes = [8, 32], strides = [1, 1]} : vector<64x32xf32> to vector<8x32xf32>
    %324 = vector.extract_strided_slice %7 {offsets = [24, 0], sizes = [8, 32], strides = [1, 1]} : vector<64x32xf32> to vector<8x32xf32>
    %325 = vector.extract_strided_slice %10 {offsets = [24, 0], sizes = [8, 32], strides = [1, 1]} : vector<64x32xf32> to vector<8x32xf32>
    %c0_201 = arith.constant 0 : index
    %c0_202 = arith.constant 0 : index
    %c0_203 = arith.constant 0 : index
    %c0_204 = arith.constant 0 : index
    %326 = vector.load %arg3[%c0_201, %c0_202, %c0_203, %c0_204] : memref<2x3x32x32xbf16, #tpu.memory_space<vmem>>, vector<1x1x32x32xbf16>
    %327 = vector.shape_cast %326 : vector<1x1x32x32xbf16> to vector<32x32xbf16>
    %cst_205 = arith.constant dense<0.000000e+00> : vector<8x32xf32>
    %328 = tpu.matmul %322, %327, %cst_205 {dimension_numbers = #tpu.dot_dimension_numbers<[1], [0], [0], [1], [0, 0, 1, 1], [], []>} : vector<8x32xbf16>, vector<32x32xbf16>, vector<8x32xf32> -> vector<8x32xf32>
    %c0_206 = arith.constant 0 : index
    %c1_207 = arith.constant 1 : index
    %c0_208 = arith.constant 0 : index
    %c0_209 = arith.constant 0 : index
    %329 = vector.load %arg3[%c0_206, %c1_207, %c0_208, %c0_209] : memref<2x3x32x32xbf16, #tpu.memory_space<vmem>>, vector<1x1x32x32xbf16>
    %330 = vector.shape_cast %329 : vector<1x1x32x32xbf16> to vector<32x32xbf16>
    %cst_210 = arith.constant dense<0.000000e+00> : vector<8x32xf32>
    %331 = tpu.matmul %322, %330, %cst_210 {dimension_numbers = #tpu.dot_dimension_numbers<[1], [0], [0], [1], [0, 0, 1, 1], [], []>} : vector<8x32xbf16>, vector<32x32xbf16>, vector<8x32xf32> -> vector<8x32xf32>
    %c0_211 = arith.constant 0 : index
    %c2_212 = arith.constant 2 : index
    %c0_213 = arith.constant 0 : index
    %c0_214 = arith.constant 0 : index
    %332 = vector.load %arg3[%c0_211, %c2_212, %c0_213, %c0_214] : memref<2x3x32x32xbf16, #tpu.memory_space<vmem>>, vector<1x1x32x32xbf16>
    %333 = vector.shape_cast %332 : vector<1x1x32x32xbf16> to vector<32x32xbf16>
    %cst_215 = arith.constant dense<0.000000e+00> : vector<8x32xf32>
    %334 = tpu.matmul %322, %333, %cst_215 {dimension_numbers = #tpu.dot_dimension_numbers<[1], [0], [0], [1], [0, 0, 1, 1], [], []>} : vector<8x32xbf16>, vector<32x32xbf16>, vector<8x32xf32> -> vector<8x32xf32>
    %335 = arith.addf %323, %328 : vector<8x32xf32>
    %336 = vector.broadcast %12 : vector<1x32xf32> to vector<8x32xf32>
    %337 = arith.addf %335, %336 : vector<8x32xf32>
    %338 = arith.negf %337 : vector<8x32xf32>
    %339 = math.exp %338 : vector<8x32xf32>
    %cst_216 = arith.constant 1.000000e+00 : f32
    %340 = vector.broadcast %cst_216 : f32 to vector<8x32xf32>
    %341 = arith.addf %340, %339 : vector<8x32xf32>
    %342 = arith.divf %340, %341 : vector<8x32xf32>
    %343 = arith.addf %324, %331 : vector<8x32xf32>
    %344 = vector.broadcast %14 : vector<1x32xf32> to vector<8x32xf32>
    %345 = arith.addf %343, %344 : vector<8x32xf32>
    %346 = arith.negf %345 : vector<8x32xf32>
    %347 = math.exp %346 : vector<8x32xf32>
    %cst_217 = arith.constant 1.000000e+00 : f32
    %348 = vector.broadcast %cst_217 : f32 to vector<8x32xf32>
    %349 = arith.addf %348, %347 : vector<8x32xf32>
    %350 = arith.divf %348, %349 : vector<8x32xf32>
    %351 = vector.broadcast %16 : vector<1x32xf32> to vector<8x32xf32>
    %352 = arith.addf %325, %351 : vector<8x32xf32>
    %353 = vector.broadcast %18 : vector<1x32xf32> to vector<8x32xf32>
    %354 = arith.addf %334, %353 : vector<8x32xf32>
    %355 = arith.mulf %342, %354 : vector<8x32xf32>
    %356 = arith.addf %352, %355 : vector<8x32xf32>
    %357 = math.tanh %356 : vector<8x32xf32>
    %cst_218 = arith.constant 1.000000e+00 : f32
    %358 = vector.broadcast %cst_218 : f32 to vector<8x32xf32>
    %359 = arith.subf %358, %350 : vector<8x32xf32>
    %360 = arith.mulf %359, %357 : vector<8x32xf32>
    %361 = arith.mulf %350, %268 : vector<8x32xf32>
    %362 = arith.addf %360, %361 : vector<8x32xf32>
    %363 = vector.shape_cast %321 : vector<8x1xi1> to vector<8x1xi1>
    %364 = vector.broadcast %363 : vector<8x1xi1> to vector<8x32xi1>
    %365 = arith.select %364, %362, %268 : vector<8x32xi1>, vector<8x32xf32>
    %366 = arith.truncf %319 : vector<8x32xf32> to vector<8x32xbf16>
    %367 = arith.truncf %365 : vector<8x32xf32> to vector<8x32xbf16>
    %c1_219 = arith.constant 1 : index
    %c0_220 = arith.constant 0 : index
    %c0_221 = arith.constant 0 : index
    %c0_222 = arith.constant 0 : index
    %368 = vector.load %arg2[%c1_219, %c0_220, %c0_221, %c0_222] : memref<2x3x32x32xbf16, #tpu.memory_space<vmem>>, vector<1x1x32x32xbf16>
    %369 = vector.shape_cast %368 : vector<1x1x32x32xbf16> to vector<32x32xbf16>
    %cst_223 = arith.constant dense<0.000000e+00> : vector<8x32xf32>
    %370 = tpu.matmul %367, %369, %cst_223 {dimension_numbers = #tpu.dot_dimension_numbers<[1], [0], [0], [1], [0, 0, 1, 1], [], []>} : vector<8x32xbf16>, vector<32x32xbf16>, vector<8x32xf32> -> vector<8x32xf32>
    %c1_224 = arith.constant 1 : index
    %c1_225 = arith.constant 1 : index
    %c0_226 = arith.constant 0 : index
    %c0_227 = arith.constant 0 : index
    %371 = vector.load %arg2[%c1_224, %c1_225, %c0_226, %c0_227] : memref<2x3x32x32xbf16, #tpu.memory_space<vmem>>, vector<1x1x32x32xbf16>
    %372 = vector.shape_cast %371 : vector<1x1x32x32xbf16> to vector<32x32xbf16>
    %cst_228 = arith.constant dense<0.000000e+00> : vector<8x32xf32>
    %373 = tpu.matmul %367, %372, %cst_228 {dimension_numbers = #tpu.dot_dimension_numbers<[1], [0], [0], [1], [0, 0, 1, 1], [], []>} : vector<8x32xbf16>, vector<32x32xbf16>, vector<8x32xf32> -> vector<8x32xf32>
    %c1_229 = arith.constant 1 : index
    %c2_230 = arith.constant 2 : index
    %c0_231 = arith.constant 0 : index
    %c0_232 = arith.constant 0 : index
    %374 = vector.load %arg2[%c1_229, %c2_230, %c0_231, %c0_232] : memref<2x3x32x32xbf16, #tpu.memory_space<vmem>>, vector<1x1x32x32xbf16>
    %375 = vector.shape_cast %374 : vector<1x1x32x32xbf16> to vector<32x32xbf16>
    %cst_233 = arith.constant dense<0.000000e+00> : vector<8x32xf32>
    %376 = tpu.matmul %367, %375, %cst_233 {dimension_numbers = #tpu.dot_dimension_numbers<[1], [0], [0], [1], [0, 0, 1, 1], [], []>} : vector<8x32xbf16>, vector<32x32xbf16>, vector<8x32xf32> -> vector<8x32xf32>
    %c1_234 = arith.constant 1 : index
    %c0_235 = arith.constant 0 : index
    %c0_236 = arith.constant 0 : index
    %c0_237 = arith.constant 0 : index
    %377 = vector.load %arg3[%c1_234, %c0_235, %c0_236, %c0_237] : memref<2x3x32x32xbf16, #tpu.memory_space<vmem>>, vector<1x1x32x32xbf16>
    %378 = vector.shape_cast %377 : vector<1x1x32x32xbf16> to vector<32x32xbf16>
    %cst_238 = arith.constant dense<0.000000e+00> : vector<8x32xf32>
    %379 = tpu.matmul %366, %378, %cst_238 {dimension_numbers = #tpu.dot_dimension_numbers<[1], [0], [0], [1], [0, 0, 1, 1], [], []>} : vector<8x32xbf16>, vector<32x32xbf16>, vector<8x32xf32> -> vector<8x32xf32>
    %c1_239 = arith.constant 1 : index
    %c1_240 = arith.constant 1 : index
    %c0_241 = arith.constant 0 : index
    %c0_242 = arith.constant 0 : index
    %380 = vector.load %arg3[%c1_239, %c1_240, %c0_241, %c0_242] : memref<2x3x32x32xbf16, #tpu.memory_space<vmem>>, vector<1x1x32x32xbf16>
    %381 = vector.shape_cast %380 : vector<1x1x32x32xbf16> to vector<32x32xbf16>
    %cst_243 = arith.constant dense<0.000000e+00> : vector<8x32xf32>
    %382 = tpu.matmul %366, %381, %cst_243 {dimension_numbers = #tpu.dot_dimension_numbers<[1], [0], [0], [1], [0, 0, 1, 1], [], []>} : vector<8x32xbf16>, vector<32x32xbf16>, vector<8x32xf32> -> vector<8x32xf32>
    %c1_244 = arith.constant 1 : index
    %c2_245 = arith.constant 2 : index
    %c0_246 = arith.constant 0 : index
    %c0_247 = arith.constant 0 : index
    %383 = vector.load %arg3[%c1_244, %c2_245, %c0_246, %c0_247] : memref<2x3x32x32xbf16, #tpu.memory_space<vmem>>, vector<1x1x32x32xbf16>
    %384 = vector.shape_cast %383 : vector<1x1x32x32xbf16> to vector<32x32xbf16>
    %cst_248 = arith.constant dense<0.000000e+00> : vector<8x32xf32>
    %385 = tpu.matmul %366, %384, %cst_248 {dimension_numbers = #tpu.dot_dimension_numbers<[1], [0], [0], [1], [0, 0, 1, 1], [], []>} : vector<8x32xbf16>, vector<32x32xbf16>, vector<8x32xf32> -> vector<8x32xf32>
    %386 = arith.addf %370, %379 : vector<8x32xf32>
    %387 = vector.broadcast %20 : vector<1x32xf32> to vector<8x32xf32>
    %388 = arith.addf %386, %387 : vector<8x32xf32>
    %389 = arith.negf %388 : vector<8x32xf32>
    %390 = math.exp %389 : vector<8x32xf32>
    %cst_249 = arith.constant 1.000000e+00 : f32
    %391 = vector.broadcast %cst_249 : f32 to vector<8x32xf32>
    %392 = arith.addf %391, %390 : vector<8x32xf32>
    %393 = arith.divf %391, %392 : vector<8x32xf32>
    %394 = arith.addf %373, %382 : vector<8x32xf32>
    %395 = vector.broadcast %22 : vector<1x32xf32> to vector<8x32xf32>
    %396 = arith.addf %394, %395 : vector<8x32xf32>
    %397 = arith.negf %396 : vector<8x32xf32>
    %398 = math.exp %397 : vector<8x32xf32>
    %cst_250 = arith.constant 1.000000e+00 : f32
    %399 = vector.broadcast %cst_250 : f32 to vector<8x32xf32>
    %400 = arith.addf %399, %398 : vector<8x32xf32>
    %401 = arith.divf %399, %400 : vector<8x32xf32>
    %402 = vector.broadcast %24 : vector<1x32xf32> to vector<8x32xf32>
    %403 = arith.addf %376, %402 : vector<8x32xf32>
    %404 = vector.broadcast %26 : vector<1x32xf32> to vector<8x32xf32>
    %405 = arith.addf %385, %404 : vector<8x32xf32>
    %406 = arith.mulf %393, %405 : vector<8x32xf32>
    %407 = arith.addf %403, %406 : vector<8x32xf32>
    %408 = math.tanh %407 : vector<8x32xf32>
    %cst_251 = arith.constant 1.000000e+00 : f32
    %409 = vector.broadcast %cst_251 : f32 to vector<8x32xf32>
    %410 = arith.subf %409, %401 : vector<8x32xf32>
    %411 = arith.mulf %410, %408 : vector<8x32xf32>
    %412 = arith.mulf %401, %319 : vector<8x32xf32>
    %413 = arith.addf %411, %412 : vector<8x32xf32>
    %414 = vector.shape_cast %321 : vector<8x1xi1> to vector<8x1xi1>
    %415 = vector.broadcast %414 : vector<8x1xi1> to vector<8x32xi1>
    %416 = arith.select %415, %413, %319 : vector<8x32xi1>, vector<8x32xf32>
    %c4_i32 = arith.constant 4 : i32
    %417 = vector.broadcast %c4_i32 : i32 to vector<8x1xi32>
    %418 = arith.cmpi sgt, %0, %417 : vector<8x1xi32>
    %419 = arith.truncf %365 : vector<8x32xf32> to vector<8x32xbf16>
    %420 = vector.extract_strided_slice %4 {offsets = [32, 0], sizes = [8, 32], strides = [1, 1]} : vector<64x32xf32> to vector<8x32xf32>
    %421 = vector.extract_strided_slice %7 {offsets = [32, 0], sizes = [8, 32], strides = [1, 1]} : vector<64x32xf32> to vector<8x32xf32>
    %422 = vector.extract_strided_slice %10 {offsets = [32, 0], sizes = [8, 32], strides = [1, 1]} : vector<64x32xf32> to vector<8x32xf32>
    %c0_252 = arith.constant 0 : index
    %c0_253 = arith.constant 0 : index
    %c0_254 = arith.constant 0 : index
    %c0_255 = arith.constant 0 : index
    %423 = vector.load %arg3[%c0_252, %c0_253, %c0_254, %c0_255] : memref<2x3x32x32xbf16, #tpu.memory_space<vmem>>, vector<1x1x32x32xbf16>
    %424 = vector.shape_cast %423 : vector<1x1x32x32xbf16> to vector<32x32xbf16>
    %cst_256 = arith.constant dense<0.000000e+00> : vector<8x32xf32>
    %425 = tpu.matmul %419, %424, %cst_256 {dimension_numbers = #tpu.dot_dimension_numbers<[1], [0], [0], [1], [0, 0, 1, 1], [], []>} : vector<8x32xbf16>, vector<32x32xbf16>, vector<8x32xf32> -> vector<8x32xf32>
    %c0_257 = arith.constant 0 : index
    %c1_258 = arith.constant 1 : index
    %c0_259 = arith.constant 0 : index
    %c0_260 = arith.constant 0 : index
    %426 = vector.load %arg3[%c0_257, %c1_258, %c0_259, %c0_260] : memref<2x3x32x32xbf16, #tpu.memory_space<vmem>>, vector<1x1x32x32xbf16>
    %427 = vector.shape_cast %426 : vector<1x1x32x32xbf16> to vector<32x32xbf16>
    %cst_261 = arith.constant dense<0.000000e+00> : vector<8x32xf32>
    %428 = tpu.matmul %419, %427, %cst_261 {dimension_numbers = #tpu.dot_dimension_numbers<[1], [0], [0], [1], [0, 0, 1, 1], [], []>} : vector<8x32xbf16>, vector<32x32xbf16>, vector<8x32xf32> -> vector<8x32xf32>
    %c0_262 = arith.constant 0 : index
    %c2_263 = arith.constant 2 : index
    %c0_264 = arith.constant 0 : index
    %c0_265 = arith.constant 0 : index
    %429 = vector.load %arg3[%c0_262, %c2_263, %c0_264, %c0_265] : memref<2x3x32x32xbf16, #tpu.memory_space<vmem>>, vector<1x1x32x32xbf16>
    %430 = vector.shape_cast %429 : vector<1x1x32x32xbf16> to vector<32x32xbf16>
    %cst_266 = arith.constant dense<0.000000e+00> : vector<8x32xf32>
    %431 = tpu.matmul %419, %430, %cst_266 {dimension_numbers = #tpu.dot_dimension_numbers<[1], [0], [0], [1], [0, 0, 1, 1], [], []>} : vector<8x32xbf16>, vector<32x32xbf16>, vector<8x32xf32> -> vector<8x32xf32>
    %432 = arith.addf %420, %425 : vector<8x32xf32>
    %433 = vector.broadcast %12 : vector<1x32xf32> to vector<8x32xf32>
    %434 = arith.addf %432, %433 : vector<8x32xf32>
    %435 = arith.negf %434 : vector<8x32xf32>
    %436 = math.exp %435 : vector<8x32xf32>
    %cst_267 = arith.constant 1.000000e+00 : f32
    %437 = vector.broadcast %cst_267 : f32 to vector<8x32xf32>
    %438 = arith.addf %437, %436 : vector<8x32xf32>
    %439 = arith.divf %437, %438 : vector<8x32xf32>
    %440 = arith.addf %421, %428 : vector<8x32xf32>
    %441 = vector.broadcast %14 : vector<1x32xf32> to vector<8x32xf32>
    %442 = arith.addf %440, %441 : vector<8x32xf32>
    %443 = arith.negf %442 : vector<8x32xf32>
    %444 = math.exp %443 : vector<8x32xf32>
    %cst_268 = arith.constant 1.000000e+00 : f32
    %445 = vector.broadcast %cst_268 : f32 to vector<8x32xf32>
    %446 = arith.addf %445, %444 : vector<8x32xf32>
    %447 = arith.divf %445, %446 : vector<8x32xf32>
    %448 = vector.broadcast %16 : vector<1x32xf32> to vector<8x32xf32>
    %449 = arith.addf %422, %448 : vector<8x32xf32>
    %450 = vector.broadcast %18 : vector<1x32xf32> to vector<8x32xf32>
    %451 = arith.addf %431, %450 : vector<8x32xf32>
    %452 = arith.mulf %439, %451 : vector<8x32xf32>
    %453 = arith.addf %449, %452 : vector<8x32xf32>
    %454 = math.tanh %453 : vector<8x32xf32>
    %cst_269 = arith.constant 1.000000e+00 : f32
    %455 = vector.broadcast %cst_269 : f32 to vector<8x32xf32>
    %456 = arith.subf %455, %447 : vector<8x32xf32>
    %457 = arith.mulf %456, %454 : vector<8x32xf32>
    %458 = arith.mulf %447, %365 : vector<8x32xf32>
    %459 = arith.addf %457, %458 : vector<8x32xf32>
    %460 = vector.shape_cast %418 : vector<8x1xi1> to vector<8x1xi1>
    %461 = vector.broadcast %460 : vector<8x1xi1> to vector<8x32xi1>
    %462 = arith.select %461, %459, %365 : vector<8x32xi1>, vector<8x32xf32>
    %463 = arith.truncf %416 : vector<8x32xf32> to vector<8x32xbf16>
    %464 = arith.truncf %462 : vector<8x32xf32> to vector<8x32xbf16>
    %c1_270 = arith.constant 1 : index
    %c0_271 = arith.constant 0 : index
    %c0_272 = arith.constant 0 : index
    %c0_273 = arith.constant 0 : index
    %465 = vector.load %arg2[%c1_270, %c0_271, %c0_272, %c0_273] : memref<2x3x32x32xbf16, #tpu.memory_space<vmem>>, vector<1x1x32x32xbf16>
    %466 = vector.shape_cast %465 : vector<1x1x32x32xbf16> to vector<32x32xbf16>
    %cst_274 = arith.constant dense<0.000000e+00> : vector<8x32xf32>
    %467 = tpu.matmul %464, %466, %cst_274 {dimension_numbers = #tpu.dot_dimension_numbers<[1], [0], [0], [1], [0, 0, 1, 1], [], []>} : vector<8x32xbf16>, vector<32x32xbf16>, vector<8x32xf32> -> vector<8x32xf32>
    %c1_275 = arith.constant 1 : index
    %c1_276 = arith.constant 1 : index
    %c0_277 = arith.constant 0 : index
    %c0_278 = arith.constant 0 : index
    %468 = vector.load %arg2[%c1_275, %c1_276, %c0_277, %c0_278] : memref<2x3x32x32xbf16, #tpu.memory_space<vmem>>, vector<1x1x32x32xbf16>
    %469 = vector.shape_cast %468 : vector<1x1x32x32xbf16> to vector<32x32xbf16>
    %cst_279 = arith.constant dense<0.000000e+00> : vector<8x32xf32>
    %470 = tpu.matmul %464, %469, %cst_279 {dimension_numbers = #tpu.dot_dimension_numbers<[1], [0], [0], [1], [0, 0, 1, 1], [], []>} : vector<8x32xbf16>, vector<32x32xbf16>, vector<8x32xf32> -> vector<8x32xf32>
    %c1_280 = arith.constant 1 : index
    %c2_281 = arith.constant 2 : index
    %c0_282 = arith.constant 0 : index
    %c0_283 = arith.constant 0 : index
    %471 = vector.load %arg2[%c1_280, %c2_281, %c0_282, %c0_283] : memref<2x3x32x32xbf16, #tpu.memory_space<vmem>>, vector<1x1x32x32xbf16>
    %472 = vector.shape_cast %471 : vector<1x1x32x32xbf16> to vector<32x32xbf16>
    %cst_284 = arith.constant dense<0.000000e+00> : vector<8x32xf32>
    %473 = tpu.matmul %464, %472, %cst_284 {dimension_numbers = #tpu.dot_dimension_numbers<[1], [0], [0], [1], [0, 0, 1, 1], [], []>} : vector<8x32xbf16>, vector<32x32xbf16>, vector<8x32xf32> -> vector<8x32xf32>
    %c1_285 = arith.constant 1 : index
    %c0_286 = arith.constant 0 : index
    %c0_287 = arith.constant 0 : index
    %c0_288 = arith.constant 0 : index
    %474 = vector.load %arg3[%c1_285, %c0_286, %c0_287, %c0_288] : memref<2x3x32x32xbf16, #tpu.memory_space<vmem>>, vector<1x1x32x32xbf16>
    %475 = vector.shape_cast %474 : vector<1x1x32x32xbf16> to vector<32x32xbf16>
    %cst_289 = arith.constant dense<0.000000e+00> : vector<8x32xf32>
    %476 = tpu.matmul %463, %475, %cst_289 {dimension_numbers = #tpu.dot_dimension_numbers<[1], [0], [0], [1], [0, 0, 1, 1], [], []>} : vector<8x32xbf16>, vector<32x32xbf16>, vector<8x32xf32> -> vector<8x32xf32>
    %c1_290 = arith.constant 1 : index
    %c1_291 = arith.constant 1 : index
    %c0_292 = arith.constant 0 : index
    %c0_293 = arith.constant 0 : index
    %477 = vector.load %arg3[%c1_290, %c1_291, %c0_292, %c0_293] : memref<2x3x32x32xbf16, #tpu.memory_space<vmem>>, vector<1x1x32x32xbf16>
    %478 = vector.shape_cast %477 : vector<1x1x32x32xbf16> to vector<32x32xbf16>
    %cst_294 = arith.constant dense<0.000000e+00> : vector<8x32xf32>
    %479 = tpu.matmul %463, %478, %cst_294 {dimension_numbers = #tpu.dot_dimension_numbers<[1], [0], [0], [1], [0, 0, 1, 1], [], []>} : vector<8x32xbf16>, vector<32x32xbf16>, vector<8x32xf32> -> vector<8x32xf32>
    %c1_295 = arith.constant 1 : index
    %c2_296 = arith.constant 2 : index
    %c0_297 = arith.constant 0 : index
    %c0_298 = arith.constant 0 : index
    %480 = vector.load %arg3[%c1_295, %c2_296, %c0_297, %c0_298] : memref<2x3x32x32xbf16, #tpu.memory_space<vmem>>, vector<1x1x32x32xbf16>
    %481 = vector.shape_cast %480 : vector<1x1x32x32xbf16> to vector<32x32xbf16>
    %cst_299 = arith.constant dense<0.000000e+00> : vector<8x32xf32>
    %482 = tpu.matmul %463, %481, %cst_299 {dimension_numbers = #tpu.dot_dimension_numbers<[1], [0], [0], [1], [0, 0, 1, 1], [], []>} : vector<8x32xbf16>, vector<32x32xbf16>, vector<8x32xf32> -> vector<8x32xf32>
    %483 = arith.addf %467, %476 : vector<8x32xf32>
    %484 = vector.broadcast %20 : vector<1x32xf32> to vector<8x32xf32>
    %485 = arith.addf %483, %484 : vector<8x32xf32>
    %486 = arith.negf %485 : vector<8x32xf32>
    %487 = math.exp %486 : vector<8x32xf32>
    %cst_300 = arith.constant 1.000000e+00 : f32
    %488 = vector.broadcast %cst_300 : f32 to vector<8x32xf32>
    %489 = arith.addf %488, %487 : vector<8x32xf32>
    %490 = arith.divf %488, %489 : vector<8x32xf32>
    %491 = arith.addf %470, %479 : vector<8x32xf32>
    %492 = vector.broadcast %22 : vector<1x32xf32> to vector<8x32xf32>
    %493 = arith.addf %491, %492 : vector<8x32xf32>
    %494 = arith.negf %493 : vector<8x32xf32>
    %495 = math.exp %494 : vector<8x32xf32>
    %cst_301 = arith.constant 1.000000e+00 : f32
    %496 = vector.broadcast %cst_301 : f32 to vector<8x32xf32>
    %497 = arith.addf %496, %495 : vector<8x32xf32>
    %498 = arith.divf %496, %497 : vector<8x32xf32>
    %499 = vector.broadcast %24 : vector<1x32xf32> to vector<8x32xf32>
    %500 = arith.addf %473, %499 : vector<8x32xf32>
    %501 = vector.broadcast %26 : vector<1x32xf32> to vector<8x32xf32>
    %502 = arith.addf %482, %501 : vector<8x32xf32>
    %503 = arith.mulf %490, %502 : vector<8x32xf32>
    %504 = arith.addf %500, %503 : vector<8x32xf32>
    %505 = math.tanh %504 : vector<8x32xf32>
    %cst_302 = arith.constant 1.000000e+00 : f32
    %506 = vector.broadcast %cst_302 : f32 to vector<8x32xf32>
    %507 = arith.subf %506, %498 : vector<8x32xf32>
    %508 = arith.mulf %507, %505 : vector<8x32xf32>
    %509 = arith.mulf %498, %416 : vector<8x32xf32>
    %510 = arith.addf %508, %509 : vector<8x32xf32>
    %511 = vector.shape_cast %418 : vector<8x1xi1> to vector<8x1xi1>
    %512 = vector.broadcast %511 : vector<8x1xi1> to vector<8x32xi1>
    %513 = arith.select %512, %510, %416 : vector<8x32xi1>, vector<8x32xf32>
    %c5_i32 = arith.constant 5 : i32
    %514 = vector.broadcast %c5_i32 : i32 to vector<8x1xi32>
    %515 = arith.cmpi sgt, %0, %514 : vector<8x1xi32>
    %516 = arith.truncf %462 : vector<8x32xf32> to vector<8x32xbf16>
    %517 = vector.extract_strided_slice %4 {offsets = [40, 0], sizes = [8, 32], strides = [1, 1]} : vector<64x32xf32> to vector<8x32xf32>
    %518 = vector.extract_strided_slice %7 {offsets = [40, 0], sizes = [8, 32], strides = [1, 1]} : vector<64x32xf32> to vector<8x32xf32>
    %519 = vector.extract_strided_slice %10 {offsets = [40, 0], sizes = [8, 32], strides = [1, 1]} : vector<64x32xf32> to vector<8x32xf32>
    %c0_303 = arith.constant 0 : index
    %c0_304 = arith.constant 0 : index
    %c0_305 = arith.constant 0 : index
    %c0_306 = arith.constant 0 : index
    %520 = vector.load %arg3[%c0_303, %c0_304, %c0_305, %c0_306] : memref<2x3x32x32xbf16, #tpu.memory_space<vmem>>, vector<1x1x32x32xbf16>
    %521 = vector.shape_cast %520 : vector<1x1x32x32xbf16> to vector<32x32xbf16>
    %cst_307 = arith.constant dense<0.000000e+00> : vector<8x32xf32>
    %522 = tpu.matmul %516, %521, %cst_307 {dimension_numbers = #tpu.dot_dimension_numbers<[1], [0], [0], [1], [0, 0, 1, 1], [], []>} : vector<8x32xbf16>, vector<32x32xbf16>, vector<8x32xf32> -> vector<8x32xf32>
    %c0_308 = arith.constant 0 : index
    %c1_309 = arith.constant 1 : index
    %c0_310 = arith.constant 0 : index
    %c0_311 = arith.constant 0 : index
    %523 = vector.load %arg3[%c0_308, %c1_309, %c0_310, %c0_311] : memref<2x3x32x32xbf16, #tpu.memory_space<vmem>>, vector<1x1x32x32xbf16>
    %524 = vector.shape_cast %523 : vector<1x1x32x32xbf16> to vector<32x32xbf16>
    %cst_312 = arith.constant dense<0.000000e+00> : vector<8x32xf32>
    %525 = tpu.matmul %516, %524, %cst_312 {dimension_numbers = #tpu.dot_dimension_numbers<[1], [0], [0], [1], [0, 0, 1, 1], [], []>} : vector<8x32xbf16>, vector<32x32xbf16>, vector<8x32xf32> -> vector<8x32xf32>
    %c0_313 = arith.constant 0 : index
    %c2_314 = arith.constant 2 : index
    %c0_315 = arith.constant 0 : index
    %c0_316 = arith.constant 0 : index
    %526 = vector.load %arg3[%c0_313, %c2_314, %c0_315, %c0_316] : memref<2x3x32x32xbf16, #tpu.memory_space<vmem>>, vector<1x1x32x32xbf16>
    %527 = vector.shape_cast %526 : vector<1x1x32x32xbf16> to vector<32x32xbf16>
    %cst_317 = arith.constant dense<0.000000e+00> : vector<8x32xf32>
    %528 = tpu.matmul %516, %527, %cst_317 {dimension_numbers = #tpu.dot_dimension_numbers<[1], [0], [0], [1], [0, 0, 1, 1], [], []>} : vector<8x32xbf16>, vector<32x32xbf16>, vector<8x32xf32> -> vector<8x32xf32>
    %529 = arith.addf %517, %522 : vector<8x32xf32>
    %530 = vector.broadcast %12 : vector<1x32xf32> to vector<8x32xf32>
    %531 = arith.addf %529, %530 : vector<8x32xf32>
    %532 = arith.negf %531 : vector<8x32xf32>
    %533 = math.exp %532 : vector<8x32xf32>
    %cst_318 = arith.constant 1.000000e+00 : f32
    %534 = vector.broadcast %cst_318 : f32 to vector<8x32xf32>
    %535 = arith.addf %534, %533 : vector<8x32xf32>
    %536 = arith.divf %534, %535 : vector<8x32xf32>
    %537 = arith.addf %518, %525 : vector<8x32xf32>
    %538 = vector.broadcast %14 : vector<1x32xf32> to vector<8x32xf32>
    %539 = arith.addf %537, %538 : vector<8x32xf32>
    %540 = arith.negf %539 : vector<8x32xf32>
    %541 = math.exp %540 : vector<8x32xf32>
    %cst_319 = arith.constant 1.000000e+00 : f32
    %542 = vector.broadcast %cst_319 : f32 to vector<8x32xf32>
    %543 = arith.addf %542, %541 : vector<8x32xf32>
    %544 = arith.divf %542, %543 : vector<8x32xf32>
    %545 = vector.broadcast %16 : vector<1x32xf32> to vector<8x32xf32>
    %546 = arith.addf %519, %545 : vector<8x32xf32>
    %547 = vector.broadcast %18 : vector<1x32xf32> to vector<8x32xf32>
    %548 = arith.addf %528, %547 : vector<8x32xf32>
    %549 = arith.mulf %536, %548 : vector<8x32xf32>
    %550 = arith.addf %546, %549 : vector<8x32xf32>
    %551 = math.tanh %550 : vector<8x32xf32>
    %cst_320 = arith.constant 1.000000e+00 : f32
    %552 = vector.broadcast %cst_320 : f32 to vector<8x32xf32>
    %553 = arith.subf %552, %544 : vector<8x32xf32>
    %554 = arith.mulf %553, %551 : vector<8x32xf32>
    %555 = arith.mulf %544, %462 : vector<8x32xf32>
    %556 = arith.addf %554, %555 : vector<8x32xf32>
    %557 = vector.shape_cast %515 : vector<8x1xi1> to vector<8x1xi1>
    %558 = vector.broadcast %557 : vector<8x1xi1> to vector<8x32xi1>
    %559 = arith.select %558, %556, %462 : vector<8x32xi1>, vector<8x32xf32>
    %560 = arith.truncf %513 : vector<8x32xf32> to vector<8x32xbf16>
    %561 = arith.truncf %559 : vector<8x32xf32> to vector<8x32xbf16>
    %c1_321 = arith.constant 1 : index
    %c0_322 = arith.constant 0 : index
    %c0_323 = arith.constant 0 : index
    %c0_324 = arith.constant 0 : index
    %562 = vector.load %arg2[%c1_321, %c0_322, %c0_323, %c0_324] : memref<2x3x32x32xbf16, #tpu.memory_space<vmem>>, vector<1x1x32x32xbf16>
    %563 = vector.shape_cast %562 : vector<1x1x32x32xbf16> to vector<32x32xbf16>
    %cst_325 = arith.constant dense<0.000000e+00> : vector<8x32xf32>
    %564 = tpu.matmul %561, %563, %cst_325 {dimension_numbers = #tpu.dot_dimension_numbers<[1], [0], [0], [1], [0, 0, 1, 1], [], []>} : vector<8x32xbf16>, vector<32x32xbf16>, vector<8x32xf32> -> vector<8x32xf32>
    %c1_326 = arith.constant 1 : index
    %c1_327 = arith.constant 1 : index
    %c0_328 = arith.constant 0 : index
    %c0_329 = arith.constant 0 : index
    %565 = vector.load %arg2[%c1_326, %c1_327, %c0_328, %c0_329] : memref<2x3x32x32xbf16, #tpu.memory_space<vmem>>, vector<1x1x32x32xbf16>
    %566 = vector.shape_cast %565 : vector<1x1x32x32xbf16> to vector<32x32xbf16>
    %cst_330 = arith.constant dense<0.000000e+00> : vector<8x32xf32>
    %567 = tpu.matmul %561, %566, %cst_330 {dimension_numbers = #tpu.dot_dimension_numbers<[1], [0], [0], [1], [0, 0, 1, 1], [], []>} : vector<8x32xbf16>, vector<32x32xbf16>, vector<8x32xf32> -> vector<8x32xf32>
    %c1_331 = arith.constant 1 : index
    %c2_332 = arith.constant 2 : index
    %c0_333 = arith.constant 0 : index
    %c0_334 = arith.constant 0 : index
    %568 = vector.load %arg2[%c1_331, %c2_332, %c0_333, %c0_334] : memref<2x3x32x32xbf16, #tpu.memory_space<vmem>>, vector<1x1x32x32xbf16>
    %569 = vector.shape_cast %568 : vector<1x1x32x32xbf16> to vector<32x32xbf16>
    %cst_335 = arith.constant dense<0.000000e+00> : vector<8x32xf32>
    %570 = tpu.matmul %561, %569, %cst_335 {dimension_numbers = #tpu.dot_dimension_numbers<[1], [0], [0], [1], [0, 0, 1, 1], [], []>} : vector<8x32xbf16>, vector<32x32xbf16>, vector<8x32xf32> -> vector<8x32xf32>
    %c1_336 = arith.constant 1 : index
    %c0_337 = arith.constant 0 : index
    %c0_338 = arith.constant 0 : index
    %c0_339 = arith.constant 0 : index
    %571 = vector.load %arg3[%c1_336, %c0_337, %c0_338, %c0_339] : memref<2x3x32x32xbf16, #tpu.memory_space<vmem>>, vector<1x1x32x32xbf16>
    %572 = vector.shape_cast %571 : vector<1x1x32x32xbf16> to vector<32x32xbf16>
    %cst_340 = arith.constant dense<0.000000e+00> : vector<8x32xf32>
    %573 = tpu.matmul %560, %572, %cst_340 {dimension_numbers = #tpu.dot_dimension_numbers<[1], [0], [0], [1], [0, 0, 1, 1], [], []>} : vector<8x32xbf16>, vector<32x32xbf16>, vector<8x32xf32> -> vector<8x32xf32>
    %c1_341 = arith.constant 1 : index
    %c1_342 = arith.constant 1 : index
    %c0_343 = arith.constant 0 : index
    %c0_344 = arith.constant 0 : index
    %574 = vector.load %arg3[%c1_341, %c1_342, %c0_343, %c0_344] : memref<2x3x32x32xbf16, #tpu.memory_space<vmem>>, vector<1x1x32x32xbf16>
    %575 = vector.shape_cast %574 : vector<1x1x32x32xbf16> to vector<32x32xbf16>
    %cst_345 = arith.constant dense<0.000000e+00> : vector<8x32xf32>
    %576 = tpu.matmul %560, %575, %cst_345 {dimension_numbers = #tpu.dot_dimension_numbers<[1], [0], [0], [1], [0, 0, 1, 1], [], []>} : vector<8x32xbf16>, vector<32x32xbf16>, vector<8x32xf32> -> vector<8x32xf32>
    %c1_346 = arith.constant 1 : index
    %c2_347 = arith.constant 2 : index
    %c0_348 = arith.constant 0 : index
    %c0_349 = arith.constant 0 : index
    %577 = vector.load %arg3[%c1_346, %c2_347, %c0_348, %c0_349] : memref<2x3x32x32xbf16, #tpu.memory_space<vmem>>, vector<1x1x32x32xbf16>
    %578 = vector.shape_cast %577 : vector<1x1x32x32xbf16> to vector<32x32xbf16>
    %cst_350 = arith.constant dense<0.000000e+00> : vector<8x32xf32>
    %579 = tpu.matmul %560, %578, %cst_350 {dimension_numbers = #tpu.dot_dimension_numbers<[1], [0], [0], [1], [0, 0, 1, 1], [], []>} : vector<8x32xbf16>, vector<32x32xbf16>, vector<8x32xf32> -> vector<8x32xf32>
    %580 = arith.addf %564, %573 : vector<8x32xf32>
    %581 = vector.broadcast %20 : vector<1x32xf32> to vector<8x32xf32>
    %582 = arith.addf %580, %581 : vector<8x32xf32>
    %583 = arith.negf %582 : vector<8x32xf32>
    %584 = math.exp %583 : vector<8x32xf32>
    %cst_351 = arith.constant 1.000000e+00 : f32
    %585 = vector.broadcast %cst_351 : f32 to vector<8x32xf32>
    %586 = arith.addf %585, %584 : vector<8x32xf32>
    %587 = arith.divf %585, %586 : vector<8x32xf32>
    %588 = arith.addf %567, %576 : vector<8x32xf32>
    %589 = vector.broadcast %22 : vector<1x32xf32> to vector<8x32xf32>
    %590 = arith.addf %588, %589 : vector<8x32xf32>
    %591 = arith.negf %590 : vector<8x32xf32>
    %592 = math.exp %591 : vector<8x32xf32>
    %cst_352 = arith.constant 1.000000e+00 : f32
    %593 = vector.broadcast %cst_352 : f32 to vector<8x32xf32>
    %594 = arith.addf %593, %592 : vector<8x32xf32>
    %595 = arith.divf %593, %594 : vector<8x32xf32>
    %596 = vector.broadcast %24 : vector<1x32xf32> to vector<8x32xf32>
    %597 = arith.addf %570, %596 : vector<8x32xf32>
    %598 = vector.broadcast %26 : vector<1x32xf32> to vector<8x32xf32>
    %599 = arith.addf %579, %598 : vector<8x32xf32>
    %600 = arith.mulf %587, %599 : vector<8x32xf32>
    %601 = arith.addf %597, %600 : vector<8x32xf32>
    %602 = math.tanh %601 : vector<8x32xf32>
    %cst_353 = arith.constant 1.000000e+00 : f32
    %603 = vector.broadcast %cst_353 : f32 to vector<8x32xf32>
    %604 = arith.subf %603, %595 : vector<8x32xf32>
    %605 = arith.mulf %604, %602 : vector<8x32xf32>
    %606 = arith.mulf %595, %513 : vector<8x32xf32>
    %607 = arith.addf %605, %606 : vector<8x32xf32>
    %608 = vector.shape_cast %515 : vector<8x1xi1> to vector<8x1xi1>
    %609 = vector.broadcast %608 : vector<8x1xi1> to vector<8x32xi1>
    %610 = arith.select %609, %607, %513 : vector<8x32xi1>, vector<8x32xf32>
    %c6_i32 = arith.constant 6 : i32
    %611 = vector.broadcast %c6_i32 : i32 to vector<8x1xi32>
    %612 = arith.cmpi sgt, %0, %611 : vector<8x1xi32>
    %613 = arith.truncf %559 : vector<8x32xf32> to vector<8x32xbf16>
    %614 = vector.extract_strided_slice %4 {offsets = [48, 0], sizes = [8, 32], strides = [1, 1]} : vector<64x32xf32> to vector<8x32xf32>
    %615 = vector.extract_strided_slice %7 {offsets = [48, 0], sizes = [8, 32], strides = [1, 1]} : vector<64x32xf32> to vector<8x32xf32>
    %616 = vector.extract_strided_slice %10 {offsets = [48, 0], sizes = [8, 32], strides = [1, 1]} : vector<64x32xf32> to vector<8x32xf32>
    %c0_354 = arith.constant 0 : index
    %c0_355 = arith.constant 0 : index
    %c0_356 = arith.constant 0 : index
    %c0_357 = arith.constant 0 : index
    %617 = vector.load %arg3[%c0_354, %c0_355, %c0_356, %c0_357] : memref<2x3x32x32xbf16, #tpu.memory_space<vmem>>, vector<1x1x32x32xbf16>
    %618 = vector.shape_cast %617 : vector<1x1x32x32xbf16> to vector<32x32xbf16>
    %cst_358 = arith.constant dense<0.000000e+00> : vector<8x32xf32>
    %619 = tpu.matmul %613, %618, %cst_358 {dimension_numbers = #tpu.dot_dimension_numbers<[1], [0], [0], [1], [0, 0, 1, 1], [], []>} : vector<8x32xbf16>, vector<32x32xbf16>, vector<8x32xf32> -> vector<8x32xf32>
    %c0_359 = arith.constant 0 : index
    %c1_360 = arith.constant 1 : index
    %c0_361 = arith.constant 0 : index
    %c0_362 = arith.constant 0 : index
    %620 = vector.load %arg3[%c0_359, %c1_360, %c0_361, %c0_362] : memref<2x3x32x32xbf16, #tpu.memory_space<vmem>>, vector<1x1x32x32xbf16>
    %621 = vector.shape_cast %620 : vector<1x1x32x32xbf16> to vector<32x32xbf16>
    %cst_363 = arith.constant dense<0.000000e+00> : vector<8x32xf32>
    %622 = tpu.matmul %613, %621, %cst_363 {dimension_numbers = #tpu.dot_dimension_numbers<[1], [0], [0], [1], [0, 0, 1, 1], [], []>} : vector<8x32xbf16>, vector<32x32xbf16>, vector<8x32xf32> -> vector<8x32xf32>
    %c0_364 = arith.constant 0 : index
    %c2_365 = arith.constant 2 : index
    %c0_366 = arith.constant 0 : index
    %c0_367 = arith.constant 0 : index
    %623 = vector.load %arg3[%c0_364, %c2_365, %c0_366, %c0_367] : memref<2x3x32x32xbf16, #tpu.memory_space<vmem>>, vector<1x1x32x32xbf16>
    %624 = vector.shape_cast %623 : vector<1x1x32x32xbf16> to vector<32x32xbf16>
    %cst_368 = arith.constant dense<0.000000e+00> : vector<8x32xf32>
    %625 = tpu.matmul %613, %624, %cst_368 {dimension_numbers = #tpu.dot_dimension_numbers<[1], [0], [0], [1], [0, 0, 1, 1], [], []>} : vector<8x32xbf16>, vector<32x32xbf16>, vector<8x32xf32> -> vector<8x32xf32>
    %626 = arith.addf %614, %619 : vector<8x32xf32>
    %627 = vector.broadcast %12 : vector<1x32xf32> to vector<8x32xf32>
    %628 = arith.addf %626, %627 : vector<8x32xf32>
    %629 = arith.negf %628 : vector<8x32xf32>
    %630 = math.exp %629 : vector<8x32xf32>
    %cst_369 = arith.constant 1.000000e+00 : f32
    %631 = vector.broadcast %cst_369 : f32 to vector<8x32xf32>
    %632 = arith.addf %631, %630 : vector<8x32xf32>
    %633 = arith.divf %631, %632 : vector<8x32xf32>
    %634 = arith.addf %615, %622 : vector<8x32xf32>
    %635 = vector.broadcast %14 : vector<1x32xf32> to vector<8x32xf32>
    %636 = arith.addf %634, %635 : vector<8x32xf32>
    %637 = arith.negf %636 : vector<8x32xf32>
    %638 = math.exp %637 : vector<8x32xf32>
    %cst_370 = arith.constant 1.000000e+00 : f32
    %639 = vector.broadcast %cst_370 : f32 to vector<8x32xf32>
    %640 = arith.addf %639, %638 : vector<8x32xf32>
    %641 = arith.divf %639, %640 : vector<8x32xf32>
    %642 = vector.broadcast %16 : vector<1x32xf32> to vector<8x32xf32>
    %643 = arith.addf %616, %642 : vector<8x32xf32>
    %644 = vector.broadcast %18 : vector<1x32xf32> to vector<8x32xf32>
    %645 = arith.addf %625, %644 : vector<8x32xf32>
    %646 = arith.mulf %633, %645 : vector<8x32xf32>
    %647 = arith.addf %643, %646 : vector<8x32xf32>
    %648 = math.tanh %647 : vector<8x32xf32>
    %cst_371 = arith.constant 1.000000e+00 : f32
    %649 = vector.broadcast %cst_371 : f32 to vector<8x32xf32>
    %650 = arith.subf %649, %641 : vector<8x32xf32>
    %651 = arith.mulf %650, %648 : vector<8x32xf32>
    %652 = arith.mulf %641, %559 : vector<8x32xf32>
    %653 = arith.addf %651, %652 : vector<8x32xf32>
    %654 = vector.shape_cast %612 : vector<8x1xi1> to vector<8x1xi1>
    %655 = vector.broadcast %654 : vector<8x1xi1> to vector<8x32xi1>
    %656 = arith.select %655, %653, %559 : vector<8x32xi1>, vector<8x32xf32>
    %657 = arith.truncf %610 : vector<8x32xf32> to vector<8x32xbf16>
    %658 = arith.truncf %656 : vector<8x32xf32> to vector<8x32xbf16>
    %c1_372 = arith.constant 1 : index
    %c0_373 = arith.constant 0 : index
    %c0_374 = arith.constant 0 : index
    %c0_375 = arith.constant 0 : index
    %659 = vector.load %arg2[%c1_372, %c0_373, %c0_374, %c0_375] : memref<2x3x32x32xbf16, #tpu.memory_space<vmem>>, vector<1x1x32x32xbf16>
    %660 = vector.shape_cast %659 : vector<1x1x32x32xbf16> to vector<32x32xbf16>
    %cst_376 = arith.constant dense<0.000000e+00> : vector<8x32xf32>
    %661 = tpu.matmul %658, %660, %cst_376 {dimension_numbers = #tpu.dot_dimension_numbers<[1], [0], [0], [1], [0, 0, 1, 1], [], []>} : vector<8x32xbf16>, vector<32x32xbf16>, vector<8x32xf32> -> vector<8x32xf32>
    %c1_377 = arith.constant 1 : index
    %c1_378 = arith.constant 1 : index
    %c0_379 = arith.constant 0 : index
    %c0_380 = arith.constant 0 : index
    %662 = vector.load %arg2[%c1_377, %c1_378, %c0_379, %c0_380] : memref<2x3x32x32xbf16, #tpu.memory_space<vmem>>, vector<1x1x32x32xbf16>
    %663 = vector.shape_cast %662 : vector<1x1x32x32xbf16> to vector<32x32xbf16>
    %cst_381 = arith.constant dense<0.000000e+00> : vector<8x32xf32>
    %664 = tpu.matmul %658, %663, %cst_381 {dimension_numbers = #tpu.dot_dimension_numbers<[1], [0], [0], [1], [0, 0, 1, 1], [], []>} : vector<8x32xbf16>, vector<32x32xbf16>, vector<8x32xf32> -> vector<8x32xf32>
    %c1_382 = arith.constant 1 : index
    %c2_383 = arith.constant 2 : index
    %c0_384 = arith.constant 0 : index
    %c0_385 = arith.constant 0 : index
    %665 = vector.load %arg2[%c1_382, %c2_383, %c0_384, %c0_385] : memref<2x3x32x32xbf16, #tpu.memory_space<vmem>>, vector<1x1x32x32xbf16>
    %666 = vector.shape_cast %665 : vector<1x1x32x32xbf16> to vector<32x32xbf16>
    %cst_386 = arith.constant dense<0.000000e+00> : vector<8x32xf32>
    %667 = tpu.matmul %658, %666, %cst_386 {dimension_numbers = #tpu.dot_dimension_numbers<[1], [0], [0], [1], [0, 0, 1, 1], [], []>} : vector<8x32xbf16>, vector<32x32xbf16>, vector<8x32xf32> -> vector<8x32xf32>
    %c1_387 = arith.constant 1 : index
    %c0_388 = arith.constant 0 : index
    %c0_389 = arith.constant 0 : index
    %c0_390 = arith.constant 0 : index
    %668 = vector.load %arg3[%c1_387, %c0_388, %c0_389, %c0_390] : memref<2x3x32x32xbf16, #tpu.memory_space<vmem>>, vector<1x1x32x32xbf16>
    %669 = vector.shape_cast %668 : vector<1x1x32x32xbf16> to vector<32x32xbf16>
    %cst_391 = arith.constant dense<0.000000e+00> : vector<8x32xf32>
    %670 = tpu.matmul %657, %669, %cst_391 {dimension_numbers = #tpu.dot_dimension_numbers<[1], [0], [0], [1], [0, 0, 1, 1], [], []>} : vector<8x32xbf16>, vector<32x32xbf16>, vector<8x32xf32> -> vector<8x32xf32>
    %c1_392 = arith.constant 1 : index
    %c1_393 = arith.constant 1 : index
    %c0_394 = arith.constant 0 : index
    %c0_395 = arith.constant 0 : index
    %671 = vector.load %arg3[%c1_392, %c1_393, %c0_394, %c0_395] : memref<2x3x32x32xbf16, #tpu.memory_space<vmem>>, vector<1x1x32x32xbf16>
    %672 = vector.shape_cast %671 : vector<1x1x32x32xbf16> to vector<32x32xbf16>
    %cst_396 = arith.constant dense<0.000000e+00> : vector<8x32xf32>
    %673 = tpu.matmul %657, %672, %cst_396 {dimension_numbers = #tpu.dot_dimension_numbers<[1], [0], [0], [1], [0, 0, 1, 1], [], []>} : vector<8x32xbf16>, vector<32x32xbf16>, vector<8x32xf32> -> vector<8x32xf32>
    %c1_397 = arith.constant 1 : index
    %c2_398 = arith.constant 2 : index
    %c0_399 = arith.constant 0 : index
    %c0_400 = arith.constant 0 : index
    %674 = vector.load %arg3[%c1_397, %c2_398, %c0_399, %c0_400] : memref<2x3x32x32xbf16, #tpu.memory_space<vmem>>, vector<1x1x32x32xbf16>
    %675 = vector.shape_cast %674 : vector<1x1x32x32xbf16> to vector<32x32xbf16>
    %cst_401 = arith.constant dense<0.000000e+00> : vector<8x32xf32>
    %676 = tpu.matmul %657, %675, %cst_401 {dimension_numbers = #tpu.dot_dimension_numbers<[1], [0], [0], [1], [0, 0, 1, 1], [], []>} : vector<8x32xbf16>, vector<32x32xbf16>, vector<8x32xf32> -> vector<8x32xf32>
    %677 = arith.addf %661, %670 : vector<8x32xf32>
    %678 = vector.broadcast %20 : vector<1x32xf32> to vector<8x32xf32>
    %679 = arith.addf %677, %678 : vector<8x32xf32>
    %680 = arith.negf %679 : vector<8x32xf32>
    %681 = math.exp %680 : vector<8x32xf32>
    %cst_402 = arith.constant 1.000000e+00 : f32
    %682 = vector.broadcast %cst_402 : f32 to vector<8x32xf32>
    %683 = arith.addf %682, %681 : vector<8x32xf32>
    %684 = arith.divf %682, %683 : vector<8x32xf32>
    %685 = arith.addf %664, %673 : vector<8x32xf32>
    %686 = vector.broadcast %22 : vector<1x32xf32> to vector<8x32xf32>
    %687 = arith.addf %685, %686 : vector<8x32xf32>
    %688 = arith.negf %687 : vector<8x32xf32>
    %689 = math.exp %688 : vector<8x32xf32>
    %cst_403 = arith.constant 1.000000e+00 : f32
    %690 = vector.broadcast %cst_403 : f32 to vector<8x32xf32>
    %691 = arith.addf %690, %689 : vector<8x32xf32>
    %692 = arith.divf %690, %691 : vector<8x32xf32>
    %693 = vector.broadcast %24 : vector<1x32xf32> to vector<8x32xf32>
    %694 = arith.addf %667, %693 : vector<8x32xf32>
    %695 = vector.broadcast %26 : vector<1x32xf32> to vector<8x32xf32>
    %696 = arith.addf %676, %695 : vector<8x32xf32>
    %697 = arith.mulf %684, %696 : vector<8x32xf32>
    %698 = arith.addf %694, %697 : vector<8x32xf32>
    %699 = math.tanh %698 : vector<8x32xf32>
    %cst_404 = arith.constant 1.000000e+00 : f32
    %700 = vector.broadcast %cst_404 : f32 to vector<8x32xf32>
    %701 = arith.subf %700, %692 : vector<8x32xf32>
    %702 = arith.mulf %701, %699 : vector<8x32xf32>
    %703 = arith.mulf %692, %610 : vector<8x32xf32>
    %704 = arith.addf %702, %703 : vector<8x32xf32>
    %705 = vector.shape_cast %612 : vector<8x1xi1> to vector<8x1xi1>
    %706 = vector.broadcast %705 : vector<8x1xi1> to vector<8x32xi1>
    %707 = arith.select %706, %704, %610 : vector<8x32xi1>, vector<8x32xf32>
    %c7_i32 = arith.constant 7 : i32
    %708 = vector.broadcast %c7_i32 : i32 to vector<8x1xi32>
    %709 = arith.cmpi sgt, %0, %708 : vector<8x1xi32>
    %710 = arith.truncf %656 : vector<8x32xf32> to vector<8x32xbf16>
    %711 = vector.extract_strided_slice %4 {offsets = [56, 0], sizes = [8, 32], strides = [1, 1]} : vector<64x32xf32> to vector<8x32xf32>
    %712 = vector.extract_strided_slice %7 {offsets = [56, 0], sizes = [8, 32], strides = [1, 1]} : vector<64x32xf32> to vector<8x32xf32>
    %713 = vector.extract_strided_slice %10 {offsets = [56, 0], sizes = [8, 32], strides = [1, 1]} : vector<64x32xf32> to vector<8x32xf32>
    %c0_405 = arith.constant 0 : index
    %c0_406 = arith.constant 0 : index
    %c0_407 = arith.constant 0 : index
    %c0_408 = arith.constant 0 : index
    %714 = vector.load %arg3[%c0_405, %c0_406, %c0_407, %c0_408] : memref<2x3x32x32xbf16, #tpu.memory_space<vmem>>, vector<1x1x32x32xbf16>
    %715 = vector.shape_cast %714 : vector<1x1x32x32xbf16> to vector<32x32xbf16>
    %cst_409 = arith.constant dense<0.000000e+00> : vector<8x32xf32>
    %716 = tpu.matmul %710, %715, %cst_409 {dimension_numbers = #tpu.dot_dimension_numbers<[1], [0], [0], [1], [0, 0, 1, 1], [], []>} : vector<8x32xbf16>, vector<32x32xbf16>, vector<8x32xf32> -> vector<8x32xf32>
    %c0_410 = arith.constant 0 : index
    %c1_411 = arith.constant 1 : index
    %c0_412 = arith.constant 0 : index
    %c0_413 = arith.constant 0 : index
    %717 = vector.load %arg3[%c0_410, %c1_411, %c0_412, %c0_413] : memref<2x3x32x32xbf16, #tpu.memory_space<vmem>>, vector<1x1x32x32xbf16>
    %718 = vector.shape_cast %717 : vector<1x1x32x32xbf16> to vector<32x32xbf16>
    %cst_414 = arith.constant dense<0.000000e+00> : vector<8x32xf32>
    %719 = tpu.matmul %710, %718, %cst_414 {dimension_numbers = #tpu.dot_dimension_numbers<[1], [0], [0], [1], [0, 0, 1, 1], [], []>} : vector<8x32xbf16>, vector<32x32xbf16>, vector<8x32xf32> -> vector<8x32xf32>
    %c0_415 = arith.constant 0 : index
    %c2_416 = arith.constant 2 : index
    %c0_417 = arith.constant 0 : index
    %c0_418 = arith.constant 0 : index
    %720 = vector.load %arg3[%c0_415, %c2_416, %c0_417, %c0_418] : memref<2x3x32x32xbf16, #tpu.memory_space<vmem>>, vector<1x1x32x32xbf16>
    %721 = vector.shape_cast %720 : vector<1x1x32x32xbf16> to vector<32x32xbf16>
    %cst_419 = arith.constant dense<0.000000e+00> : vector<8x32xf32>
    %722 = tpu.matmul %710, %721, %cst_419 {dimension_numbers = #tpu.dot_dimension_numbers<[1], [0], [0], [1], [0, 0, 1, 1], [], []>} : vector<8x32xbf16>, vector<32x32xbf16>, vector<8x32xf32> -> vector<8x32xf32>
    %723 = arith.addf %711, %716 : vector<8x32xf32>
    %724 = vector.broadcast %12 : vector<1x32xf32> to vector<8x32xf32>
    %725 = arith.addf %723, %724 : vector<8x32xf32>
    %726 = arith.negf %725 : vector<8x32xf32>
    %727 = math.exp %726 : vector<8x32xf32>
    %cst_420 = arith.constant 1.000000e+00 : f32
    %728 = vector.broadcast %cst_420 : f32 to vector<8x32xf32>
    %729 = arith.addf %728, %727 : vector<8x32xf32>
    %730 = arith.divf %728, %729 : vector<8x32xf32>
    %731 = arith.addf %712, %719 : vector<8x32xf32>
    %732 = vector.broadcast %14 : vector<1x32xf32> to vector<8x32xf32>
    %733 = arith.addf %731, %732 : vector<8x32xf32>
    %734 = arith.negf %733 : vector<8x32xf32>
    %735 = math.exp %734 : vector<8x32xf32>
    %cst_421 = arith.constant 1.000000e+00 : f32
    %736 = vector.broadcast %cst_421 : f32 to vector<8x32xf32>
    %737 = arith.addf %736, %735 : vector<8x32xf32>
    %738 = arith.divf %736, %737 : vector<8x32xf32>
    %739 = vector.broadcast %16 : vector<1x32xf32> to vector<8x32xf32>
    %740 = arith.addf %713, %739 : vector<8x32xf32>
    %741 = vector.broadcast %18 : vector<1x32xf32> to vector<8x32xf32>
    %742 = arith.addf %722, %741 : vector<8x32xf32>
    %743 = arith.mulf %730, %742 : vector<8x32xf32>
    %744 = arith.addf %740, %743 : vector<8x32xf32>
    %745 = math.tanh %744 : vector<8x32xf32>
    %cst_422 = arith.constant 1.000000e+00 : f32
    %746 = vector.broadcast %cst_422 : f32 to vector<8x32xf32>
    %747 = arith.subf %746, %738 : vector<8x32xf32>
    %748 = arith.mulf %747, %745 : vector<8x32xf32>
    %749 = arith.mulf %738, %656 : vector<8x32xf32>
    %750 = arith.addf %748, %749 : vector<8x32xf32>
    %751 = vector.shape_cast %709 : vector<8x1xi1> to vector<8x1xi1>
    %752 = vector.broadcast %751 : vector<8x1xi1> to vector<8x32xi1>
    %753 = arith.select %752, %750, %656 : vector<8x32xi1>, vector<8x32xf32>
    %754 = arith.truncf %707 : vector<8x32xf32> to vector<8x32xbf16>
    %755 = arith.truncf %753 : vector<8x32xf32> to vector<8x32xbf16>
    %c1_423 = arith.constant 1 : index
    %c0_424 = arith.constant 0 : index
    %c0_425 = arith.constant 0 : index
    %c0_426 = arith.constant 0 : index
    %756 = vector.load %arg2[%c1_423, %c0_424, %c0_425, %c0_426] : memref<2x3x32x32xbf16, #tpu.memory_space<vmem>>, vector<1x1x32x32xbf16>
    %757 = vector.shape_cast %756 : vector<1x1x32x32xbf16> to vector<32x32xbf16>
    %cst_427 = arith.constant dense<0.000000e+00> : vector<8x32xf32>
    %758 = tpu.matmul %755, %757, %cst_427 {dimension_numbers = #tpu.dot_dimension_numbers<[1], [0], [0], [1], [0, 0, 1, 1], [], []>} : vector<8x32xbf16>, vector<32x32xbf16>, vector<8x32xf32> -> vector<8x32xf32>
    %c1_428 = arith.constant 1 : index
    %c1_429 = arith.constant 1 : index
    %c0_430 = arith.constant 0 : index
    %c0_431 = arith.constant 0 : index
    %759 = vector.load %arg2[%c1_428, %c1_429, %c0_430, %c0_431] : memref<2x3x32x32xbf16, #tpu.memory_space<vmem>>, vector<1x1x32x32xbf16>
    %760 = vector.shape_cast %759 : vector<1x1x32x32xbf16> to vector<32x32xbf16>
    %cst_432 = arith.constant dense<0.000000e+00> : vector<8x32xf32>
    %761 = tpu.matmul %755, %760, %cst_432 {dimension_numbers = #tpu.dot_dimension_numbers<[1], [0], [0], [1], [0, 0, 1, 1], [], []>} : vector<8x32xbf16>, vector<32x32xbf16>, vector<8x32xf32> -> vector<8x32xf32>
    %c1_433 = arith.constant 1 : index
    %c2_434 = arith.constant 2 : index
    %c0_435 = arith.constant 0 : index
    %c0_436 = arith.constant 0 : index
    %762 = vector.load %arg2[%c1_433, %c2_434, %c0_435, %c0_436] : memref<2x3x32x32xbf16, #tpu.memory_space<vmem>>, vector<1x1x32x32xbf16>
    %763 = vector.shape_cast %762 : vector<1x1x32x32xbf16> to vector<32x32xbf16>
    %cst_437 = arith.constant dense<0.000000e+00> : vector<8x32xf32>
    %764 = tpu.matmul %755, %763, %cst_437 {dimension_numbers = #tpu.dot_dimension_numbers<[1], [0], [0], [1], [0, 0, 1, 1], [], []>} : vector<8x32xbf16>, vector<32x32xbf16>, vector<8x32xf32> -> vector<8x32xf32>
    %c1_438 = arith.constant 1 : index
    %c0_439 = arith.constant 0 : index
    %c0_440 = arith.constant 0 : index
    %c0_441 = arith.constant 0 : index
    %765 = vector.load %arg3[%c1_438, %c0_439, %c0_440, %c0_441] : memref<2x3x32x32xbf16, #tpu.memory_space<vmem>>, vector<1x1x32x32xbf16>
    %766 = vector.shape_cast %765 : vector<1x1x32x32xbf16> to vector<32x32xbf16>
    %cst_442 = arith.constant dense<0.000000e+00> : vector<8x32xf32>
    %767 = tpu.matmul %754, %766, %cst_442 {dimension_numbers = #tpu.dot_dimension_numbers<[1], [0], [0], [1], [0, 0, 1, 1], [], []>} : vector<8x32xbf16>, vector<32x32xbf16>, vector<8x32xf32> -> vector<8x32xf32>
    %c1_443 = arith.constant 1 : index
    %c1_444 = arith.constant 1 : index
    %c0_445 = arith.constant 0 : index
    %c0_446 = arith.constant 0 : index
    %768 = vector.load %arg3[%c1_443, %c1_444, %c0_445, %c0_446] : memref<2x3x32x32xbf16, #tpu.memory_space<vmem>>, vector<1x1x32x32xbf16>
    %769 = vector.shape_cast %768 : vector<1x1x32x32xbf16> to vector<32x32xbf16>
    %cst_447 = arith.constant dense<0.000000e+00> : vector<8x32xf32>
    %770 = tpu.matmul %754, %769, %cst_447 {dimension_numbers = #tpu.dot_dimension_numbers<[1], [0], [0], [1], [0, 0, 1, 1], [], []>} : vector<8x32xbf16>, vector<32x32xbf16>, vector<8x32xf32> -> vector<8x32xf32>
    %c1_448 = arith.constant 1 : index
    %c2_449 = arith.constant 2 : index
    %c0_450 = arith.constant 0 : index
    %c0_451 = arith.constant 0 : index
    %771 = vector.load %arg3[%c1_448, %c2_449, %c0_450, %c0_451] : memref<2x3x32x32xbf16, #tpu.memory_space<vmem>>, vector<1x1x32x32xbf16>
    %772 = vector.shape_cast %771 : vector<1x1x32x32xbf16> to vector<32x32xbf16>
    %cst_452 = arith.constant dense<0.000000e+00> : vector<8x32xf32>
    %773 = tpu.matmul %754, %772, %cst_452 {dimension_numbers = #tpu.dot_dimension_numbers<[1], [0], [0], [1], [0, 0, 1, 1], [], []>} : vector<8x32xbf16>, vector<32x32xbf16>, vector<8x32xf32> -> vector<8x32xf32>
    %774 = arith.addf %758, %767 : vector<8x32xf32>
    %775 = vector.broadcast %20 : vector<1x32xf32> to vector<8x32xf32>
    %776 = arith.addf %774, %775 : vector<8x32xf32>
    %777 = arith.negf %776 : vector<8x32xf32>
    %778 = math.exp %777 : vector<8x32xf32>
    %cst_453 = arith.constant 1.000000e+00 : f32
    %779 = vector.broadcast %cst_453 : f32 to vector<8x32xf32>
    %780 = arith.addf %779, %778 : vector<8x32xf32>
    %781 = arith.divf %779, %780 : vector<8x32xf32>
    %782 = arith.addf %761, %770 : vector<8x32xf32>
    %783 = vector.broadcast %22 : vector<1x32xf32> to vector<8x32xf32>
    %784 = arith.addf %782, %783 : vector<8x32xf32>
    %785 = arith.negf %784 : vector<8x32xf32>
    %786 = math.exp %785 : vector<8x32xf32>
    %cst_454 = arith.constant 1.000000e+00 : f32
    %787 = vector.broadcast %cst_454 : f32 to vector<8x32xf32>
    %788 = arith.addf %787, %786 : vector<8x32xf32>
    %789 = arith.divf %787, %788 : vector<8x32xf32>
    %790 = vector.broadcast %24 : vector<1x32xf32> to vector<8x32xf32>
    %791 = arith.addf %764, %790 : vector<8x32xf32>
    %792 = vector.broadcast %26 : vector<1x32xf32> to vector<8x32xf32>
    %793 = arith.addf %773, %792 : vector<8x32xf32>
    %794 = arith.mulf %781, %793 : vector<8x32xf32>
    %795 = arith.addf %791, %794 : vector<8x32xf32>
    %796 = math.tanh %795 : vector<8x32xf32>
    %cst_455 = arith.constant 1.000000e+00 : f32
    %797 = vector.broadcast %cst_455 : f32 to vector<8x32xf32>
    %798 = arith.subf %797, %789 : vector<8x32xf32>
    %799 = arith.mulf %798, %796 : vector<8x32xf32>
    %800 = arith.mulf %789, %707 : vector<8x32xf32>
    %801 = arith.addf %799, %800 : vector<8x32xf32>
    %802 = vector.shape_cast %709 : vector<8x1xi1> to vector<8x1xi1>
    %803 = vector.broadcast %802 : vector<8x1xi1> to vector<8x32xi1>
    %804 = arith.select %803, %801, %707 : vector<8x32xi1>, vector<8x32xf32>
    %805 = arith.truncf %804 : vector<8x32xf32> to vector<8x32xbf16>
    %c0_456 = arith.constant 0 : index
    %c0_457 = arith.constant 0 : index
    %806 = vector.load %arg5[%c0_456, %c0_457] : memref<32x128xbf16, #tpu.memory_space<vmem>>, vector<32x128xbf16>
    %cst_458 = arith.constant dense<0.000000e+00> : vector<8x128xf32>
    %807 = tpu.matmul %805, %806, %cst_458 {dimension_numbers = #tpu.dot_dimension_numbers<[1], [0], [0], [1], [0, 0, 1, 1], [], []>} : vector<8x32xbf16>, vector<32x128xbf16>, vector<8x128xf32> -> vector<8x128xf32>
    %c0_459 = arith.constant 0 : index
    %c0_460 = arith.constant 0 : index
    %808 = vector.load %arg6[%c0_459, %c0_460] : memref<1x128xf32, #tpu.memory_space<vmem>>, vector<1x128xf32>
    %809 = vector.broadcast %808 : vector<1x128xf32> to vector<8x128xf32>
    %810 = arith.addf %807, %809 : vector<8x128xf32>
    %811 = arith.negf %810 : vector<8x128xf32>
    %812 = math.exp %811 : vector<8x128xf32>
    %cst_461 = arith.constant 1.000000e+00 : f32
    %813 = vector.broadcast %cst_461 : f32 to vector<8x128xf32>
    %814 = arith.addf %813, %812 : vector<8x128xf32>
    %815 = arith.divf %813, %814 : vector<8x128xf32>
    %c0_462 = arith.constant 0 : index
    %c0_463 = arith.constant 0 : index
    %816 = vector.load %arg7[%c0_462, %c0_463] : memref<8x128xf32, #tpu.memory_space<vmem>>, vector<8x128xf32>
    tpu.vector_store %arg7[%c0_462, %c0_463], %815 {strides = array<i32>} : memref<8x128xf32, #tpu.memory_space<vmem>>, vector<8x128xf32>,
    return
  }
}

</mosaic_0001>

<llo_original>
// kernel: tpu_custom_call.1
$region0: #{tpu_custom_call.1}
  #allocation0 [shape = 'u32[]', space=smem, size = 0x4, offset = 0x4, fixed_abs, tag = 'smem constant byte address 0x4 - core index']
  #allocation1 [shape = 'u32[72,128]{1,0:T(1,128)}', space=vmem, size = 0x9000, scoped, tag = 'internal scratch']
  %s0 = inlined_call_operand.vmem [shape: s32[8,1], index: 0, kind: input, shape index: {}]
  %s1 = inlined_call_operand.vmem [shape: bf16[64,32], index: 1, kind: input, shape index: {}]
  %s2 = inlined_call_operand.hbm [shape: bf16[2,3,32,32], index: 2, kind: input, shape index: {}]
  %s3 = inlined_call_operand.hbm [shape: bf16[2,3,32,32], index: 3, kind: input, shape index: {}]
  %s4 = inlined_call_operand.vmem [shape: f32[2,4,1,32], index: 4, kind: input, shape index: {}]
  %s5 = inlined_call_operand.vmem [shape: bf16[32,128], index: 5, kind: input, shape index: {}]
  %s6 = inlined_call_operand.vmem [shape: f32[1,128], index: 6, kind: input, shape index: {}]
  %s7 = inlined_call_operand.hbm [shape: f32[8,128], index: 7, kind: output, shape index: {}]
  %s8 = sld [smem:[#allocation0]]
  $region46: #{tpu_custom_call.1} parent=0
    _
  %s10 = ssub.s32 1, %s8
  %s11 = scalar_select 0, %s10, %s8
  $region1: #{tpu_custom_call.1} parent=0
    #allocation2 [shape = 'u8[49152]{0}', space=vmem, size = 0xc000, scoped, tag = 'input window, operand 2, single buffered']
    #allocation3 [shape = 's32[1]{0}', space=sflag, size = 0x4, scoped, tag = 'scoped memory for tpu_custom_call.1']
    #allocation4 [shape = 's32[1]{0}', space=sflag, size = 0x4, scoped, tag = 'scoped memory for tpu_custom_call.1']
    #allocation5 [shape = 'u8[49152]{0}', space=vmem, size = 0xc000, scoped, tag = 'input window, operand 3, single buffered']
    #allocation6 [shape = 's32[1]{0}', space=sflag, size = 0x4, scoped, tag = 'scoped memory for tpu_custom_call.1']
    #allocation7 [shape = 'u8[4096]{0}', space=vmem, size = 0x1000, scoped, tag = 'output window, operand 0, single buffered']
    %12 = vsyncpa [#allocation3], 0
    %13 = vsyncpa [#allocation6], 0
    %14 = vsyncpa [#allocation4], 0
    // Predicated region
    $region2: #{tpu_custom_call.1} parent=1 // pred_check
      _
    $region3: #{tpu_custom_call.1} parent=1 // pred_check_branch
      %16 = sbr.rel (0) target = $region5
    $region4: #{tpu_custom_call.1} parent=1 // pred_region
      _
    $region5: #{tpu_custom_call.1} parent=1 // pred_fallthru
      _
    // Predicated region
    $region6: #{tpu_custom_call.1} parent=1 // pred_check
      _
    $region7: #{tpu_custom_call.1} parent=1 // pred_check_branch
      %18 = sbr.rel (0) target = $region9
    $region8: #{tpu_custom_call.1} parent=1 // pred_region
      _
    $region9: #{tpu_custom_call.1} parent=1 // pred_fallthru
      _
    // Predicated region
    $region10: #{tpu_custom_call.1} parent=1 // pred_check
      _
    $region11: #{tpu_custom_call.1} parent=1 // pred_check_branch
      %20 = sbr.rel (0) target = $region13
    $region12: #{tpu_custom_call.1} parent=1 // pred_region
      %22 = vsyncadd [#allocation3], 0
      %s23 = sshll.u32 %s2, 4
      %s24 = int_to_ptr.hbm [resolvable:$true] %s23
      %s25 = sshll.u32 [#allocation2], 4
      %s26 = int_to_ptr.vmem [resolvable:$true] %s25
      %31 = dma.hbm_to_vmem [thread:$0]  %s24, 1536, %s26, [#allocation3], 64, 64, 4
    $region13: #{tpu_custom_call.1} parent=1 // pred_fallthru
      _
    // Predicated region
    $region14: #{tpu_custom_call.1} parent=1 // pred_check
      _
    $region15: #{tpu_custom_call.1} parent=1 // pred_check_branch
      %33 = sbr.rel (0) target = $region17
    $region16: #{tpu_custom_call.1} parent=1 // pred_region
      %35 = vsyncadd [#allocation6], 0
      %s36 = sshll.u32 %s3, 4
      %s37 = int_to_ptr.hbm [resolvable:$true] %s36
      %s38 = sshll.u32 [#allocation5], 4
      %s39 = int_to_ptr.vmem [resolvable:$true] %s38
      %44 = dma.hbm_to_vmem [thread:$0]  %s37, 1536, %s39, [#allocation6], 64, 64, 4
    $region17: #{tpu_custom_call.1} parent=1 // pred_fallthru
      _
    // Predicated region
    $region18: #{tpu_custom_call.1} parent=1 // pred_check
      _
    $region19: #{tpu_custom_call.1} parent=1 // pred_check_branch
      %46 = sbr.rel (0) target = $region21
    $region20: #{tpu_custom_call.1} parent=1 // pred_region
      _
    $region21: #{tpu_custom_call.1} parent=1 // pred_fallthru
      _
    // Predicated region
    $region22: #{tpu_custom_call.1} parent=1 // pred_check
      _
    $region23: #{tpu_custom_call.1} parent=1 // pred_check_branch
      %48 = sbr.rel (0) target = $region25
    $region24: #{tpu_custom_call.1} parent=1 // pred_region
      _
    $region25: #{tpu_custom_call.1} parent=1 // pred_fallthru
      _
    // Predicated region
    $region26: #{tpu_custom_call.1} parent=1 // pred_check
      _
    $region27: #{tpu_custom_call.1} parent=1 // pred_check_branch
      %50 = sbr.rel (0) target = $region29
    $region28: #{tpu_custom_call.1} parent=1 // pred_region
      _
    $region29: #{tpu_custom_call.1} parent=1 // pred_fallthru
      _
    // Predicated region
    $region30: #{tpu_custom_call.1} parent=1 // pred_check
      _
    $region31: #{tpu_custom_call.1} parent=1 // pred_check_branch
      %52 = sbr.rel (0) target = $region33
    $region32: #{tpu_custom_call.1} parent=1 // pred_region
      %54 = dma.done [#allocation3], 1536
    $region33: #{tpu_custom_call.1} parent=1 // pred_fallthru
      _
    // Predicated region
    $region34: #{tpu_custom_call.1} parent=1 // pred_check
      _
    $region35: #{tpu_custom_call.1} parent=1 // pred_check_branch
      %56 = sbr.rel (0) target = $region37
    $region36: #{tpu_custom_call.1} parent=1 // pred_region
      %58 = dma.done [#allocation6], 1536
    $region37: #{tpu_custom_call.1} parent=1 // pred_fallthru
      _
    %v60 = vld [vmem:[%s0] sm:$0xff]
    %v61 = vld [vmem:[%s1] sm:$0xf]
    %v62 = vld [vmem:[%s1 + $0x4] sm:$0xf]
    %v63 = vld [vmem:[%s1 + $0x8] sm:$0xf]
    %v64 = vld [vmem:[%s1 + $0xc] sm:$0xf]
    %v65 = vld [vmem:[%s1 + $0x10] sm:$0xf]
    %v66 = vld [vmem:[%s1 + $0x14] sm:$0xf]
    %v67 = vld [vmem:[%s1 + $0x18] sm:$0xf]
    %v68 = vld [vmem:[%s1 + $0x1c] sm:$0xf]
    %v69 = vld [vmem:[#allocation2] sm:$0xf]
    %v70 = vld [vmem:[#allocation2 + $0x4] sm:$0xf]
    %v71 = vld [vmem:[#allocation2 + $0x8] sm:$0xf]
    %v72 = vld [vmem:[#allocation2 + $0xc] sm:$0xf]
    %v81 = vunpack.c.l.b16 %v61
    %v82 = vunpack.c.l.b16 %v62
    %v83 = vunpack.c.l.b16 %v63
    %v84 = vunpack.c.l.b16 %v64
    %v85 = vunpack.c.l.b16 %v65
    %v86 = vunpack.c.l.b16 %v66
    %v87 = vunpack.c.l.b16 %v67
    %v88 = vunpack.c.l.b16 %v68
    %v89 = vpack.c.b16 %v82, %v81
    %v90 = vpack.c.b16 %v84, %v83
    %v91 = vpack.c.b16 %v86, %v85
    %v92 = vpack.c.b16 %v88, %v87
    %v97 = vunpack.c.l.b16 %v69
    %v98 = vunpack.c.l.b16 %v70
    %v99 = vunpack.c.l.b16 %v71
    %v100 = vunpack.c.l.b16 %v72
    %v101 = vpack.c.b16 %v98, %v97
    %v102 = vpack.c.b16 %v100, %v99
    %vm105 = vcmask 261120
    %v107 = vsel %vm105, %v89, 0
    %v110 = vsel %vm105, %v90, 0
    %v113 = vsel %vm105, %v91, 0
    %v116 = vsel %vm105, %v92, 0
    %118 = vmatpush.bf16.msra.mxu0 0
    %119 = vmatpush.bf16.msra.mxu0 0
    %120 = vmatpush.bf16.msra.mxu0 0
    %121 = vmatpush.bf16.msra.mxu0 0
    %122 = vmatpush.bf16.msra.mxu0 0
    %123 = vmatpush.bf16.msra.mxu0 0
    %124 = vmatpush.bf16.msra.mxu0 %v102
    %125 = vmatpush.bf16.msra.mxu0 %v101
    %126 = vmatmul.bf16.gmra.mxu0 %v107
    %v127 = vpop.f32.mrf.mxu0
    %v128 = vadd.f32 0.0, %v127
    %v129 = vpop.f32.mrf.mxu0
    %v130 = vadd.f32 0.0, %v129
    %131 = vmatmul.bf16.gmra.mxu0 %v110
    %v132 = vpop.f32.mrf.mxu0
    %v133 = vadd.f32 0.0, %v132
    %v134 = vpop.f32.mrf.mxu0
    %v135 = vadd.f32 0.0, %v134
    %136 = vmatmul.bf16.gmra.mxu0 %v113
    %v137 = vpop.f32.mrf.mxu0
    %v138 = vadd.f32 0.0, %v137
    %v139 = vpop.f32.mrf.mxu0
    %v140 = vadd.f32 0.0, %v139
    %141 = vmatmul.bf16.gmra.mxu0 %v116
    %v142 = vpop.f32.mrf.mxu0
    %v143 = vadd.f32 0.0, %v142
    %v144 = vpop.f32.mrf.mxu0
    %v145 = vadd.f32 0.0, %v144
    %146 = vdwg.mxu0
    %s147 = scalar_lea.vmem [#allocation2], 16
    %v148 = vld [vmem:[%s147] sm:$0xf]
    %v149 = vld [vmem:[%s147 + $0x4] sm:$0xf]
    %v150 = vld [vmem:[%s147 + $0x8] sm:$0xf]
    %v151 = vld [vmem:[%s147 + $0xc] sm:$0xf]
    %v156 = vunpack.c.l.b16 %v148
    %v157 = vunpack.c.l.b16 %v149
    %v158 = vunpack.c.l.b16 %v150
    %v159 = vunpack.c.l.b16 %v151
    %v160 = vpack.c.b16 %v157, %v156
    %v161 = vpack.c.b16 %v159, %v158
    %164 = vmatpush.bf16.msra.mxu0 0
    %165 = vmatpush.bf16.msra.mxu0 0
    %166 = vmatpush.bf16.msra.mxu0 0
    %167 = vmatpush.bf16.msra.mxu0 0
    %168 = vmatpush.bf16.msra.mxu0 0
    %169 = vmatpush.bf16.msra.mxu0 0
    %170 = vmatpush.bf16.msra.mxu0 %v161
    %171 = vmatpush.bf16.msra.mxu0 %v160
    %172 = vmatmul.bf16.gmra.mxu0 %v107
    %v173 = vpop.f32.mrf.mxu0
    %v174 = vadd.f32 0.0, %v173
    %v175 = vpop.f32.mrf.mxu0
    %v176 = vadd.f32 0.0, %v175
    %177 = vmatmul.bf16.gmra.mxu0 %v110
    %v178 = vpop.f32.mrf.mxu0
    %v179 = vadd.f32 0.0, %v178
    %v180 = vpop.f32.mrf.mxu0
    %v181 = vadd.f32 0.0, %v180
    %182 = vmatmul.bf16.gmra.mxu0 %v113
    %v183 = vpop.f32.mrf.mxu0
    %v184 = vadd.f32 0.0, %v183
    %v185 = vpop.f32.mrf.mxu0
    %v186 = vadd.f32 0.0, %v185
    %187 = vmatmul.bf16.gmra.mxu0 %v116
    %v188 = vpop.f32.mrf.mxu0
    %v189 = vadd.f32 0.0, %v188
    %v190 = vpop.f32.mrf.mxu0
    %v191 = vadd.f32 0.0, %v190
    %192 = vdwg.mxu0
    %s193 = scalar_lea.vmem [#allocation2], 32
    %v194 = vld [vmem:[%s193] sm:$0xf]
    %v195 = vld [vmem:[%s193 + $0x4] sm:$0xf]
    %v196 = vld [vmem:[%s193 + $0x8] sm:$0xf]
    %v197 = vld [vmem:[%s193 + $0xc] sm:$0xf]
    %v202 = vunpack.c.l.b16 %v194
    %v203 = vunpack.c.l.b16 %v195
    %v204 = vunpack.c.l.b16 %v196
    %v205 = vunpack.c.l.b16 %v197
    %v206 = vpack.c.b16 %v203, %v202
    %v207 = vpack.c.b16 %v205, %v204
    %210 = vmatpush.bf16.msra.mxu0 0
    %211 = vmatpush.bf16.msra.mxu0 0
    %212 = vmatpush.bf16.msra.mxu0 0
    %213 = vmatpush.bf16.msra.mxu0 0
    %214 = vmatpush.bf16.msra.mxu0 0
    %215 = vmatpush.bf16.msra.mxu0 0
    %216 = vmatpush.bf16.msra.mxu0 %v207
    %217 = vmatpush.bf16.msra.mxu0 %v206
    %218 = vmatmul.bf16.gmra.mxu0 %v107
    %v219 = vpop.f32.mrf.mxu0
    %v220 = vadd.f32 0.0, %v219
    %v221 = vpop.f32.mrf.mxu0
    %v222 = vadd.f32 0.0, %v221
    %223 = vmatmul.bf16.gmra.mxu0 %v110
    %v224 = vpop.f32.mrf.mxu0
    %v225 = vadd.f32 0.0, %v224
    %v226 = vpop.f32.mrf.mxu0
    %v227 = vadd.f32 0.0, %v226
    %228 = vmatmul.bf16.gmra.mxu0 %v113
    %v229 = vpop.f32.mrf.mxu0
    %v230 = vadd.f32 0.0, %v229
    %v231 = vpop.f32.mrf.mxu0
    %v232 = vadd.f32 0.0, %v231
    %233 = vmatmul.bf16.gmra.mxu0 %v116
    %v234 = vpop.f32.mrf.mxu0
    %v235 = vadd.f32 0.0, %v234
    %v236 = vpop.f32.mrf.mxu0
    %v237 = vadd.f32 0.0, %v236
    %238 = vdwg.mxu0
    %v239 = vld [vmem:[%s4] sm:$0x1]
    %s240 = scalar_lea.vmem %s4, 1
    %v241 = vld [vmem:[%s240] sm:$0x1]
    %s242 = scalar_lea.vmem %s4, 2
    %v243 = vld [vmem:[%s242] sm:$0x1]
    %s244 = scalar_lea.vmem %s4, 3
    %v245 = vld [vmem:[%s244] sm:$0x1]
    %s246 = scalar_lea.vmem %s4, 4
    %v247 = vld [vmem:[%s246] sm:$0x1]
    %s248 = scalar_lea.vmem %s4, 5
    %v249 = vld [vmem:[%s248] sm:$0x1]
    %s250 = scalar_lea.vmem %s4, 6
    %v251 = vld [vmem:[%s250] sm:$0x1]
    %s252 = scalar_lea.vmem %s4, 7
    %v253 = vld [vmem:[%s252] sm:$0x1]
    %vm254 = vcmp.gt.s32.totalorder %v60, 0
    %v255 = vld [vmem:[#allocation5] sm:$0xf]
    %v256 = vld [vmem:[#allocation5 + $0x4] sm:$0xf]
    %v257 = vld [vmem:[#allocation5 + $0x8] sm:$0xf]
    %v258 = vld [vmem:[#allocation5 + $0xc] sm:$0xf]
    %v263 = vunpack.c.l.b16 %v255
    %v264 = vunpack.c.l.b16 %v256
    %v265 = vunpack.c.l.b16 %v257
    %v266 = vunpack.c.l.b16 %v258
    %v267 = vpack.c.b16 %v264, %v263
    %v268 = vpack.c.b16 %v266, %v265
    %v272 = vsel %vm105, 0, 0
    %274 = vmatpush.bf16.msra.mxu0 0
    %275 = vmatpush.bf16.msra.mxu0 0
    %276 = vmatpush.bf16.msra.mxu0 0
    %277 = vmatpush.bf16.msra.mxu0 0
    %278 = vmatpush.bf16.msra.mxu0 0
    %279 = vmatpush.bf16.msra.mxu0 0
    %280 = vmatpush.bf16.msra.mxu0 %v268
    %281 = vmatpush.bf16.msra.mxu0 %v267
    %282 = vmatmul.bf16.gmra.mxu0 %v272
    %v283 = vpop.f32.mrf.mxu0
    %v284 = vadd.f32 0.0, %v283
    %v285 = vpop.f32.mrf.mxu0
    %286 = vdwg.mxu0
    %s287 = scalar_lea.vmem [#allocation5], 16
    %v288 = vld [vmem:[%s287] sm:$0xf]
    %v289 = vld [vmem:[%s287 + $0x4] sm:$0xf]
    %v290 = vld [vmem:[%s287 + $0x8] sm:$0xf]
    %v291 = vld [vmem:[%s287 + $0xc] sm:$0xf]
    %v296 = vunpack.c.l.b16 %v288
    %v297 = vunpack.c.l.b16 %v289
    %v298 = vunpack.c.l.b16 %v290
    %v299 = vunpack.c.l.b16 %v291
    %v300 = vpack.c.b16 %v297, %v296
    %v301 = vpack.c.b16 %v299, %v298
    %304 = vmatpush.bf16.msra.mxu0 0
    %305 = vmatpush.bf16.msra.mxu0 0
    %306 = vmatpush.bf16.msra.mxu0 0
    %307 = vmatpush.bf16.msra.mxu0 0
    %308 = vmatpush.bf16.msra.mxu0 0
    %309 = vmatpush.bf16.msra.mxu0 0
    %310 = vmatpush.bf16.msra.mxu0 %v301
    %311 = vmatpush.bf16.msra.mxu0 %v300
    %312 = vmatmul.bf16.gmra.mxu0 %v272
    %v313 = vpop.f32.mrf.mxu0
    %v314 = vadd.f32 0.0, %v313
    %v315 = vpop.f32.mrf.mxu0
    %316 = vdwg.mxu0
    %s317 = scalar_lea.vmem [#allocation5], 32
    %v318 = vld [vmem:[%s317] sm:$0xf]
    %v319 = vld [vmem:[%s317 + $0x4] sm:$0xf]
    %v320 = vld [vmem:[%s317 + $0x8] sm:$0xf]
    %v321 = vld [vmem:[%s317 + $0xc] sm:$0xf]
    %v322 = vadd.f32 %v128, %v284
    %v324 = vperm.slane %v239, 0
    %v326 = vadd.f32 %v322, %v324
    %v327 = vxor.u32 %v326, 2147483648
    %v328 = vmul.f32 %v327, 1.442695
    %v329 = vpow.pop %v328
    %v330 = vadd.f32 %v329, 1.0
    %v331 = vrcp.pop %v330
    %v332 = vmul.f32 %v330, %v331
    %v333 = vsub.f32 1.0, %v332
    %v334 = vmul.f32 %v331, %v333
    %v335 = vadd.f32 %v331, %v334
    %vm336 = vweird.f32 %v330
    %vm337 = vweird.f32 %v331
    %vm338 = vmor %vm336, %vm337
    %v339 = vsel %vm338, %v331, %v335
    %v340 = vand.u32 2147483647, %v330
    %vm341 = vcmp.eq.f32.partialorder %v340, 8.507059e+37
    %v342 = vand.u32 %v330, 2147483648
    %v343 = vor.u32 1.1754944e-38, %v342
    %v344 = vsel %vm341, %v343, %v339
    %v345 = vmul.f32 1.0, %v344
    %v346 = vadd.f32 %v174, %v314
    %v348 = vperm.slane %v241, 0
    %v350 = vadd.f32 %v346, %v348
    %v351 = vxor.u32 %v350, 2147483648
    %v352 = vmul.f32 %v351, 1.442695
    %v353 = vpow.pop %v352
    %v354 = vadd.f32 %v353, 1.0
    %v355 = vrcp.pop %v354
    %v356 = vmul.f32 %v354, %v355
    %v357 = vsub.f32 1.0, %v356
    %v358 = vmul.f32 %v355, %v357
    %v359 = vadd.f32 %v355, %v358
    %vm360 = vweird.f32 %v354
    %vm361 = vweird.f32 %v355
    %vm362 = vmor %vm360, %vm361
    %v363 = vsel %vm362, %v355, %v359
    %v364 = vand.u32 2147483647, %v354
    %vm365 = vcmp.eq.f32.partialorder %v364, 8.507059e+37
    %v366 = vand.u32 %v354, 2147483648
    %v367 = vor.u32 1.1754944e-38, %v366
    %v368 = vsel %vm365, %v367, %v363
    %v369 = vmul.f32 1.0, %v368
    %v371 = vperm.slane %v243, 0
    %v373 = vadd.f32 %v220, %v371
    %v375 = vperm.slane %v245, 0
    %v381 = vunpack.c.l.b16 %v318
    %v382 = vunpack.c.l.b16 %v319
    %v383 = vunpack.c.l.b16 %v320
    %v384 = vunpack.c.l.b16 %v321
    %v385 = vpack.c.b16 %v382, %v381
    %v386 = vpack.c.b16 %v384, %v383
    %389 = vmatpush.bf16.msra.mxu0 0
    %390 = vmatpush.bf16.msra.mxu0 0
    %391 = vmatpush.bf16.msra.mxu0 0
    %392 = vmatpush.bf16.msra.mxu0 0
    %393 = vmatpush.bf16.msra.mxu0 0
    %394 = vmatpush.bf16.msra.mxu0 0
    %395 = vmatpush.bf16.msra.mxu0 %v386
    %396 = vmatpush.bf16.msra.mxu0 %v385
    %397 = vmatmul.bf16.gmra.mxu0 %v272
    %v398 = vpop.f32.mrf.mxu0
    %v399 = vadd.f32 %v375, %v398
    %v400 = vpop.f32.mrf.mxu0
    %401 = vdwg.mxu0
    %v402 = vmul.f32 %v345, %v399
    %v403 = vadd.f32 %v373, %v402
    %v404 = vtanh.pop %v403
    %v405 = vsub.f32 1.0, %v369
    %v406 = vmul.f32 %v405, %v404
    %v407 = vmul.f32 %v369, 0.0
    %v408 = vadd.f32 %v406, %v407
    %v409 = vsel %vm254, 1, 0
    %410 = vset.pattern.permute.xlu0 0
    %411 = vperm.xlu0 %410, %v409
    %v412 = vpop.permute.xlu0 %411
    %vm413 = vcmp.eq.s32.totalorder %v412, 1
    %v414 = vsel %vm413, %v408, 0.0
    %v415 = vpack.c.bf16 %v414, %v414
    %s416 = scalar_lea.vmem [#allocation2], 48
    %v417 = vld [vmem:[%s416] sm:$0xf]
    %v418 = vld [vmem:[%s416 + $0x4] sm:$0xf]
    %v419 = vld [vmem:[%s416 + $0x8] sm:$0xf]
    %v420 = vld [vmem:[%s416 + $0xc] sm:$0xf]
    %s421 = scalar_lea.vmem [#allocation2], 64
    %v422 = vld [vmem:[%s421] sm:$0xf]
    %v423 = vld [vmem:[%s421 + $0x4] sm:$0xf]
    %v424 = vld [vmem:[%s421 + $0x8] sm:$0xf]
    %v425 = vld [vmem:[%s421 + $0xc] sm:$0xf]
    %s426 = scalar_lea.vmem [#allocation2], 80
    %v427 = vld [vmem:[%s426] sm:$0xf]
    %v428 = vld [vmem:[%s426 + $0x4] sm:$0xf]
    %v429 = vld [vmem:[%s426 + $0x8] sm:$0xf]
    %v430 = vld [vmem:[%s426 + $0xc] sm:$0xf]
    %s431 = scalar_lea.vmem [#allocation5], 48
    %v432 = vld [vmem:[%s431] sm:$0xf]
    %v433 = vld [vmem:[%s431 + $0x4] sm:$0xf]
    %v434 = vld [vmem:[%s431 + $0x8] sm:$0xf]
    %v435 = vld [vmem:[%s431 + $0xc] sm:$0xf]
    %v440 = vunpack.c.l.b16 %v432
    %v441 = vunpack.c.l.b16 %v433
    %v442 = vunpack.c.l.b16 %v434
    %v443 = vunpack.c.l.b16 %v435
    %v444 = vpack.c.b16 %v441, %v440
    %v445 = vpack.c.b16 %v443, %v442
    %448 = vmatpush.bf16.msra.mxu0 0
    %449 = vmatpush.bf16.msra.mxu0 0
    %450 = vmatpush.bf16.msra.mxu0 0
    %451 = vmatpush.bf16.msra.mxu0 0
    %452 = vmatpush.bf16.msra.mxu0 0
    %453 = vmatpush.bf16.msra.mxu0 0
    %454 = vmatpush.bf16.msra.mxu0 %v445
    %455 = vmatpush.bf16.msra.mxu0 %v444
    %456 = vmatmul.bf16.gmra.mxu0 %v272
    %v457 = vpop.f32.mrf.mxu0
    %v458 = vadd.f32 0.0, %v457
    %v459 = vpop.f32.mrf.mxu0
    %460 = vdwg.mxu0
    %s461 = scalar_lea.vmem [#allocation5], 64
    %v462 = vld [vmem:[%s461] sm:$0xf]
    %v463 = vld [vmem:[%s461 + $0x4] sm:$0xf]
    %v464 = vld [vmem:[%s461 + $0x8] sm:$0xf]
    %v465 = vld [vmem:[%s461 + $0xc] sm:$0xf]
    %v470 = vunpack.c.l.b16 %v462
    %v471 = vunpack.c.l.b16 %v463
    %v472 = vunpack.c.l.b16 %v464
    %v473 = vunpack.c.l.b16 %v465
    %v474 = vpack.c.b16 %v471, %v470
    %v475 = vpack.c.b16 %v473, %v472
    %478 = vmatpush.bf16.msra.mxu0 0
    %479 = vmatpush.bf16.msra.mxu0 0
    %480 = vmatpush.bf16.msra.mxu0 0
    %481 = vmatpush.bf16.msra.mxu0 0
    %482 = vmatpush.bf16.msra.mxu0 0
    %483 = vmatpush.bf16.msra.mxu0 0
    %484 = vmatpush.bf16.msra.mxu0 %v475
    %485 = vmatpush.bf16.msra.mxu0 %v474
    %486 = vmatmul.bf16.gmra.mxu0 %v272
    %v487 = vpop.f32.mrf.mxu0
    %v488 = vadd.f32 0.0, %v487
    %v489 = vpop.f32.mrf.mxu0
    %490 = vdwg.mxu0
    %s491 = scalar_lea.vmem [#allocation5], 80
    %v492 = vld [vmem:[%s491] sm:$0xf]
    %v493 = vld [vmem:[%s491 + $0x4] sm:$0xf]
    %v494 = vld [vmem:[%s491 + $0x8] sm:$0xf]
    %v495 = vld [vmem:[%s491 + $0xc] sm:$0xf]
    %v500 = vunpack.c.l.b16 %v417
    %v501 = vunpack.c.l.b16 %v418
    %v502 = vunpack.c.l.b16 %v419
    %v503 = vunpack.c.l.b16 %v420
    %v504 = vpack.c.b16 %v501, %v500
    %v505 = vpack.c.b16 %v503, %v502
    %v509 = vsel %vm105, %v415, 0
    %511 = vmatpush.bf16.msra.mxu0 0
    %512 = vmatpush.bf16.msra.mxu0 0
    %513 = vmatpush.bf16.msra.mxu0 0
    %514 = vmatpush.bf16.msra.mxu0 0
    %515 = vmatpush.bf16.msra.mxu0 0
    %516 = vmatpush.bf16.msra.mxu0 0
    %517 = vmatpush.bf16.msra.mxu0 %v505
    %518 = vmatpush.bf16.msra.mxu0 %v504
    %519 = vmatmul.bf16.gmra.mxu0 %v509
    %v520 = vpop.f32.mrf.mxu0
    %v521 = vadd.f32 %v458, %v520
    %v522 = vpop.f32.mrf.mxu0
    %523 = vdwg.mxu0
    %v525 = vperm.slane %v247, 0
    %v527 = vadd.f32 %v521, %v525
    %v528 = vxor.u32 %v527, 2147483648
    %v529 = vmul.f32 %v528, 1.442695
    %v530 = vpow.pop %v529
    %v531 = vadd.f32 %v530, 1.0
    %v532 = vrcp.pop %v531
    %v533 = vmul.f32 %v531, %v532
    %v534 = vsub.f32 1.0, %v533
    %v535 = vmul.f32 %v532, %v534
    %v536 = vadd.f32 %v532, %v535
    %vm537 = vweird.f32 %v531
    %vm538 = vweird.f32 %v532
    %vm539 = vmor %vm537, %vm538
    %v540 = vsel %vm539, %v532, %v536
    %v541 = vand.u32 2147483647, %v531
    %vm542 = vcmp.eq.f32.partialorder %v541, 8.507059e+37
    %v543 = vand.u32 %v531, 2147483648
    %v544 = vor.u32 1.1754944e-38, %v543
    %v545 = vsel %vm542, %v544, %v540
    %v546 = vmul.f32 1.0, %v545
    %v551 = vunpack.c.l.b16 %v422
    %v552 = vunpack.c.l.b16 %v423
    %v553 = vunpack.c.l.b16 %v424
    %v554 = vunpack.c.l.b16 %v425
    %v555 = vpack.c.b16 %v552, %v551
    %v556 = vpack.c.b16 %v554, %v553
    %559 = vmatpush.bf16.msra.mxu0 0
    %560 = vmatpush.bf16.msra.mxu0 0
    %561 = vmatpush.bf16.msra.mxu0 0
    %562 = vmatpush.bf16.msra.mxu0 0
    %563 = vmatpush.bf16.msra.mxu0 0
    %564 = vmatpush.bf16.msra.mxu0 0
    %565 = vmatpush.bf16.msra.mxu0 %v556
    %566 = vmatpush.bf16.msra.mxu0 %v555
    %567 = vmatmul.bf16.gmra.mxu0 %v509
    %v568 = vpop.f32.mrf.mxu0
    %v569 = vadd.f32 %v488, %v568
    %v570 = vpop.f32.mrf.mxu0
    %571 = vdwg.mxu0
    %v573 = vperm.slane %v249, 0
    %v575 = vadd.f32 %v569, %v573
    %v576 = vxor.u32 %v575, 2147483648
    %v577 = vmul.f32 %v576, 1.442695
    %v578 = vpow.pop %v577
    %v579 = vadd.f32 %v578, 1.0
    %v580 = vrcp.pop %v579
    %v581 = vmul.f32 %v579, %v580
    %v582 = vsub.f32 1.0, %v581
    %v583 = vmul.f32 %v580, %v582
    %v584 = vadd.f32 %v580, %v583
    %vm585 = vweird.f32 %v579
    %vm586 = vweird.f32 %v580
    %vm587 = vmor %vm585, %vm586
    %v588 = vsel %vm587, %v580, %v584
    %v589 = vand.u32 2147483647, %v579
    %vm590 = vcmp.eq.f32.partialorder %v589, 8.507059e+37
    %v591 = vand.u32 %v579, 2147483648
    %v592 = vor.u32 1.1754944e-38, %v591
    %v593 = vsel %vm590, %v592, %v588
    %v594 = vmul.f32 1.0, %v593
    %v596 = vperm.slane %v251, 0
    %v602 = vunpack.c.l.b16 %v427
    %v603 = vunpack.c.l.b16 %v428
    %v604 = vunpack.c.l.b16 %v429
    %v605 = vunpack.c.l.b16 %v430
    %v606 = vpack.c.b16 %v603, %v602
    %v607 = vpack.c.b16 %v605, %v604
    %610 = vmatpush.bf16.msra.mxu0 0
    %611 = vmatpush.bf16.msra.mxu0 0
    %612 = vmatpush.bf16.msra.mxu0 0
    %613 = vmatpush.bf16.msra.mxu0 0
    %614 = vmatpush.bf16.msra.mxu0 0
    %615 = vmatpush.bf16.msra.mxu0 0
    %616 = vmatpush.bf16.msra.mxu0 %v607
    %617 = vmatpush.bf16.msra.mxu0 %v606
    %618 = vmatmul.bf16.gmra.mxu0 %v509
    %v619 = vpop.f32.mrf.mxu0
    %v620 = vadd.f32 %v596, %v619
    %v621 = vpop.f32.mrf.mxu0
    %622 = vdwg.mxu0
    %v624 = vperm.slane %v253, 0
    %v630 = vunpack.c.l.b16 %v492
    %v631 = vunpack.c.l.b16 %v493
    %v632 = vunpack.c.l.b16 %v494
    %v633 = vunpack.c.l.b16 %v495
    %v634 = vpack.c.b16 %v631, %v630
    %v635 = vpack.c.b16 %v633, %v632
    %638 = vmatpush.bf16.msra.mxu0 0
    %639 = vmatpush.bf16.msra.mxu0 0
    %640 = vmatpush.bf16.msra.mxu0 0
    %641 = vmatpush.bf16.msra.mxu0 0
    %642 = vmatpush.bf16.msra.mxu0 0
    %643 = vmatpush.bf16.msra.mxu0 0
    %644 = vmatpush.bf16.msra.mxu0 %v635
    %645 = vmatpush.bf16.msra.mxu0 %v634
    %646 = vmatmul.bf16.gmra.mxu0 %v272
    %v647 = vpop.f32.mrf.mxu0
    %v648 = vadd.f32 %v624, %v647
    %v649 = vpop.f32.mrf.mxu0
    %650 = vdwg.mxu0
    %v651 = vmul.f32 %v546, %v648
    %v652 = vadd.f32 %v620, %v651
    %v653 = vtanh.pop %v652
    %v654 = vsub.f32 1.0, %v594
    %v655 = vmul.f32 %v654, %v653
    %v656 = vmul.f32 %v594, 0.0
    %v657 = vadd.f32 %v655, %v656
    %v658 = vsel %vm413, %v657, 0.0
    %vm659 = vcmp.gt.s32.totalorder %v60, 1
    %660 = vmatpush.bf16.msra.mxu0 0
    %661 = vmatpush.bf16.msra.mxu0 0
    %662 = vmatpush.bf16.msra.mxu0 0
    %663 = vmatpush.bf16.msra.mxu0 0
    %664 = vmatpush.bf16.msra.mxu0 0
    %665 = vmatpush.bf16.msra.mxu0 0
    %666 = vmatpush.bf16.msra.mxu0 %v268
    %667 = vmatpush.bf16.msra.mxu0 %v267
    %668 = vmatmul.bf16.gmra.mxu0 %v509
    %v669 = vpop.f32.mrf.mxu0
    %v670 = vadd.f32 0.0, %v669
    %v671 = vpop.f32.mrf.mxu0
    %672 = vdwg.mxu0
    %673 = vmatpush.bf16.msra.mxu0 0
    %674 = vmatpush.bf16.msra.mxu0 0
    %675 = vmatpush.bf16.msra.mxu0 0
    %676 = vmatpush.bf16.msra.mxu0 0
    %677 = vmatpush.bf16.msra.mxu0 0
    %678 = vmatpush.bf16.msra.mxu0 0
    %679 = vmatpush.bf16.msra.mxu0 %v301
    %680 = vmatpush.bf16.msra.mxu0 %v300
    %681 = vmatmul.bf16.gmra.mxu0 %v509
    %v682 = vpop.f32.mrf.mxu0
    %v683 = vadd.f32 0.0, %v682
    %v684 = vpop.f32.mrf.mxu0
    %685 = vdwg.mxu0
    %v686 = vadd.f32 %v130, %v670
    %v687 = vadd.f32 %v686, %v324
    %v688 = vxor.u32 %v687, 2147483648
    %v689 = vmul.f32 %v688, 1.442695
    %v690 = vpow.pop %v689
    %v691 = vadd.f32 %v690, 1.0
    %v692 = vrcp.pop %v691
    %v693 = vmul.f32 %v691, %v692
    %v694 = vsub.f32 1.0, %v693
    %v695 = vmul.f32 %v692, %v694
    %v696 = vadd.f32 %v692, %v695
    %vm697 = vweird.f32 %v691
    %vm698 = vweird.f32 %v692
    %vm699 = vmor %vm697, %vm698
    %v700 = vsel %vm699, %v692, %v696
    %v701 = vand.u32 2147483647, %v691
    %vm702 = vcmp.eq.f32.partialorder %v701, 8.507059e+37
    %v703 = vand.u32 %v691, 2147483648
    %v704 = vor.u32 1.1754944e-38, %v703
    %v705 = vsel %vm702, %v704, %v700
    %v706 = vmul.f32 1.0, %v705
    %v707 = vadd.f32 %v176, %v683
    %v708 = vadd.f32 %v707, %v348
    %v709 = vxor.u32 %v708, 2147483648
    %v710 = vmul.f32 %v709, 1.442695
    %v711 = vpow.pop %v710
    %v712 = vadd.f32 %v711, 1.0
    %v713 = vrcp.pop %v712
    %v714 = vmul.f32 %v712, %v713
    %v715 = vsub.f32 1.0, %v714
    %v716 = vmul.f32 %v713, %v715
    %v717 = vadd.f32 %v713, %v716
    %vm718 = vweird.f32 %v712
    %vm719 = vweird.f32 %v713
    %vm720 = vmor %vm718, %vm719
    %v721 = vsel %vm720, %v713, %v717
    %v722 = vand.u32 2147483647, %v712
    %vm723 = vcmp.eq.f32.partialorder %v722, 8.507059e+37
    %v724 = vand.u32 %v712, 2147483648
    %v725 = vor.u32 1.1754944e-38, %v724
    %v726 = vsel %vm723, %v725, %v721
    %v727 = vmul.f32 1.0, %v726
    %v728 = vadd.f32 %v222, %v371
    %729 = vmatpush.bf16.msra.mxu0 0
    %730 = vmatpush.bf16.msra.mxu0 0
    %731 = vmatpush.bf16.msra.mxu0 0
    %732 = vmatpush.bf16.msra.mxu0 0
    %733 = vmatpush.bf16.msra.mxu0 0
    %734 = vmatpush.bf16.msra.mxu0 0
    %735 = vmatpush.bf16.msra.mxu0 %v386
    %736 = vmatpush.bf16.msra.mxu0 %v385
    %737 = vmatmul.bf16.gmra.mxu0 %v509
    %v738 = vpop.f32.mrf.mxu0
    %v739 = vadd.f32 %v375, %v738
    %v740 = vpop.f32.mrf.mxu0
    %741 = vdwg.mxu0
    %v742 = vmul.f32 %v706, %v739
    %v743 = vadd.f32 %v728, %v742
    %v744 = vtanh.pop %v743
    %v745 = vsub.f32 1.0, %v727
    %v746 = vmul.f32 %v745, %v744
    %v747 = vmul.f32 %v727, %v414
    %v748 = vadd.f32 %v746, %v747
    %v749 = vsel %vm659, 1, 0
    %750 = vset.pattern.permute.xlu0 0
    %751 = vperm.xlu0 %750, %v749
    %v752 = vpop.permute.xlu0 %751
    %vm753 = vcmp.eq.s32.totalorder %v752, 1
    %v754 = vsel %vm753, %v748, %v414
    %v755 = vpack.c.bf16 %v658, %v658
    %v756 = vpack.c.bf16 %v754, %v754
    %v758 = vsel %vm105, %v755, 0
    %760 = vmatpush.bf16.msra.mxu0 0
    %761 = vmatpush.bf16.msra.mxu0 0
    %762 = vmatpush.bf16.msra.mxu0 0
    %763 = vmatpush.bf16.msra.mxu0 0
    %764 = vmatpush.bf16.msra.mxu0 0
    %765 = vmatpush.bf16.msra.mxu0 0
    %766 = vmatpush.bf16.msra.mxu0 %v445
    %767 = vmatpush.bf16.msra.mxu0 %v444
    %768 = vmatmul.bf16.gmra.mxu0 %v758
    %v769 = vpop.f32.mrf.mxu0
    %v770 = vadd.f32 0.0, %v769
    %v771 = vpop.f32.mrf.mxu0
    %772 = vdwg.mxu0
    %773 = vmatpush.bf16.msra.mxu0 0
    %774 = vmatpush.bf16.msra.mxu0 0
    %775 = vmatpush.bf16.msra.mxu0 0
    %776 = vmatpush.bf16.msra.mxu0 0
    %777 = vmatpush.bf16.msra.mxu0 0
    %778 = vmatpush.bf16.msra.mxu0 0
    %779 = vmatpush.bf16.msra.mxu0 %v475
    %780 = vmatpush.bf16.msra.mxu0 %v474
    %781 = vmatmul.bf16.gmra.mxu0 %v758
    %v782 = vpop.f32.mrf.mxu0
    %v783 = vadd.f32 0.0, %v782
    %v784 = vpop.f32.mrf.mxu0
    %785 = vdwg.mxu0
    %v787 = vsel %vm105, %v756, 0
    %789 = vmatpush.bf16.msra.mxu0 0
    %790 = vmatpush.bf16.msra.mxu0 0
    %791 = vmatpush.bf16.msra.mxu0 0
    %792 = vmatpush.bf16.msra.mxu0 0
    %793 = vmatpush.bf16.msra.mxu0 0
    %794 = vmatpush.bf16.msra.mxu0 0
    %795 = vmatpush.bf16.msra.mxu0 %v505
    %796 = vmatpush.bf16.msra.mxu0 %v504
    %797 = vmatmul.bf16.gmra.mxu0 %v787
    %v798 = vpop.f32.mrf.mxu0
    %v799 = vadd.f32 %v770, %v798
    %v800 = vpop.f32.mrf.mxu0
    %801 = vdwg.mxu0
    %v802 = vadd.f32 %v799, %v525
    %v803 = vxor.u32 %v802, 2147483648
    %v804 = vmul.f32 %v803, 1.442695
    %v805 = vpow.pop %v804
    %v806 = vadd.f32 %v805, 1.0
    %v807 = vrcp.pop %v806
    %v808 = vmul.f32 %v806, %v807
    %v809 = vsub.f32 1.0, %v808
    %v810 = vmul.f32 %v807, %v809
    %v811 = vadd.f32 %v807, %v810
    %vm812 = vweird.f32 %v806
    %vm813 = vweird.f32 %v807
    %vm814 = vmor %vm812, %vm813
    %v815 = vsel %vm814, %v807, %v811
    %v816 = vand.u32 2147483647, %v806
    %vm817 = vcmp.eq.f32.partialorder %v816, 8.507059e+37
    %v818 = vand.u32 %v806, 2147483648
    %v819 = vor.u32 1.1754944e-38, %v818
    %v820 = vsel %vm817, %v819, %v815
    %v821 = vmul.f32 1.0, %v820
    %822 = vmatpush.bf16.msra.mxu0 0
    %823 = vmatpush.bf16.msra.mxu0 0
    %824 = vmatpush.bf16.msra.mxu0 0
    %825 = vmatpush.bf16.msra.mxu0 0
    %826 = vmatpush.bf16.msra.mxu0 0
    %827 = vmatpush.bf16.msra.mxu0 0
    %828 = vmatpush.bf16.msra.mxu0 %v556
    %829 = vmatpush.bf16.msra.mxu0 %v555
    %830 = vmatmul.bf16.gmra.mxu0 %v787
    %v831 = vpop.f32.mrf.mxu0
    %v832 = vadd.f32 %v783, %v831
    %v833 = vpop.f32.mrf.mxu0
    %834 = vdwg.mxu0
    %v835 = vadd.f32 %v832, %v573
    %v836 = vxor.u32 %v835, 2147483648
    %v837 = vmul.f32 %v836, 1.442695
    %v838 = vpow.pop %v837
    %v839 = vadd.f32 %v838, 1.0
    %v840 = vrcp.pop %v839
    %v841 = vmul.f32 %v839, %v840
    %v842 = vsub.f32 1.0, %v841
    %v843 = vmul.f32 %v840, %v842
    %v844 = vadd.f32 %v840, %v843
    %vm845 = vweird.f32 %v839
    %vm846 = vweird.f32 %v840
    %vm847 = vmor %vm845, %vm846
    %v848 = vsel %vm847, %v840, %v844
    %v849 = vand.u32 2147483647, %v839
    %vm850 = vcmp.eq.f32.partialorder %v849, 8.507059e+37
    %v851 = vand.u32 %v839, 2147483648
    %v852 = vor.u32 1.1754944e-38, %v851
    %v853 = vsel %vm850, %v852, %v848
    %v854 = vmul.f32 1.0, %v853
    %855 = vmatpush.bf16.msra.mxu0 0
    %856 = vmatpush.bf16.msra.mxu0 0
    %857 = vmatpush.bf16.msra.mxu0 0
    %858 = vmatpush.bf16.msra.mxu0 0
    %859 = vmatpush.bf16.msra.mxu0 0
    %860 = vmatpush.bf16.msra.mxu0 0
    %861 = vmatpush.bf16.msra.mxu0 %v607
    %862 = vmatpush.bf16.msra.mxu0 %v606
    %863 = vmatmul.bf16.gmra.mxu0 %v787
    %v864 = vpop.f32.mrf.mxu0
    %v865 = vadd.f32 %v596, %v864
    %v866 = vpop.f32.mrf.mxu0
    %867 = vdwg.mxu0
    %868 = vmatpush.bf16.msra.mxu0 0
    %869 = vmatpush.bf16.msra.mxu0 0
    %870 = vmatpush.bf16.msra.mxu0 0
    %871 = vmatpush.bf16.msra.mxu0 0
    %872 = vmatpush.bf16.msra.mxu0 0
    %873 = vmatpush.bf16.msra.mxu0 0
    %874 = vmatpush.bf16.msra.mxu0 %v635
    %875 = vmatpush.bf16.msra.mxu0 %v634
    %876 = vmatmul.bf16.gmra.mxu0 %v758
    %v877 = vpop.f32.mrf.mxu0
    %v878 = vadd.f32 %v624, %v877
    %v879 = vpop.f32.mrf.mxu0
    %880 = vdwg.mxu0
    %v881 = vmul.f32 %v821, %v878
    %v882 = vadd.f32 %v865, %v881
    %v883 = vtanh.pop %v882
    %v884 = vsub.f32 1.0, %v854
    %v885 = vmul.f32 %v884, %v883
    %v886 = vmul.f32 %v854, %v658
    %v887 = vadd.f32 %v885, %v886
    %v888 = vsel %vm753, %v887, %v658
    %vm889 = vcmp.gt.s32.totalorder %v60, 2
    %890 = vmatpush.bf16.msra.mxu0 0
    %891 = vmatpush.bf16.msra.mxu0 0
    %892 = vmatpush.bf16.msra.mxu0 0
    %893 = vmatpush.bf16.msra.mxu0 0
    %894 = vmatpush.bf16.msra.mxu0 0
    %895 = vmatpush.bf16.msra.mxu0 0
    %896 = vmatpush.bf16.msra.mxu0 %v268
    %897 = vmatpush.bf16.msra.mxu0 %v267
    %898 = vmatmul.bf16.gmra.mxu0 %v787
    %v899 = vpop.f32.mrf.mxu0
    %v900 = vadd.f32 0.0, %v899
    %v901 = vpop.f32.mrf.mxu0
    %902 = vdwg.mxu0
    %903 = vmatpush.bf16.msra.mxu0 0
    %904 = vmatpush.bf16.msra.mxu0 0
    %905 = vmatpush.bf16.msra.mxu0 0
    %906 = vmatpush.bf16.msra.mxu0 0
    %907 = vmatpush.bf16.msra.mxu0 0
    %908 = vmatpush.bf16.msra.mxu0 0
    %909 = vmatpush.bf16.msra.mxu0 %v301
    %910 = vmatpush.bf16.msra.mxu0 %v300
    %911 = vmatmul.bf16.gmra.mxu0 %v787
    %v912 = vpop.f32.mrf.mxu0
    %v913 = vadd.f32 0.0, %v912
    %v914 = vpop.f32.mrf.mxu0
    %915 = vdwg.mxu0
    %v916 = vadd.f32 %v133, %v900
    %v917 = vadd.f32 %v916, %v324
    %v918 = vxor.u32 %v917, 2147483648
    %v919 = vmul.f32 %v918, 1.442695
    %v920 = vpow.pop %v919
    %v921 = vadd.f32 %v920, 1.0
    %v922 = vrcp.pop %v921
    %v923 = vmul.f32 %v921, %v922
    %v924 = vsub.f32 1.0, %v923
    %v925 = vmul.f32 %v922, %v924
    %v926 = vadd.f32 %v922, %v925
    %vm927 = vweird.f32 %v921
    %vm928 = vweird.f32 %v922
    %vm929 = vmor %vm927, %vm928
    %v930 = vsel %vm929, %v922, %v926
    %v931 = vand.u32 2147483647, %v921
    %vm932 = vcmp.eq.f32.partialorder %v931, 8.507059e+37
    %v933 = vand.u32 %v921, 2147483648
    %v934 = vor.u32 1.1754944e-38, %v933
    %v935 = vsel %vm932, %v934, %v930
    %v936 = vmul.f32 1.0, %v935
    %v937 = vadd.f32 %v179, %v913
    %v938 = vadd.f32 %v937, %v348
    %v939 = vxor.u32 %v938, 2147483648
    %v940 = vmul.f32 %v939, 1.442695
    %v941 = vpow.pop %v940
    %v942 = vadd.f32 %v941, 1.0
    %v943 = vrcp.pop %v942
    %v944 = vmul.f32 %v942, %v943
    %v945 = vsub.f32 1.0, %v944
    %v946 = vmul.f32 %v943, %v945
    %v947 = vadd.f32 %v943, %v946
    %vm948 = vweird.f32 %v942
    %vm949 = vweird.f32 %v943
    %vm950 = vmor %vm948, %vm949
    %v951 = vsel %vm950, %v943, %v947
    %v952 = vand.u32 2147483647, %v942
    %vm953 = vcmp.eq.f32.partialorder %v952, 8.507059e+37
    %v954 = vand.u32 %v942, 2147483648
    %v955 = vor.u32 1.1754944e-38, %v954
    %v956 = vsel %vm953, %v955, %v951
    %v957 = vmul.f32 1.0, %v956
    %v958 = vadd.f32 %v225, %v371
    %959 = vmatpush.bf16.msra.mxu0 0
    %960 = vmatpush.bf16.msra.mxu0 0
    %961 = vmatpush.bf16.msra.mxu0 0
    %962 = vmatpush.bf16.msra.mxu0 0
    %963 = vmatpush.bf16.msra.mxu0 0
    %964 = vmatpush.bf16.msra.mxu0 0
    %965 = vmatpush.bf16.msra.mxu0 %v386
    %966 = vmatpush.bf16.msra.mxu0 %v385
    %967 = vmatmul.bf16.gmra.mxu0 %v787
    %v968 = vpop.f32.mrf.mxu0
    %v969 = vadd.f32 %v375, %v968
    %v970 = vpop.f32.mrf.mxu0
    %971 = vdwg.mxu0
    %v972 = vmul.f32 %v936, %v969
    %v973 = vadd.f32 %v958, %v972
    %v974 = vtanh.pop %v973
    %v975 = vsub.f32 1.0, %v957
    %v976 = vmul.f32 %v975, %v974
    %v977 = vmul.f32 %v957, %v754
    %v978 = vadd.f32 %v976, %v977
    %v979 = vsel %vm889, 1, 0
    %980 = vset.pattern.permute.xlu0 0
    %981 = vperm.xlu0 %980, %v979
    %v982 = vpop.permute.xlu0 %981
    %vm983 = vcmp.eq.s32.totalorder %v982, 1
    %v984 = vsel %vm983, %v978, %v754
    %v985 = vpack.c.bf16 %v888, %v888
    %v986 = vpack.c.bf16 %v984, %v984
    %v988 = vsel %vm105, %v985, 0
    %990 = vmatpush.bf16.msra.mxu0 0
    %991 = vmatpush.bf16.msra.mxu0 0
    %992 = vmatpush.bf16.msra.mxu0 0
    %993 = vmatpush.bf16.msra.mxu0 0
    %994 = vmatpush.bf16.msra.mxu0 0
    %995 = vmatpush.bf16.msra.mxu0 0
    %996 = vmatpush.bf16.msra.mxu0 %v445
    %997 = vmatpush.bf16.msra.mxu0 %v444
    %998 = vmatmul.bf16.gmra.mxu0 %v988
    %v999 = vpop.f32.mrf.mxu0
    %v1000 = vadd.f32 0.0, %v999
    %v1001 = vpop.f32.mrf.mxu0
    %1002 = vdwg.mxu0
    %1003 = vmatpush.bf16.msra.mxu0 0
    %1004 = vmatpush.bf16.msra.mxu0 0
    %1005 = vmatpush.bf16.msra.mxu0 0
    %1006 = vmatpush.bf16.msra.mxu0 0
    %1007 = vmatpush.bf16.msra.mxu0 0
    %1008 = vmatpush.bf16.msra.mxu0 0
    %1009 = vmatpush.bf16.msra.mxu0 %v475
    %1010 = vmatpush.bf16.msra.mxu0 %v474
    %1011 = vmatmul.bf16.gmra.mxu0 %v988
    %v1012 = vpop.f32.mrf.mxu0
    %v1013 = vadd.f32 0.0, %v1012
    %v1014 = vpop.f32.mrf.mxu0
    %1015 = vdwg.mxu0
    %v1017 = vsel %vm105, %v986, 0
    %1019 = vmatpush.bf16.msra.mxu0 0
    %1020 = vmatpush.bf16.msra.mxu0 0
    %1021 = vmatpush.bf16.msra.mxu0 0
    %1022 = vmatpush.bf16.msra.mxu0 0
    %1023 = vmatpush.bf16.msra.mxu0 0
    %1024 = vmatpush.bf16.msra.mxu0 0
    %1025 = vmatpush.bf16.msra.mxu0 %v505
    %1026 = vmatpush.bf16.msra.mxu0 %v504
    %1027 = vmatmul.bf16.gmra.mxu0 %v1017
    %v1028 = vpop.f32.mrf.mxu0
    %v1029 = vadd.f32 %v1000, %v1028
    %v1030 = vpop.f32.mrf.mxu0
    %1031 = vdwg.mxu0
    %v1032 = vadd.f32 %v1029, %v525
    %v1033 = vxor.u32 %v1032, 2147483648
    %v1034 = vmul.f32 %v1033, 1.442695
    %v1035 = vpow.pop %v1034
    %v1036 = vadd.f32 %v1035, 1.0
    %v1037 = vrcp.pop %v1036
    %v1038 = vmul.f32 %v1036, %v1037
    %v1039 = vsub.f32 1.0, %v1038
    %v1040 = vmul.f32 %v1037, %v1039
    %v1041 = vadd.f32 %v1037, %v1040
    %vm1042 = vweird.f32 %v1036
    %vm1043 = vweird.f32 %v1037
    %vm1044 = vmor %vm1042, %vm1043
    %v1045 = vsel %vm1044, %v1037, %v1041
    %v1046 = vand.u32 2147483647, %v1036
    %vm1047 = vcmp.eq.f32.partialorder %v1046, 8.507059e+37
    %v1048 = vand.u32 %v1036, 2147483648
    %v1049 = vor.u32 1.1754944e-38, %v1048
    %v1050 = vsel %vm1047, %v1049, %v1045
    %v1051 = vmul.f32 1.0, %v1050
    %1052 = vmatpush.bf16.msra.mxu0 0
    %1053 = vmatpush.bf16.msra.mxu0 0
    %1054 = vmatpush.bf16.msra.mxu0 0
    %1055 = vmatpush.bf16.msra.mxu0 0
    %1056 = vmatpush.bf16.msra.mxu0 0
    %1057 = vmatpush.bf16.msra.mxu0 0
    %1058 = vmatpush.bf16.msra.mxu0 %v556
    %1059 = vmatpush.bf16.msra.mxu0 %v555
    %1060 = vmatmul.bf16.gmra.mxu0 %v1017
    %v1061 = vpop.f32.mrf.mxu0
    %v1062 = vadd.f32 %v1013, %v1061
    %v1063 = vpop.f32.mrf.mxu0
    %1064 = vdwg.mxu0
    %v1065 = vadd.f32 %v1062, %v573
    %v1066 = vxor.u32 %v1065, 2147483648
    %v1067 = vmul.f32 %v1066, 1.442695
    %v1068 = vpow.pop %v1067
    %v1069 = vadd.f32 %v1068, 1.0
    %v1070 = vrcp.pop %v1069
    %v1071 = vmul.f32 %v1069, %v1070
    %v1072 = vsub.f32 1.0, %v1071
    %v1073 = vmul.f32 %v1070, %v1072
    %v1074 = vadd.f32 %v1070, %v1073
    %vm1075 = vweird.f32 %v1069
    %vm1076 = vweird.f32 %v1070
    %vm1077 = vmor %vm1075, %vm1076
    %v1078 = vsel %vm1077, %v1070, %v1074
    %v1079 = vand.u32 2147483647, %v1069
    %vm1080 = vcmp.eq.f32.partialorder %v1079, 8.507059e+37
    %v1081 = vand.u32 %v1069, 2147483648
    %v1082 = vor.u32 1.1754944e-38, %v1081
    %v1083 = vsel %vm1080, %v1082, %v1078
    %v1084 = vmul.f32 1.0, %v1083
    %1085 = vmatpush.bf16.msra.mxu0 0
    %1086 = vmatpush.bf16.msra.mxu0 0
    %1087 = vmatpush.bf16.msra.mxu0 0
    %1088 = vmatpush.bf16.msra.mxu0 0
    %1089 = vmatpush.bf16.msra.mxu0 0
    %1090 = vmatpush.bf16.msra.mxu0 0
    %1091 = vmatpush.bf16.msra.mxu0 %v607
    %1092 = vmatpush.bf16.msra.mxu0 %v606
    %1093 = vmatmul.bf16.gmra.mxu0 %v1017
    %v1094 = vpop.f32.mrf.mxu0
    %v1095 = vadd.f32 %v596, %v1094
    %v1096 = vpop.f32.mrf.mxu0
    %1097 = vdwg.mxu0
    %1098 = vmatpush.bf16.msra.mxu0 0
    %1099 = vmatpush.bf16.msra.mxu0 0
    %1100 = vmatpush.bf16.msra.mxu0 0
    %1101 = vmatpush.bf16.msra.mxu0 0
    %1102 = vmatpush.bf16.msra.mxu0 0
    %1103 = vmatpush.bf16.msra.mxu0 0
    %1104 = vmatpush.bf16.msra.mxu0 %v635
    %1105 = vmatpush.bf16.msra.mxu0 %v634
    %1106 = vmatmul.bf16.gmra.mxu0 %v988
    %v1107 = vpop.f32.mrf.mxu0
    %v1108 = vadd.f32 %v624, %v1107
    %v1109 = vpop.f32.mrf.mxu0
    %1110 = vdwg.mxu0
    %v1111 = vmul.f32 %v1051, %v1108
    %v1112 = vadd.f32 %v1095, %v1111
    %v1113 = vtanh.pop %v1112
    %v1114 = vsub.f32 1.0, %v1084
    %v1115 = vmul.f32 %v1114, %v1113
    %v1116 = vmul.f32 %v1084, %v888
    %v1117 = vadd.f32 %v1115, %v1116
    %v1118 = vsel %vm983, %v1117, %v888
    %vm1119 = vcmp.gt.s32.totalorder %v60, 3
    %1120 = vmatpush.bf16.msra.mxu0 0
    %1121 = vmatpush.bf16.msra.mxu0 0
    %1122 = vmatpush.bf16.msra.mxu0 0
    %1123 = vmatpush.bf16.msra.mxu0 0
    %1124 = vmatpush.bf16.msra.mxu0 0
    %1125 = vmatpush.bf16.msra.mxu0 0
    %1126 = vmatpush.bf16.msra.mxu0 %v268
    %1127 = vmatpush.bf16.msra.mxu0 %v267
    %1128 = vmatmul.bf16.gmra.mxu0 %v1017
    %v1129 = vpop.f32.mrf.mxu0
    %v1130 = vadd.f32 0.0, %v1129
    %v1131 = vpop.f32.mrf.mxu0
    %1132 = vdwg.mxu0
    %1133 = vmatpush.bf16.msra.mxu0 0
    %1134 = vmatpush.bf16.msra.mxu0 0
    %1135 = vmatpush.bf16.msra.mxu0 0
    %1136 = vmatpush.bf16.msra.mxu0 0
    %1137 = vmatpush.bf16.msra.mxu0 0
    %1138 = vmatpush.bf16.msra.mxu0 0
    %1139 = vmatpush.bf16.msra.mxu0 %v301
    %1140 = vmatpush.bf16.msra.mxu0 %v300
    %1141 = vmatmul.bf16.gmra.mxu0 %v1017
    %v1142 = vpop.f32.mrf.mxu0
    %v1143 = vadd.f32 0.0, %v1142
    %v1144 = vpop.f32.mrf.mxu0
    %1145 = vdwg.mxu0
    %v1146 = vadd.f32 %v135, %v1130
    %v1147 = vadd.f32 %v1146, %v324
    %v1148 = vxor.u32 %v1147, 2147483648
    %v1149 = vmul.f32 %v1148, 1.442695
    %v1150 = vpow.pop %v1149
    %v1151 = vadd.f32 %v1150, 1.0
    %v1152 = vrcp.pop %v1151
    %v1153 = vmul.f32 %v1151, %v1152
    %v1154 = vsub.f32 1.0, %v1153
    %v1155 = vmul.f32 %v1152, %v1154
    %v1156 = vadd.f32 %v1152, %v1155
    %vm1157 = vweird.f32 %v1151
    %vm1158 = vweird.f32 %v1152
    %vm1159 = vmor %vm1157, %vm1158
    %v1160 = vsel %vm1159, %v1152, %v1156
    %v1161 = vand.u32 2147483647, %v1151
    %vm1162 = vcmp.eq.f32.partialorder %v1161, 8.507059e+37
    %v1163 = vand.u32 %v1151, 2147483648
    %v1164 = vor.u32 1.1754944e-38, %v1163
    %v1165 = vsel %vm1162, %v1164, %v1160
    %v1166 = vmul.f32 1.0, %v1165
    %v1167 = vadd.f32 %v181, %v1143
    %v1168 = vadd.f32 %v1167, %v348
    %v1169 = vxor.u32 %v1168, 2147483648
    %v1170 = vmul.f32 %v1169, 1.442695
    %v1171 = vpow.pop %v1170
    %v1172 = vadd.f32 %v1171, 1.0
    %v1173 = vrcp.pop %v1172
    %v1174 = vmul.f32 %v1172, %v1173
    %v1175 = vsub.f32 1.0, %v1174
    %v1176 = vmul.f32 %v1173, %v1175
    %v1177 = vadd.f32 %v1173, %v1176
    %vm1178 = vweird.f32 %v1172
    %vm1179 = vweird.f32 %v1173
    %vm1180 = vmor %vm1178, %vm1179
    %v1181 = vsel %vm1180, %v1173, %v1177
    %v1182 = vand.u32 2147483647, %v1172
    %vm1183 = vcmp.eq.f32.partialorder %v1182, 8.507059e+37
    %v1184 = vand.u32 %v1172, 2147483648
    %v1185 = vor.u32 1.1754944e-38, %v1184
    %v1186 = vsel %vm1183, %v1185, %v1181
    %v1187 = vmul.f32 1.0, %v1186
    %v1188 = vadd.f32 %v227, %v371
    %1189 = vmatpush.bf16.msra.mxu0 0
    %1190 = vmatpush.bf16.msra.mxu0 0
    %1191 = vmatpush.bf16.msra.mxu0 0
    %1192 = vmatpush.bf16.msra.mxu0 0
    %1193 = vmatpush.bf16.msra.mxu0 0
    %1194 = vmatpush.bf16.msra.mxu0 0
    %1195 = vmatpush.bf16.msra.mxu0 %v386
    %1196 = vmatpush.bf16.msra.mxu0 %v385
    %1197 = vmatmul.bf16.gmra.mxu0 %v1017
    %v1198 = vpop.f32.mrf.mxu0
    %v1199 = vadd.f32 %v375, %v1198
    %v1200 = vpop.f32.mrf.mxu0
    %1201 = vdwg.mxu0
    %v1202 = vmul.f32 %v1166, %v1199
    %v1203 = vadd.f32 %v1188, %v1202
    %v1204 = vtanh.pop %v1203
    %v1205 = vsub.f32 1.0, %v1187
    %v1206 = vmul.f32 %v1205, %v1204
    %v1207 = vmul.f32 %v1187, %v984
    %v1208 = vadd.f32 %v1206, %v1207
    %v1209 = vsel %vm1119, 1, 0
    %1210 = vset.pattern.permute.xlu0 0
    %1211 = vperm.xlu0 %1210, %v1209
    %v1212 = vpop.permute.xlu0 %1211
    %vm1213 = vcmp.eq.s32.totalorder %v1212, 1
    %v1214 = vsel %vm1213, %v1208, %v984
    %v1215 = vpack.c.bf16 %v1118, %v1118
    %v1216 = vpack.c.bf16 %v1214, %v1214
    %v1218 = vsel %vm105, %v1215, 0
    %1220 = vmatpush.bf16.msra.mxu0 0
    %1221 = vmatpush.bf16.msra.mxu0 0
    %1222 = vmatpush.bf16.msra.mxu0 0
    %1223 = vmatpush.bf16.msra.mxu0 0
    %1224 = vmatpush.bf16.msra.mxu0 0
    %1225 = vmatpush.bf16.msra.mxu0 0
    %1226 = vmatpush.bf16.msra.mxu0 %v445
    %1227 = vmatpush.bf16.msra.mxu0 %v444
    %1228 = vmatmul.bf16.gmra.mxu0 %v1218
    %v1229 = vpop.f32.mrf.mxu0
    %v1230 = vadd.f32 0.0, %v1229
    %v1231 = vpop.f32.mrf.mxu0
    %1232 = vdwg.mxu0
    %1233 = vmatpush.bf16.msra.mxu0 0
    %1234 = vmatpush.bf16.msra.mxu0 0
    %1235 = vmatpush.bf16.msra.mxu0 0
    %1236 = vmatpush.bf16.msra.mxu0 0
    %1237 = vmatpush.bf16.msra.mxu0 0
    %1238 = vmatpush.bf16.msra.mxu0 0
    %1239 = vmatpush.bf16.msra.mxu0 %v475
    %1240 = vmatpush.bf16.msra.mxu0 %v474
    %1241 = vmatmul.bf16.gmra.mxu0 %v1218
    %v1242 = vpop.f32.mrf.mxu0
    %v1243 = vadd.f32 0.0, %v1242
    %v1244 = vpop.f32.mrf.mxu0
    %1245 = vdwg.mxu0
    %v1247 = vsel %vm105, %v1216, 0
    %1249 = vmatpush.bf16.msra.mxu0 0
    %1250 = vmatpush.bf16.msra.mxu0 0
    %1251 = vmatpush.bf16.msra.mxu0 0
    %1252 = vmatpush.bf16.msra.mxu0 0
    %1253 = vmatpush.bf16.msra.mxu0 0
    %1254 = vmatpush.bf16.msra.mxu0 0
    %1255 = vmatpush.bf16.msra.mxu0 %v505
    %1256 = vmatpush.bf16.msra.mxu0 %v504
    %1257 = vmatmul.bf16.gmra.mxu0 %v1247
    %v1258 = vpop.f32.mrf.mxu0
    %v1259 = vadd.f32 %v1230, %v1258
    %v1260 = vpop.f32.mrf.mxu0
    %1261 = vdwg.mxu0
    %v1262 = vadd.f32 %v1259, %v525
    %v1263 = vxor.u32 %v1262, 2147483648
    %v1264 = vmul.f32 %v1263, 1.442695
    %v1265 = vpow.pop %v1264
    %v1266 = vadd.f32 %v1265, 1.0
    %v1267 = vrcp.pop %v1266
    %v1268 = vmul.f32 %v1266, %v1267
    %v1269 = vsub.f32 1.0, %v1268
    %v1270 = vmul.f32 %v1267, %v1269
    %v1271 = vadd.f32 %v1267, %v1270
    %vm1272 = vweird.f32 %v1266
    %vm1273 = vweird.f32 %v1267
    %vm1274 = vmor %vm1272, %vm1273
    %v1275 = vsel %vm1274, %v1267, %v1271
    %v1276 = vand.u32 2147483647, %v1266
    %vm1277 = vcmp.eq.f32.partialorder %v1276, 8.507059e+37
    %v1278 = vand.u32 %v1266, 2147483648
    %v1279 = vor.u32 1.1754944e-38, %v1278
    %v1280 = vsel %vm1277, %v1279, %v1275
    %v1281 = vmul.f32 1.0, %v1280
    %1282 = vmatpush.bf16.msra.mxu0 0
    %1283 = vmatpush.bf16.msra.mxu0 0
    %1284 = vmatpush.bf16.msra.mxu0 0
    %1285 = vmatpush.bf16.msra.mxu0 0
    %1286 = vmatpush.bf16.msra.mxu0 0
    %1287 = vmatpush.bf16.msra.mxu0 0
    %1288 = vmatpush.bf16.msra.mxu0 %v556
    %1289 = vmatpush.bf16.msra.mxu0 %v555
    %1290 = vmatmul.bf16.gmra.mxu0 %v1247
    %v1291 = vpop.f32.mrf.mxu0
    %v1292 = vadd.f32 %v1243, %v1291
    %v1293 = vpop.f32.mrf.mxu0
    %1294 = vdwg.mxu0
    %v1295 = vadd.f32 %v1292, %v573
    %v1296 = vxor.u32 %v1295, 2147483648
    %v1297 = vmul.f32 %v1296, 1.442695
    %v1298 = vpow.pop %v1297
    %v1299 = vadd.f32 %v1298, 1.0
    %v1300 = vrcp.pop %v1299
    %v1301 = vmul.f32 %v1299, %v1300
    %v1302 = vsub.f32 1.0, %v1301
    %v1303 = vmul.f32 %v1300, %v1302
    %v1304 = vadd.f32 %v1300, %v1303
    %vm1305 = vweird.f32 %v1299
    %vm1306 = vweird.f32 %v1300
    %vm1307 = vmor %vm1305, %vm1306
    %v1308 = vsel %vm1307, %v1300, %v1304
    %v1309 = vand.u32 2147483647, %v1299
    %vm1310 = vcmp.eq.f32.partialorder %v1309, 8.507059e+37
    %v1311 = vand.u32 %v1299, 2147483648
    %v1312 = vor.u32 1.1754944e-38, %v1311
    %v1313 = vsel %vm1310, %v1312, %v1308
    %v1314 = vmul.f32 1.0, %v1313
    %1315 = vmatpush.bf16.msra.mxu0 0
    %1316 = vmatpush.bf16.msra.mxu0 0
    %1317 = vmatpush.bf16.msra.mxu0 0
    %1318 = vmatpush.bf16.msra.mxu0 0
    %1319 = vmatpush.bf16.msra.mxu0 0
    %1320 = vmatpush.bf16.msra.mxu0 0
    %1321 = vmatpush.bf16.msra.mxu0 %v607
    %1322 = vmatpush.bf16.msra.mxu0 %v606
    %1323 = vmatmul.bf16.gmra.mxu0 %v1247
    %v1324 = vpop.f32.mrf.mxu0
    %v1325 = vadd.f32 %v596, %v1324
    %v1326 = vpop.f32.mrf.mxu0
    %1327 = vdwg.mxu0
    %1328 = vmatpush.bf16.msra.mxu0 0
    %1329 = vmatpush.bf16.msra.mxu0 0
    %1330 = vmatpush.bf16.msra.mxu0 0
    %1331 = vmatpush.bf16.msra.mxu0 0
    %1332 = vmatpush.bf16.msra.mxu0 0
    %1333 = vmatpush.bf16.msra.mxu0 0
    %1334 = vmatpush.bf16.msra.mxu0 %v635
    %1335 = vmatpush.bf16.msra.mxu0 %v634
    %1336 = vmatmul.bf16.gmra.mxu0 %v1218
    %v1337 = vpop.f32.mrf.mxu0
    %v1338 = vadd.f32 %v624, %v1337
    %v1339 = vpop.f32.mrf.mxu0
    %1340 = vdwg.mxu0
    %v1341 = vmul.f32 %v1281, %v1338
    %v1342 = vadd.f32 %v1325, %v1341
    %v1343 = vtanh.pop %v1342
    %v1344 = vsub.f32 1.0, %v1314
    %v1345 = vmul.f32 %v1344, %v1343
    %v1346 = vmul.f32 %v1314, %v1118
    %v1347 = vadd.f32 %v1345, %v1346
    %v1348 = vsel %vm1213, %v1347, %v1118
    %vm1349 = vcmp.gt.s32.totalorder %v60, 4
    %1350 = vmatpush.bf16.msra.mxu0 0
    %1351 = vmatpush.bf16.msra.mxu0 0
    %1352 = vmatpush.bf16.msra.mxu0 0
    %1353 = vmatpush.bf16.msra.mxu0 0
    %1354 = vmatpush.bf16.msra.mxu0 0
    %1355 = vmatpush.bf16.msra.mxu0 0
    %1356 = vmatpush.bf16.msra.mxu0 %v268
    %1357 = vmatpush.bf16.msra.mxu0 %v267
    %1358 = vmatmul.bf16.gmra.mxu0 %v1247
    %v1359 = vpop.f32.mrf.mxu0
    %v1360 = vadd.f32 0.0, %v1359
    %v1361 = vpop.f32.mrf.mxu0
    %1362 = vdwg.mxu0
    %1363 = vmatpush.bf16.msra.mxu0 0
    %1364 = vmatpush.bf16.msra.mxu0 0
    %1365 = vmatpush.bf16.msra.mxu0 0
    %1366 = vmatpush.bf16.msra.mxu0 0
    %1367 = vmatpush.bf16.msra.mxu0 0
    %1368 = vmatpush.bf16.msra.mxu0 0
    %1369 = vmatpush.bf16.msra.mxu0 %v301
    %1370 = vmatpush.bf16.msra.mxu0 %v300
    %1371 = vmatmul.bf16.gmra.mxu0 %v1247
    %v1372 = vpop.f32.mrf.mxu0
    %v1373 = vadd.f32 0.0, %v1372
    %v1374 = vpop.f32.mrf.mxu0
    %1375 = vdwg.mxu0
    %v1376 = vadd.f32 %v138, %v1360
    %v1377 = vadd.f32 %v1376, %v324
    %v1378 = vxor.u32 %v1377, 2147483648
    %v1379 = vmul.f32 %v1378, 1.442695
    %v1380 = vpow.pop %v1379
    %v1381 = vadd.f32 %v1380, 1.0
    %v1382 = vrcp.pop %v1381
    %v1383 = vmul.f32 %v1381, %v1382
    %v1384 = vsub.f32 1.0, %v1383
    %v1385 = vmul.f32 %v1382, %v1384
    %v1386 = vadd.f32 %v1382, %v1385
    %vm1387 = vweird.f32 %v1381
    %vm1388 = vweird.f32 %v1382
    %vm1389 = vmor %vm1387, %vm1388
    %v1390 = vsel %vm1389, %v1382, %v1386
    %v1391 = vand.u32 2147483647, %v1381
    %vm1392 = vcmp.eq.f32.partialorder %v1391, 8.507059e+37
    %v1393 = vand.u32 %v1381, 2147483648
    %v1394 = vor.u32 1.1754944e-38, %v1393
    %v1395 = vsel %vm1392, %v1394, %v1390
    %v1396 = vmul.f32 1.0, %v1395
    %v1397 = vadd.f32 %v184, %v1373
    %v1398 = vadd.f32 %v1397, %v348
    %v1399 = vxor.u32 %v1398, 2147483648
    %v1400 = vmul.f32 %v1399, 1.442695
    %v1401 = vpow.pop %v1400
    %v1402 = vadd.f32 %v1401, 1.0
    %v1403 = vrcp.pop %v1402
    %v1404 = vmul.f32 %v1402, %v1403
    %v1405 = vsub.f32 1.0, %v1404
    %v1406 = vmul.f32 %v1403, %v1405
    %v1407 = vadd.f32 %v1403, %v1406
    %vm1408 = vweird.f32 %v1402
    %vm1409 = vweird.f32 %v1403
    %vm1410 = vmor %vm1408, %vm1409
    %v1411 = vsel %vm1410, %v1403, %v1407
    %v1412 = vand.u32 2147483647, %v1402
    %vm1413 = vcmp.eq.f32.partialorder %v1412, 8.507059e+37
    %v1414 = vand.u32 %v1402, 2147483648
    %v1415 = vor.u32 1.1754944e-38, %v1414
    %v1416 = vsel %vm1413, %v1415, %v1411
    %v1417 = vmul.f32 1.0, %v1416
    %v1418 = vadd.f32 %v230, %v371
    %1419 = vmatpush.bf16.msra.mxu0 0
    %1420 = vmatpush.bf16.msra.mxu0 0
    %1421 = vmatpush.bf16.msra.mxu0 0
    %1422 = vmatpush.bf16.msra.mxu0 0
    %1423 = vmatpush.bf16.msra.mxu0 0
    %1424 = vmatpush.bf16.msra.mxu0 0
    %1425 = vmatpush.bf16.msra.mxu0 %v386
    %1426 = vmatpush.bf16.msra.mxu0 %v385
    %1427 = vmatmul.bf16.gmra.mxu0 %v1247
    %v1428 = vpop.f32.mrf.mxu0
    %v1429 = vadd.f32 %v375, %v1428
    %v1430 = vpop.f32.mrf.mxu0
    %1431 = vdwg.mxu0
    %v1432 = vmul.f32 %v1396, %v1429
    %v1433 = vadd.f32 %v1418, %v1432
    %v1434 = vtanh.pop %v1433
    %v1435 = vsub.f32 1.0, %v1417
    %v1436 = vmul.f32 %v1435, %v1434
    %v1437 = vmul.f32 %v1417, %v1214
    %v1438 = vadd.f32 %v1436, %v1437
    %v1439 = vsel %vm1349, 1, 0
    %1440 = vset.pattern.permute.xlu0 0
    %1441 = vperm.xlu0 %1440, %v1439
    %v1442 = vpop.permute.xlu0 %1441
    %vm1443 = vcmp.eq.s32.totalorder %v1442, 1
    %v1444 = vsel %vm1443, %v1438, %v1214
    %v1445 = vpack.c.bf16 %v1348, %v1348
    %v1446 = vpack.c.bf16 %v1444, %v1444
    %v1448 = vsel %vm105, %v1445, 0
    %1450 = vmatpush.bf16.msra.mxu0 0
    %1451 = vmatpush.bf16.msra.mxu0 0
    %1452 = vmatpush.bf16.msra.mxu0 0
    %1453 = vmatpush.bf16.msra.mxu0 0
    %1454 = vmatpush.bf16.msra.mxu0 0
    %1455 = vmatpush.bf16.msra.mxu0 0
    %1456 = vmatpush.bf16.msra.mxu0 %v445
    %1457 = vmatpush.bf16.msra.mxu0 %v444
    %1458 = vmatmul.bf16.gmra.mxu0 %v1448
    %v1459 = vpop.f32.mrf.mxu0
    %v1460 = vadd.f32 0.0, %v1459
    %v1461 = vpop.f32.mrf.mxu0
    %1462 = vdwg.mxu0
    %1463 = vmatpush.bf16.msra.mxu0 0
    %1464 = vmatpush.bf16.msra.mxu0 0
    %1465 = vmatpush.bf16.msra.mxu0 0
    %1466 = vmatpush.bf16.msra.mxu0 0
    %1467 = vmatpush.bf16.msra.mxu0 0
    %1468 = vmatpush.bf16.msra.mxu0 0
    %1469 = vmatpush.bf16.msra.mxu0 %v475
    %1470 = vmatpush.bf16.msra.mxu0 %v474
    %1471 = vmatmul.bf16.gmra.mxu0 %v1448
    %v1472 = vpop.f32.mrf.mxu0
    %v1473 = vadd.f32 0.0, %v1472
    %v1474 = vpop.f32.mrf.mxu0
    %1475 = vdwg.mxu0
    %v1477 = vsel %vm105, %v1446, 0
    %1479 = vmatpush.bf16.msra.mxu0 0
    %1480 = vmatpush.bf16.msra.mxu0 0
    %1481 = vmatpush.bf16.msra.mxu0 0
    %1482 = vmatpush.bf16.msra.mxu0 0
    %1483 = vmatpush.bf16.msra.mxu0 0
    %1484 = vmatpush.bf16.msra.mxu0 0
    %1485 = vmatpush.bf16.msra.mxu0 %v505
    %1486 = vmatpush.bf16.msra.mxu0 %v504
    %1487 = vmatmul.bf16.gmra.mxu0 %v1477
    %v1488 = vpop.f32.mrf.mxu0
    %v1489 = vadd.f32 %v1460, %v1488
    %v1490 = vpop.f32.mrf.mxu0
    %1491 = vdwg.mxu0
    %v1492 = vadd.f32 %v1489, %v525
    %v1493 = vxor.u32 %v1492, 2147483648
    %v1494 = vmul.f32 %v1493, 1.442695
    %v1495 = vpow.pop %v1494
    %v1496 = vadd.f32 %v1495, 1.0
    %v1497 = vrcp.pop %v1496
    %v1498 = vmul.f32 %v1496, %v1497
    %v1499 = vsub.f32 1.0, %v1498
    %v1500 = vmul.f32 %v1497, %v1499
    %v1501 = vadd.f32 %v1497, %v1500
    %vm1502 = vweird.f32 %v1496
    %vm1503 = vweird.f32 %v1497
    %vm1504 = vmor %vm1502, %vm1503
    %v1505 = vsel %vm1504, %v1497, %v1501
    %v1506 = vand.u32 2147483647, %v1496
    %vm1507 = vcmp.eq.f32.partialorder %v1506, 8.507059e+37
    %v1508 = vand.u32 %v1496, 2147483648
    %v1509 = vor.u32 1.1754944e-38, %v1508
    %v1510 = vsel %vm1507, %v1509, %v1505
    %v1511 = vmul.f32 1.0, %v1510
    %1512 = vmatpush.bf16.msra.mxu0 0
    %1513 = vmatpush.bf16.msra.mxu0 0
    %1514 = vmatpush.bf16.msra.mxu0 0
    %1515 = vmatpush.bf16.msra.mxu0 0
    %1516 = vmatpush.bf16.msra.mxu0 0
    %1517 = vmatpush.bf16.msra.mxu0 0
    %1518 = vmatpush.bf16.msra.mxu0 %v556
    %1519 = vmatpush.bf16.msra.mxu0 %v555
    %1520 = vmatmul.bf16.gmra.mxu0 %v1477
    %v1521 = vpop.f32.mrf.mxu0
    %v1522 = vadd.f32 %v1473, %v1521
    %v1523 = vpop.f32.mrf.mxu0
    %1524 = vdwg.mxu0
    %v1525 = vadd.f32 %v1522, %v573
    %v1526 = vxor.u32 %v1525, 2147483648
    %v1527 = vmul.f32 %v1526, 1.442695
    %v1528 = vpow.pop %v1527
    %v1529 = vadd.f32 %v1528, 1.0
    %v1530 = vrcp.pop %v1529
    %v1531 = vmul.f32 %v1529, %v1530
    %v1532 = vsub.f32 1.0, %v1531
    %v1533 = vmul.f32 %v1530, %v1532
    %v1534 = vadd.f32 %v1530, %v1533
    %vm1535 = vweird.f32 %v1529
    %vm1536 = vweird.f32 %v1530
    %vm1537 = vmor %vm1535, %vm1536
    %v1538 = vsel %vm1537, %v1530, %v1534
    %v1539 = vand.u32 2147483647, %v1529
    %vm1540 = vcmp.eq.f32.partialorder %v1539, 8.507059e+37
    %v1541 = vand.u32 %v1529, 2147483648
    %v1542 = vor.u32 1.1754944e-38, %v1541
    %v1543 = vsel %vm1540, %v1542, %v1538
    %v1544 = vmul.f32 1.0, %v1543
    %1545 = vmatpush.bf16.msra.mxu0 0
    %1546 = vmatpush.bf16.msra.mxu0 0
    %1547 = vmatpush.bf16.msra.mxu0 0
    %1548 = vmatpush.bf16.msra.mxu0 0
    %1549 = vmatpush.bf16.msra.mxu0 0
    %1550 = vmatpush.bf16.msra.mxu0 0
    %1551 = vmatpush.bf16.msra.mxu0 %v607
    %1552 = vmatpush.bf16.msra.mxu0 %v606
    %1553 = vmatmul.bf16.gmra.mxu0 %v1477
    %v1554 = vpop.f32.mrf.mxu0
    %v1555 = vadd.f32 %v596, %v1554
    %v1556 = vpop.f32.mrf.mxu0
    %1557 = vdwg.mxu0
    %1558 = vmatpush.bf16.msra.mxu0 0
    %1559 = vmatpush.bf16.msra.mxu0 0
    %1560 = vmatpush.bf16.msra.mxu0 0
    %1561 = vmatpush.bf16.msra.mxu0 0
    %1562 = vmatpush.bf16.msra.mxu0 0
    %1563 = vmatpush.bf16.msra.mxu0 0
    %1564 = vmatpush.bf16.msra.mxu0 %v635
    %1565 = vmatpush.bf16.msra.mxu0 %v634
    %1566 = vmatmul.bf16.gmra.mxu0 %v1448
    %v1567 = vpop.f32.mrf.mxu0
    %v1568 = vadd.f32 %v624, %v1567
    %v1569 = vpop.f32.mrf.mxu0
    %1570 = vdwg.mxu0
    %v1571 = vmul.f32 %v1511, %v1568
    %v1572 = vadd.f32 %v1555, %v1571
    %v1573 = vtanh.pop %v1572
    %v1574 = vsub.f32 1.0, %v1544
    %v1575 = vmul.f32 %v1574, %v1573
    %v1576 = vmul.f32 %v1544, %v1348
    %v1577 = vadd.f32 %v1575, %v1576
    %v1578 = vsel %vm1443, %v1577, %v1348
    %vm1579 = vcmp.gt.s32.totalorder %v60, 5
    %1580 = vmatpush.bf16.msra.mxu0 0
    %1581 = vmatpush.bf16.msra.mxu0 0
    %1582 = vmatpush.bf16.msra.mxu0 0
    %1583 = vmatpush.bf16.msra.mxu0 0
    %1584 = vmatpush.bf16.msra.mxu0 0
    %1585 = vmatpush.bf16.msra.mxu0 0
    %1586 = vmatpush.bf16.msra.mxu0 %v268
    %1587 = vmatpush.bf16.msra.mxu0 %v267
    %1588 = vmatmul.bf16.gmra.mxu0 %v1477
    %v1589 = vpop.f32.mrf.mxu0
    %v1590 = vadd.f32 0.0, %v1589
    %v1591 = vpop.f32.mrf.mxu0
    %1592 = vdwg.mxu0
    %1593 = vmatpush.bf16.msra.mxu0 0
    %1594 = vmatpush.bf16.msra.mxu0 0
    %1595 = vmatpush.bf16.msra.mxu0 0
    %1596 = vmatpush.bf16.msra.mxu0 0
    %1597 = vmatpush.bf16.msra.mxu0 0
    %1598 = vmatpush.bf16.msra.mxu0 0
    %1599 = vmatpush.bf16.msra.mxu0 %v301
    %1600 = vmatpush.bf16.msra.mxu0 %v300
    %1601 = vmatmul.bf16.gmra.mxu0 %v1477
    %v1602 = vpop.f32.mrf.mxu0
    %v1603 = vadd.f32 0.0, %v1602
    %v1604 = vpop.f32.mrf.mxu0
    %1605 = vdwg.mxu0
    %v1606 = vadd.f32 %v140, %v1590
    %v1607 = vadd.f32 %v1606, %v324
    %v1608 = vxor.u32 %v1607, 2147483648
    %v1609 = vmul.f32 %v1608, 1.442695
    %v1610 = vpow.pop %v1609
    %v1611 = vadd.f32 %v1610, 1.0
    %v1612 = vrcp.pop %v1611
    %v1613 = vmul.f32 %v1611, %v1612
    %v1614 = vsub.f32 1.0, %v1613
    %v1615 = vmul.f32 %v1612, %v1614
    %v1616 = vadd.f32 %v1612, %v1615
    %vm1617 = vweird.f32 %v1611
    %vm1618 = vweird.f32 %v1612
    %vm1619 = vmor %vm1617, %vm1618
    %v1620 = vsel %vm1619, %v1612, %v1616
    %v1621 = vand.u32 2147483647, %v1611
    %vm1622 = vcmp.eq.f32.partialorder %v1621, 8.507059e+37
    %v1623 = vand.u32 %v1611, 2147483648
    %v1624 = vor.u32 1.1754944e-38, %v1623
    %v1625 = vsel %vm1622, %v1624, %v1620
    %v1626 = vmul.f32 1.0, %v1625
    %v1627 = vadd.f32 %v186, %v1603
    %v1628 = vadd.f32 %v1627, %v348
    %v1629 = vxor.u32 %v1628, 2147483648
    %v1630 = vmul.f32 %v1629, 1.442695
    %v1631 = vpow.pop %v1630
    %v1632 = vadd.f32 %v1631, 1.0
    %v1633 = vrcp.pop %v1632
    %v1634 = vmul.f32 %v1632, %v1633
    %v1635 = vsub.f32 1.0, %v1634
    %v1636 = vmul.f32 %v1633, %v1635
    %v1637 = vadd.f32 %v1633, %v1636
    %vm1638 = vweird.f32 %v1632
    %vm1639 = vweird.f32 %v1633
    %vm1640 = vmor %vm1638, %vm1639
    %v1641 = vsel %vm1640, %v1633, %v1637
    %v1642 = vand.u32 2147483647, %v1632
    %vm1643 = vcmp.eq.f32.partialorder %v1642, 8.507059e+37
    %v1644 = vand.u32 %v1632, 2147483648
    %v1645 = vor.u32 1.1754944e-38, %v1644
    %v1646 = vsel %vm1643, %v1645, %v1641
    %v1647 = vmul.f32 1.0, %v1646
    %v1648 = vadd.f32 %v232, %v371
    %1649 = vmatpush.bf16.msra.mxu0 0
    %1650 = vmatpush.bf16.msra.mxu0 0
    %1651 = vmatpush.bf16.msra.mxu0 0
    %1652 = vmatpush.bf16.msra.mxu0 0
    %1653 = vmatpush.bf16.msra.mxu0 0
    %1654 = vmatpush.bf16.msra.mxu0 0
    %1655 = vmatpush.bf16.msra.mxu0 %v386
    %1656 = vmatpush.bf16.msra.mxu0 %v385
    %1657 = vmatmul.bf16.gmra.mxu0 %v1477
    %v1658 = vpop.f32.mrf.mxu0
    %v1659 = vadd.f32 %v375, %v1658
    %v1660 = vpop.f32.mrf.mxu0
    %1661 = vdwg.mxu0
    %v1662 = vmul.f32 %v1626, %v1659
    %v1663 = vadd.f32 %v1648, %v1662
    %v1664 = vtanh.pop %v1663
    %v1665 = vsub.f32 1.0, %v1647
    %v1666 = vmul.f32 %v1665, %v1664
    %v1667 = vmul.f32 %v1647, %v1444
    %v1668 = vadd.f32 %v1666, %v1667
    %v1669 = vsel %vm1579, 1, 0
    %1670 = vset.pattern.permute.xlu0 0
    %1671 = vperm.xlu0 %1670, %v1669
    %v1672 = vpop.permute.xlu0 %1671
    %vm1673 = vcmp.eq.s32.totalorder %v1672, 1
    %v1674 = vsel %vm1673, %v1668, %v1444
    %v1675 = vpack.c.bf16 %v1578, %v1578
    %v1676 = vpack.c.bf16 %v1674, %v1674
    %v1678 = vsel %vm105, %v1675, 0
    %1680 = vmatpush.bf16.msra.mxu0 0
    %1681 = vmatpush.bf16.msra.mxu0 0
    %1682 = vmatpush.bf16.msra.mxu0 0
    %1683 = vmatpush.bf16.msra.mxu0 0
    %1684 = vmatpush.bf16.msra.mxu0 0
    %1685 = vmatpush.bf16.msra.mxu0 0
    %1686 = vmatpush.bf16.msra.mxu0 %v445
    %1687 = vmatpush.bf16.msra.mxu0 %v444
    %1688 = vmatmul.bf16.gmra.mxu0 %v1678
    %v1689 = vpop.f32.mrf.mxu0
    %v1690 = vadd.f32 0.0, %v1689
    %v1691 = vpop.f32.mrf.mxu0
    %1692 = vdwg.mxu0
    %1693 = vmatpush.bf16.msra.mxu0 0
    %1694 = vmatpush.bf16.msra.mxu0 0
    %1695 = vmatpush.bf16.msra.mxu0 0
    %1696 = vmatpush.bf16.msra.mxu0 0
    %1697 = vmatpush.bf16.msra.mxu0 0
    %1698 = vmatpush.bf16.msra.mxu0 0
    %1699 = vmatpush.bf16.msra.mxu0 %v475
    %1700 = vmatpush.bf16.msra.mxu0 %v474
    %1701 = vmatmul.bf16.gmra.mxu0 %v1678
    %v1702 = vpop.f32.mrf.mxu0
    %v1703 = vadd.f32 0.0, %v1702
    %v1704 = vpop.f32.mrf.mxu0
    %1705 = vdwg.mxu0
    %v1707 = vsel %vm105, %v1676, 0
    %1709 = vmatpush.bf16.msra.mxu0 0
    %1710 = vmatpush.bf16.msra.mxu0 0
    %1711 = vmatpush.bf16.msra.mxu0 0
    %1712 = vmatpush.bf16.msra.mxu0 0
    %1713 = vmatpush.bf16.msra.mxu0 0
    %1714 = vmatpush.bf16.msra.mxu0 0
    %1715 = vmatpush.bf16.msra.mxu0 %v505
    %1716 = vmatpush.bf16.msra.mxu0 %v504
    %1717 = vmatmul.bf16.gmra.mxu0 %v1707
    %v1718 = vpop.f32.mrf.mxu0
    %v1719 = vadd.f32 %v1690, %v1718
    %v1720 = vpop.f32.mrf.mxu0
    %1721 = vdwg.mxu0
    %v1722 = vadd.f32 %v1719, %v525
    %v1723 = vxor.u32 %v1722, 2147483648
    %v1724 = vmul.f32 %v1723, 1.442695
    %v1725 = vpow.pop %v1724
    %v1726 = vadd.f32 %v1725, 1.0
    %v1727 = vrcp.pop %v1726
    %v1728 = vmul.f32 %v1726, %v1727
    %v1729 = vsub.f32 1.0, %v1728
    %v1730 = vmul.f32 %v1727, %v1729
    %v1731 = vadd.f32 %v1727, %v1730
    %vm1732 = vweird.f32 %v1726
    %vm1733 = vweird.f32 %v1727
    %vm1734 = vmor %vm1732, %vm1733
    %v1735 = vsel %vm1734, %v1727, %v1731
    %v1736 = vand.u32 2147483647, %v1726
    %vm1737 = vcmp.eq.f32.partialorder %v1736, 8.507059e+37
    %v1738 = vand.u32 %v1726, 2147483648
    %v1739 = vor.u32 1.1754944e-38, %v1738
    %v1740 = vsel %vm1737, %v1739, %v1735
    %v1741 = vmul.f32 1.0, %v1740
    %1742 = vmatpush.bf16.msra.mxu0 0
    %1743 = vmatpush.bf16.msra.mxu0 0
    %1744 = vmatpush.bf16.msra.mxu0 0
    %1745 = vmatpush.bf16.msra.mxu0 0
    %1746 = vmatpush.bf16.msra.mxu0 0
    %1747 = vmatpush.bf16.msra.mxu0 0
    %1748 = vmatpush.bf16.msra.mxu0 %v556
    %1749 = vmatpush.bf16.msra.mxu0 %v555
    %1750 = vmatmul.bf16.gmra.mxu0 %v1707
    %v1751 = vpop.f32.mrf.mxu0
    %v1752 = vadd.f32 %v1703, %v1751
    %v1753 = vpop.f32.mrf.mxu0
    %1754 = vdwg.mxu0
    %v1755 = vadd.f32 %v1752, %v573
    %v1756 = vxor.u32 %v1755, 2147483648
    %v1757 = vmul.f32 %v1756, 1.442695
    %v1758 = vpow.pop %v1757
    %v1759 = vadd.f32 %v1758, 1.0
    %v1760 = vrcp.pop %v1759
    %v1761 = vmul.f32 %v1759, %v1760
    %v1762 = vsub.f32 1.0, %v1761
    %v1763 = vmul.f32 %v1760, %v1762
    %v1764 = vadd.f32 %v1760, %v1763
    %vm1765 = vweird.f32 %v1759
    %vm1766 = vweird.f32 %v1760
    %vm1767 = vmor %vm1765, %vm1766
    %v1768 = vsel %vm1767, %v1760, %v1764
    %v1769 = vand.u32 2147483647, %v1759
    %vm1770 = vcmp.eq.f32.partialorder %v1769, 8.507059e+37
    %v1771 = vand.u32 %v1759, 2147483648
    %v1772 = vor.u32 1.1754944e-38, %v1771
    %v1773 = vsel %vm1770, %v1772, %v1768
    %v1774 = vmul.f32 1.0, %v1773
    %1775 = vmatpush.bf16.msra.mxu0 0
    %1776 = vmatpush.bf16.msra.mxu0 0
    %1777 = vmatpush.bf16.msra.mxu0 0
    %1778 = vmatpush.bf16.msra.mxu0 0
    %1779 = vmatpush.bf16.msra.mxu0 0
    %1780 = vmatpush.bf16.msra.mxu0 0
    %1781 = vmatpush.bf16.msra.mxu0 %v607
    %1782 = vmatpush.bf16.msra.mxu0 %v606
    %1783 = vmatmul.bf16.gmra.mxu0 %v1707
    %v1784 = vpop.f32.mrf.mxu0
    %v1785 = vadd.f32 %v596, %v1784
    %v1786 = vpop.f32.mrf.mxu0
    %1787 = vdwg.mxu0
    %1788 = vmatpush.bf16.msra.mxu0 0
    %1789 = vmatpush.bf16.msra.mxu0 0
    %1790 = vmatpush.bf16.msra.mxu0 0
    %1791 = vmatpush.bf16.msra.mxu0 0
    %1792 = vmatpush.bf16.msra.mxu0 0
    %1793 = vmatpush.bf16.msra.mxu0 0
    %1794 = vmatpush.bf16.msra.mxu0 %v635
    %1795 = vmatpush.bf16.msra.mxu0 %v634
    %1796 = vmatmul.bf16.gmra.mxu0 %v1678
    %v1797 = vpop.f32.mrf.mxu0
    %v1798 = vadd.f32 %v624, %v1797
    %v1799 = vpop.f32.mrf.mxu0
    %1800 = vdwg.mxu0
    %v1801 = vmul.f32 %v1741, %v1798
    %v1802 = vadd.f32 %v1785, %v1801
    %v1803 = vtanh.pop %v1802
    %v1804 = vsub.f32 1.0, %v1774
    %v1805 = vmul.f32 %v1804, %v1803
    %v1806 = vmul.f32 %v1774, %v1578
    %v1807 = vadd.f32 %v1805, %v1806
    %v1808 = vsel %vm1673, %v1807, %v1578
    %vm1809 = vcmp.gt.s32.totalorder %v60, 6
    %1810 = vmatpush.bf16.msra.mxu0 0
    %1811 = vmatpush.bf16.msra.mxu0 0
    %1812 = vmatpush.bf16.msra.mxu0 0
    %1813 = vmatpush.bf16.msra.mxu0 0
    %1814 = vmatpush.bf16.msra.mxu0 0
    %1815 = vmatpush.bf16.msra.mxu0 0
    %1816 = vmatpush.bf16.msra.mxu0 %v268
    %1817 = vmatpush.bf16.msra.mxu0 %v267
    %1818 = vmatmul.bf16.gmra.mxu0 %v1707
    %v1819 = vpop.f32.mrf.mxu0
    %v1820 = vadd.f32 0.0, %v1819
    %v1821 = vpop.f32.mrf.mxu0
    %1822 = vdwg.mxu0
    %1823 = vmatpush.bf16.msra.mxu0 0
    %1824 = vmatpush.bf16.msra.mxu0 0
    %1825 = vmatpush.bf16.msra.mxu0 0
    %1826 = vmatpush.bf16.msra.mxu0 0
    %1827 = vmatpush.bf16.msra.mxu0 0
    %1828 = vmatpush.bf16.msra.mxu0 0
    %1829 = vmatpush.bf16.msra.mxu0 %v301
    %1830 = vmatpush.bf16.msra.mxu0 %v300
    %1831 = vmatmul.bf16.gmra.mxu0 %v1707
    %v1832 = vpop.f32.mrf.mxu0
    %v1833 = vadd.f32 0.0, %v1832
    %v1834 = vpop.f32.mrf.mxu0
    %1835 = vdwg.mxu0
    %v1836 = vadd.f32 %v143, %v1820
    %v1837 = vadd.f32 %v1836, %v324
    %v1838 = vxor.u32 %v1837, 2147483648
    %v1839 = vmul.f32 %v1838, 1.442695
    %v1840 = vpow.pop %v1839
    %v1841 = vadd.f32 %v1840, 1.0
    %v1842 = vrcp.pop %v1841
    %v1843 = vmul.f32 %v1841, %v1842
    %v1844 = vsub.f32 1.0, %v1843
    %v1845 = vmul.f32 %v1842, %v1844
    %v1846 = vadd.f32 %v1842, %v1845
    %vm1847 = vweird.f32 %v1841
    %vm1848 = vweird.f32 %v1842
    %vm1849 = vmor %vm1847, %vm1848
    %v1850 = vsel %vm1849, %v1842, %v1846
    %v1851 = vand.u32 2147483647, %v1841
    %vm1852 = vcmp.eq.f32.partialorder %v1851, 8.507059e+37
    %v1853 = vand.u32 %v1841, 2147483648
    %v1854 = vor.u32 1.1754944e-38, %v1853
    %v1855 = vsel %vm1852, %v1854, %v1850
    %v1856 = vmul.f32 1.0, %v1855
    %v1857 = vadd.f32 %v189, %v1833
    %v1858 = vadd.f32 %v1857, %v348
    %v1859 = vxor.u32 %v1858, 2147483648
    %v1860 = vmul.f32 %v1859, 1.442695
    %v1861 = vpow.pop %v1860
    %v1862 = vadd.f32 %v1861, 1.0
    %v1863 = vrcp.pop %v1862
    %v1864 = vmul.f32 %v1862, %v1863
    %v1865 = vsub.f32 1.0, %v1864
    %v1866 = vmul.f32 %v1863, %v1865
    %v1867 = vadd.f32 %v1863, %v1866
    %vm1868 = vweird.f32 %v1862
    %vm1869 = vweird.f32 %v1863
    %vm1870 = vmor %vm1868, %vm1869
    %v1871 = vsel %vm1870, %v1863, %v1867
    %v1872 = vand.u32 2147483647, %v1862
    %vm1873 = vcmp.eq.f32.partialorder %v1872, 8.507059e+37
    %v1874 = vand.u32 %v1862, 2147483648
    %v1875 = vor.u32 1.1754944e-38, %v1874
    %v1876 = vsel %vm1873, %v1875, %v1871
    %v1877 = vmul.f32 1.0, %v1876
    %v1878 = vadd.f32 %v235, %v371
    %1879 = vmatpush.bf16.msra.mxu0 0
    %1880 = vmatpush.bf16.msra.mxu0 0
    %1881 = vmatpush.bf16.msra.mxu0 0
    %1882 = vmatpush.bf16.msra.mxu0 0
    %1883 = vmatpush.bf16.msra.mxu0 0
    %1884 = vmatpush.bf16.msra.mxu0 0
    %1885 = vmatpush.bf16.msra.mxu0 %v386
    %1886 = vmatpush.bf16.msra.mxu0 %v385
    %1887 = vmatmul.bf16.gmra.mxu0 %v1707
    %v1888 = vpop.f32.mrf.mxu0
    %v1889 = vadd.f32 %v375, %v1888
    %v1890 = vpop.f32.mrf.mxu0
    %1891 = vdwg.mxu0
    %v1892 = vmul.f32 %v1856, %v1889
    %v1893 = vadd.f32 %v1878, %v1892
    %v1894 = vtanh.pop %v1893
    %v1895 = vsub.f32 1.0, %v1877
    %v1896 = vmul.f32 %v1895, %v1894
    %v1897 = vmul.f32 %v1877, %v1674
    %v1898 = vadd.f32 %v1896, %v1897
    %v1899 = vsel %vm1809, 1, 0
    %1900 = vset.pattern.permute.xlu0 0
    %1901 = vperm.xlu0 %1900, %v1899
    %v1902 = vpop.permute.xlu0 %1901
    %vm1903 = vcmp.eq.s32.totalorder %v1902, 1
    %v1904 = vsel %vm1903, %v1898, %v1674
    %v1905 = vpack.c.bf16 %v1808, %v1808
    %v1906 = vpack.c.bf16 %v1904, %v1904
    %v1908 = vsel %vm105, %v1905, 0
    %1910 = vmatpush.bf16.msra.mxu0 0
    %1911 = vmatpush.bf16.msra.mxu0 0
    %1912 = vmatpush.bf16.msra.mxu0 0
    %1913 = vmatpush.bf16.msra.mxu0 0
    %1914 = vmatpush.bf16.msra.mxu0 0
    %1915 = vmatpush.bf16.msra.mxu0 0
    %1916 = vmatpush.bf16.msra.mxu0 %v445
    %1917 = vmatpush.bf16.msra.mxu0 %v444
    %1918 = vmatmul.bf16.gmra.mxu0 %v1908
    %v1919 = vpop.f32.mrf.mxu0
    %v1920 = vadd.f32 0.0, %v1919
    %v1921 = vpop.f32.mrf.mxu0
    %1922 = vdwg.mxu0
    %1923 = vmatpush.bf16.msra.mxu0 0
    %1924 = vmatpush.bf16.msra.mxu0 0
    %1925 = vmatpush.bf16.msra.mxu0 0
    %1926 = vmatpush.bf16.msra.mxu0 0
    %1927 = vmatpush.bf16.msra.mxu0 0
    %1928 = vmatpush.bf16.msra.mxu0 0
    %1929 = vmatpush.bf16.msra.mxu0 %v475
    %1930 = vmatpush.bf16.msra.mxu0 %v474
    %1931 = vmatmul.bf16.gmra.mxu0 %v1908
    %v1932 = vpop.f32.mrf.mxu0
    %v1933 = vadd.f32 0.0, %v1932
    %v1934 = vpop.f32.mrf.mxu0
    %1935 = vdwg.mxu0
    %v1937 = vsel %vm105, %v1906, 0
    %1939 = vmatpush.bf16.msra.mxu0 0
    %1940 = vmatpush.bf16.msra.mxu0 0
    %1941 = vmatpush.bf16.msra.mxu0 0
    %1942 = vmatpush.bf16.msra.mxu0 0
    %1943 = vmatpush.bf16.msra.mxu0 0
    %1944 = vmatpush.bf16.msra.mxu0 0
    %1945 = vmatpush.bf16.msra.mxu0 %v505
    %1946 = vmatpush.bf16.msra.mxu0 %v504
    %1947 = vmatmul.bf16.gmra.mxu0 %v1937
    %v1948 = vpop.f32.mrf.mxu0
    %v1949 = vadd.f32 %v1920, %v1948
    %v1950 = vpop.f32.mrf.mxu0
    %1951 = vdwg.mxu0
    %v1952 = vadd.f32 %v1949, %v525
    %v1953 = vxor.u32 %v1952, 2147483648
    %v1954 = vmul.f32 %v1953, 1.442695
    %v1955 = vpow.pop %v1954
    %v1956 = vadd.f32 %v1955, 1.0
    %v1957 = vrcp.pop %v1956
    %v1958 = vmul.f32 %v1956, %v1957
    %v1959 = vsub.f32 1.0, %v1958
    %v1960 = vmul.f32 %v1957, %v1959
    %v1961 = vadd.f32 %v1957, %v1960
    %vm1962 = vweird.f32 %v1956
    %vm1963 = vweird.f32 %v1957
    %vm1964 = vmor %vm1962, %vm1963
    %v1965 = vsel %vm1964, %v1957, %v1961
    %v1966 = vand.u32 2147483647, %v1956
    %vm1967 = vcmp.eq.f32.partialorder %v1966, 8.507059e+37
    %v1968 = vand.u32 %v1956, 2147483648
    %v1969 = vor.u32 1.1754944e-38, %v1968
    %v1970 = vsel %vm1967, %v1969, %v1965
    %v1971 = vmul.f32 1.0, %v1970
    %1972 = vmatpush.bf16.msra.mxu0 0
    %1973 = vmatpush.bf16.msra.mxu0 0
    %1974 = vmatpush.bf16.msra.mxu0 0
    %1975 = vmatpush.bf16.msra.mxu0 0
    %1976 = vmatpush.bf16.msra.mxu0 0
    %1977 = vmatpush.bf16.msra.mxu0 0
    %1978 = vmatpush.bf16.msra.mxu0 %v556
    %1979 = vmatpush.bf16.msra.mxu0 %v555
    %1980 = vmatmul.bf16.gmra.mxu0 %v1937
    %v1981 = vpop.f32.mrf.mxu0
    %v1982 = vadd.f32 %v1933, %v1981
    %v1983 = vpop.f32.mrf.mxu0
    %1984 = vdwg.mxu0
    %v1985 = vadd.f32 %v1982, %v573
    %v1986 = vxor.u32 %v1985, 2147483648
    %v1987 = vmul.f32 %v1986, 1.442695
    %v1988 = vpow.pop %v1987
    %v1989 = vadd.f32 %v1988, 1.0
    %v1990 = vrcp.pop %v1989
    %v1991 = vmul.f32 %v1989, %v1990
    %v1992 = vsub.f32 1.0, %v1991
    %v1993 = vmul.f32 %v1990, %v1992
    %v1994 = vadd.f32 %v1990, %v1993
    %vm1995 = vweird.f32 %v1989
    %vm1996 = vweird.f32 %v1990
    %vm1997 = vmor %vm1995, %vm1996
    %v1998 = vsel %vm1997, %v1990, %v1994
    %v1999 = vand.u32 2147483647, %v1989
    %vm2000 = vcmp.eq.f32.partialorder %v1999, 8.507059e+37
    %v2001 = vand.u32 %v1989, 2147483648
    %v2002 = vor.u32 1.1754944e-38, %v2001
    %v2003 = vsel %vm2000, %v2002, %v1998
    %v2004 = vmul.f32 1.0, %v2003
    %2005 = vmatpush.bf16.msra.mxu0 0
    %2006 = vmatpush.bf16.msra.mxu0 0
    %2007 = vmatpush.bf16.msra.mxu0 0
    %2008 = vmatpush.bf16.msra.mxu0 0
    %2009 = vmatpush.bf16.msra.mxu0 0
    %2010 = vmatpush.bf16.msra.mxu0 0
    %2011 = vmatpush.bf16.msra.mxu0 %v607
    %2012 = vmatpush.bf16.msra.mxu0 %v606
    %2013 = vmatmul.bf16.gmra.mxu0 %v1937
    %v2014 = vpop.f32.mrf.mxu0
    %v2015 = vadd.f32 %v596, %v2014
    %v2016 = vpop.f32.mrf.mxu0
    %2017 = vdwg.mxu0
    %2018 = vmatpush.bf16.msra.mxu0 0
    %2019 = vmatpush.bf16.msra.mxu0 0
    %2020 = vmatpush.bf16.msra.mxu0 0
    %2021 = vmatpush.bf16.msra.mxu0 0
    %2022 = vmatpush.bf16.msra.mxu0 0
    %2023 = vmatpush.bf16.msra.mxu0 0
    %2024 = vmatpush.bf16.msra.mxu0 %v635
    %2025 = vmatpush.bf16.msra.mxu0 %v634
    %2026 = vmatmul.bf16.gmra.mxu0 %v1908
    %v2027 = vpop.f32.mrf.mxu0
    %v2028 = vadd.f32 %v624, %v2027
    %v2029 = vpop.f32.mrf.mxu0
    %2030 = vdwg.mxu0
    %v2031 = vmul.f32 %v1971, %v2028
    %v2032 = vadd.f32 %v2015, %v2031
    %v2033 = vtanh.pop %v2032
    %v2034 = vsub.f32 1.0, %v2004
    %v2035 = vmul.f32 %v2034, %v2033
    %v2036 = vmul.f32 %v2004, %v1808
    %v2037 = vadd.f32 %v2035, %v2036
    %v2038 = vsel %vm1903, %v2037, %v1808
    %vm2039 = vcmp.gt.s32.totalorder %v60, 7
    %2040 = vmatpush.bf16.msra.mxu0 0
    %2041 = vmatpush.bf16.msra.mxu0 0
    %2042 = vmatpush.bf16.msra.mxu0 0
    %2043 = vmatpush.bf16.msra.mxu0 0
    %2044 = vmatpush.bf16.msra.mxu0 0
    %2045 = vmatpush.bf16.msra.mxu0 0
    %2046 = vmatpush.bf16.msra.mxu0 %v268
    %2047 = vmatpush.bf16.msra.mxu0 %v267
    %2048 = vmatmul.bf16.gmra.mxu0 %v1937
    %v2049 = vpop.f32.mrf.mxu0
    %v2050 = vadd.f32 0.0, %v2049
    %v2051 = vpop.f32.mrf.mxu0
    %2052 = vdwg.mxu0
    %2053 = vmatpush.bf16.msra.mxu0 0
    %2054 = vmatpush.bf16.msra.mxu0 0
    %2055 = vmatpush.bf16.msra.mxu0 0
    %2056 = vmatpush.bf16.msra.mxu0 0
    %2057 = vmatpush.bf16.msra.mxu0 0
    %2058 = vmatpush.bf16.msra.mxu0 0
    %2059 = vmatpush.bf16.msra.mxu0 %v301
    %2060 = vmatpush.bf16.msra.mxu0 %v300
    %2061 = vmatmul.bf16.gmra.mxu0 %v1937
    %v2062 = vpop.f32.mrf.mxu0
    %v2063 = vadd.f32 0.0, %v2062
    %v2064 = vpop.f32.mrf.mxu0
    %2065 = vdwg.mxu0
    %v2066 = vadd.f32 %v145, %v2050
    %v2067 = vadd.f32 %v2066, %v324
    %v2068 = vxor.u32 %v2067, 2147483648
    %v2069 = vmul.f32 %v2068, 1.442695
    %v2070 = vpow.pop %v2069
    %v2071 = vadd.f32 %v2070, 1.0
    %v2072 = vrcp.pop %v2071
    %v2073 = vmul.f32 %v2071, %v2072
    %v2074 = vsub.f32 1.0, %v2073
    %v2075 = vmul.f32 %v2072, %v2074
    %v2076 = vadd.f32 %v2072, %v2075
    %vm2077 = vweird.f32 %v2071
    %vm2078 = vweird.f32 %v2072
    %vm2079 = vmor %vm2077, %vm2078
    %v2080 = vsel %vm2079, %v2072, %v2076
    %v2081 = vand.u32 2147483647, %v2071
    %vm2082 = vcmp.eq.f32.partialorder %v2081, 8.507059e+37
    %v2083 = vand.u32 %v2071, 2147483648
    %v2084 = vor.u32 1.1754944e-38, %v2083
    %v2085 = vsel %vm2082, %v2084, %v2080
    %v2086 = vmul.f32 1.0, %v2085
    %v2087 = vadd.f32 %v191, %v2063
    %v2088 = vadd.f32 %v2087, %v348
    %v2089 = vxor.u32 %v2088, 2147483648
    %v2090 = vmul.f32 %v2089, 1.442695
    %v2091 = vpow.pop %v2090
    %v2092 = vadd.f32 %v2091, 1.0
    %v2093 = vrcp.pop %v2092
    %v2094 = vmul.f32 %v2092, %v2093
    %v2095 = vsub.f32 1.0, %v2094
    %v2096 = vmul.f32 %v2093, %v2095
    %v2097 = vadd.f32 %v2093, %v2096
    %vm2098 = vweird.f32 %v2092
    %vm2099 = vweird.f32 %v2093
    %vm2100 = vmor %vm2098, %vm2099
    %v2101 = vsel %vm2100, %v2093, %v2097
    %v2102 = vand.u32 2147483647, %v2092
    %vm2103 = vcmp.eq.f32.partialorder %v2102, 8.507059e+37
    %v2104 = vand.u32 %v2092, 2147483648
    %v2105 = vor.u32 1.1754944e-38, %v2104
    %v2106 = vsel %vm2103, %v2105, %v2101
    %v2107 = vmul.f32 1.0, %v2106
    %v2108 = vadd.f32 %v237, %v371
    %2109 = vmatpush.bf16.msra.mxu0 0
    %2110 = vmatpush.bf16.msra.mxu0 0
    %2111 = vmatpush.bf16.msra.mxu0 0
    %2112 = vmatpush.bf16.msra.mxu0 0
    %2113 = vmatpush.bf16.msra.mxu0 0
    %2114 = vmatpush.bf16.msra.mxu0 0
    %2115 = vmatpush.bf16.msra.mxu0 %v386
    %2116 = vmatpush.bf16.msra.mxu0 %v385
    %2117 = vmatmul.bf16.gmra.mxu0 %v1937
    %v2118 = vpop.f32.mrf.mxu0
    %v2119 = vadd.f32 %v375, %v2118
    %v2120 = vpop.f32.mrf.mxu0
    %2121 = vdwg.mxu0
    %v2122 = vmul.f32 %v2086, %v2119
    %v2123 = vadd.f32 %v2108, %v2122
    %v2124 = vtanh.pop %v2123
    %v2125 = vsub.f32 1.0, %v2107
    %v2126 = vmul.f32 %v2125, %v2124
    %v2127 = vmul.f32 %v2107, %v1904
    %v2128 = vadd.f32 %v2126, %v2127
    %v2129 = vsel %vm2039, 1, 0
    %2130 = vset.pattern.permute.xlu0 0
    %2131 = vperm.xlu0 %2130, %v2129
    %v2132 = vpop.permute.xlu0 %2131
    %vm2133 = vcmp.eq.s32.totalorder %v2132, 1
    %v2134 = vsel %vm2133, %v2128, %v1904
    %v2135 = vpack.c.bf16 %v2038, %v2038
    %v2136 = vpack.c.bf16 %v2134, %v2134
    %v2138 = vsel %vm105, %v2135, 0
    %2140 = vmatpush.bf16.msra.mxu0 0
    %2141 = vmatpush.bf16.msra.mxu0 0
    %2142 = vmatpush.bf16.msra.mxu0 0
    %2143 = vmatpush.bf16.msra.mxu0 0
    %2144 = vmatpush.bf16.msra.mxu0 0
    %2145 = vmatpush.bf16.msra.mxu0 0
    %2146 = vmatpush.bf16.msra.mxu0 %v445
    %2147 = vmatpush.bf16.msra.mxu0 %v444
    %2148 = vmatmul.bf16.gmra.mxu0 %v2138
    %v2149 = vpop.f32.mrf.mxu0
    %v2150 = vadd.f32 0.0, %v2149
    %v2151 = vpop.f32.mrf.mxu0
    %2152 = vdwg.mxu0
    %2153 = vmatpush.bf16.msra.mxu0 0
    %2154 = vmatpush.bf16.msra.mxu0 0
    %2155 = vmatpush.bf16.msra.mxu0 0
    %2156 = vmatpush.bf16.msra.mxu0 0
    %2157 = vmatpush.bf16.msra.mxu0 0
    %2158 = vmatpush.bf16.msra.mxu0 0
    %2159 = vmatpush.bf16.msra.mxu0 %v475
    %2160 = vmatpush.bf16.msra.mxu0 %v474
    %2161 = vmatmul.bf16.gmra.mxu0 %v2138
    %v2162 = vpop.f32.mrf.mxu0
    %v2163 = vadd.f32 0.0, %v2162
    %v2164 = vpop.f32.mrf.mxu0
    %2165 = vdwg.mxu0
    %v2167 = vsel %vm105, %v2136, 0
    %2169 = vmatpush.bf16.msra.mxu0 0
    %2170 = vmatpush.bf16.msra.mxu0 0
    %2171 = vmatpush.bf16.msra.mxu0 0
    %2172 = vmatpush.bf16.msra.mxu0 0
    %2173 = vmatpush.bf16.msra.mxu0 0
    %2174 = vmatpush.bf16.msra.mxu0 0
    %2175 = vmatpush.bf16.msra.mxu0 %v505
    %2176 = vmatpush.bf16.msra.mxu0 %v504
    %2177 = vmatmul.bf16.gmra.mxu0 %v2167
    %v2178 = vpop.f32.mrf.mxu0
    %v2179 = vadd.f32 %v2150, %v2178
    %v2180 = vpop.f32.mrf.mxu0
    %2181 = vdwg.mxu0
    %v2182 = vadd.f32 %v2179, %v525
    %v2183 = vxor.u32 %v2182, 2147483648
    %v2184 = vmul.f32 %v2183, 1.442695
    %v2185 = vpow.pop %v2184
    %v2186 = vadd.f32 %v2185, 1.0
    %v2187 = vrcp.pop %v2186
    %v2188 = vmul.f32 %v2186, %v2187
    %v2189 = vsub.f32 1.0, %v2188
    %v2190 = vmul.f32 %v2187, %v2189
    %v2191 = vadd.f32 %v2187, %v2190
    %vm2192 = vweird.f32 %v2186
    %vm2193 = vweird.f32 %v2187
    %vm2194 = vmor %vm2192, %vm2193
    %v2195 = vsel %vm2194, %v2187, %v2191
    %v2196 = vand.u32 2147483647, %v2186
    %vm2197 = vcmp.eq.f32.partialorder %v2196, 8.507059e+37
    %v2198 = vand.u32 %v2186, 2147483648
    %v2199 = vor.u32 1.1754944e-38, %v2198
    %v2200 = vsel %vm2197, %v2199, %v2195
    %v2201 = vmul.f32 1.0, %v2200
    %2202 = vmatpush.bf16.msra.mxu0 0
    %2203 = vmatpush.bf16.msra.mxu0 0
    %2204 = vmatpush.bf16.msra.mxu0 0
    %2205 = vmatpush.bf16.msra.mxu0 0
    %2206 = vmatpush.bf16.msra.mxu0 0
    %2207 = vmatpush.bf16.msra.mxu0 0
    %2208 = vmatpush.bf16.msra.mxu0 %v556
    %2209 = vmatpush.bf16.msra.mxu0 %v555
    %2210 = vmatmul.bf16.gmra.mxu0 %v2167
    %v2211 = vpop.f32.mrf.mxu0
    %v2212 = vadd.f32 %v2163, %v2211
    %v2213 = vpop.f32.mrf.mxu0
    %2214 = vdwg.mxu0
    %v2215 = vadd.f32 %v2212, %v573
    %v2216 = vxor.u32 %v2215, 2147483648
    %v2217 = vmul.f32 %v2216, 1.442695
    %v2218 = vpow.pop %v2217
    %v2219 = vadd.f32 %v2218, 1.0
    %v2220 = vrcp.pop %v2219
    %v2221 = vmul.f32 %v2219, %v2220
    %v2222 = vsub.f32 1.0, %v2221
    %v2223 = vmul.f32 %v2220, %v2222
    %v2224 = vadd.f32 %v2220, %v2223
    %vm2225 = vweird.f32 %v2219
    %vm2226 = vweird.f32 %v2220
    %vm2227 = vmor %vm2225, %vm2226
    %v2228 = vsel %vm2227, %v2220, %v2224
    %v2229 = vand.u32 2147483647, %v2219
    %vm2230 = vcmp.eq.f32.partialorder %v2229, 8.507059e+37
    %v2231 = vand.u32 %v2219, 2147483648
    %v2232 = vor.u32 1.1754944e-38, %v2231
    %v2233 = vsel %vm2230, %v2232, %v2228
    %v2234 = vmul.f32 1.0, %v2233
    %2235 = vmatpush.bf16.msra.mxu0 0
    %2236 = vmatpush.bf16.msra.mxu0 0
    %2237 = vmatpush.bf16.msra.mxu0 0
    %2238 = vmatpush.bf16.msra.mxu0 0
    %2239 = vmatpush.bf16.msra.mxu0 0
    %2240 = vmatpush.bf16.msra.mxu0 0
    %2241 = vmatpush.bf16.msra.mxu0 %v607
    %2242 = vmatpush.bf16.msra.mxu0 %v606
    %2243 = vmatmul.bf16.gmra.mxu0 %v2167
    %v2244 = vpop.f32.mrf.mxu0
    %v2245 = vadd.f32 %v596, %v2244
    %v2246 = vpop.f32.mrf.mxu0
    %2247 = vdwg.mxu0
    %2248 = vmatpush.bf16.msra.mxu0 0
    %2249 = vmatpush.bf16.msra.mxu0 0
    %2250 = vmatpush.bf16.msra.mxu0 0
    %2251 = vmatpush.bf16.msra.mxu0 0
    %2252 = vmatpush.bf16.msra.mxu0 0
    %2253 = vmatpush.bf16.msra.mxu0 0
    %2254 = vmatpush.bf16.msra.mxu0 %v635
    %2255 = vmatpush.bf16.msra.mxu0 %v634
    %2256 = vmatmul.bf16.gmra.mxu0 %v2138
    %v2257 = vpop.f32.mrf.mxu0
    %v2258 = vadd.f32 %v624, %v2257
    %v2259 = vpop.f32.mrf.mxu0
    %2260 = vdwg.mxu0
    %v2261 = vmul.f32 %v2201, %v2258
    %v2262 = vadd.f32 %v2245, %v2261
    %v2263 = vtanh.pop %v2262
    %v2264 = vsub.f32 1.0, %v2234
    %v2265 = vmul.f32 %v2264, %v2263
    %v2266 = vmul.f32 %v2234, %v2038
    %v2267 = vadd.f32 %v2265, %v2266
    %v2268 = vsel %vm2133, %v2267, %v2038
    %v2269 = vpack.c.bf16 %v2268, %v2268
    %v2270 = vld [vmem:[%s5] sm:$0xf]
    %v2271 = vld [vmem:[%s5 + $0x4] sm:$0xf]
    %v2272 = vld [vmem:[%s5 + $0x8] sm:$0xf]
    %v2273 = vld [vmem:[%s5 + $0xc] sm:$0xf]
    %v2274 = vld [vmem:[%s6] sm:$0x1]
    %v2276 = vperm.slane %v2274, 0
    %v2282 = vunpack.c.l.b16 %v2270
    %v2283 = vunpack.c.l.b16 %v2271
    %v2284 = vunpack.c.l.b16 %v2272
    %v2285 = vunpack.c.l.b16 %v2273
    %v2286 = vpack.c.b16 %v2283, %v2282
    %v2287 = vpack.c.b16 %v2285, %v2284
    %v2291 = vsel %vm105, %v2269, 0
    %2293 = vmatpush.bf16.msra.mxu0 0
    %2294 = vmatpush.bf16.msra.mxu0 0
    %2295 = vmatpush.bf16.msra.mxu0 0
    %2296 = vmatpush.bf16.msra.mxu0 0
    %2297 = vmatpush.bf16.msra.mxu0 0
    %2298 = vmatpush.bf16.msra.mxu0 0
    %2299 = vmatpush.bf16.msra.mxu0 %v2287
    %2300 = vmatpush.bf16.msra.mxu0 %v2286
    %2301 = vmatmul.bf16.gmra.mxu0 %v2291
    %v2302 = vpop.f32.mrf.mxu0
    %v2303 = vadd.f32 %v2276, %v2302
    %v2304 = vpop.f32.mrf.mxu0
    %2305 = vdwg.mxu0
    %v2306 = vxor.u32 %v2303, 2147483648
    %v2307 = vmul.f32 %v2306, 1.442695
    %v2308 = vpow.pop %v2307
    %v2309 = vadd.f32 %v2308, 1.0
    %v2310 = vrcp.pop %v2309
    %v2311 = vmul.f32 %v2309, %v2310
    %v2312 = vsub.f32 1.0, %v2311
    %v2313 = vmul.f32 %v2310, %v2312
    %v2314 = vadd.f32 %v2310, %v2313
    %vm2315 = vweird.f32 %v2309
    %vm2316 = vweird.f32 %v2310
    %vm2317 = vmor %vm2315, %vm2316
    %v2318 = vsel %vm2317, %v2310, %v2314
    %v2319 = vand.u32 2147483647, %v2309
    %vm2320 = vcmp.eq.f32.partialorder %v2319, 8.507059e+37
    %v2321 = vand.u32 %v2309, 2147483648
    %v2322 = vor.u32 1.1754944e-38, %v2321
    %v2323 = vsel %vm2320, %v2322, %v2318
    %v2324 = vmul.f32 1.0, %v2323
    %2325 = vst [vmem:[#allocation7] sm:$0xff] %v2324
    // Predicated region
    $region38: #{tpu_custom_call.1} parent=1 // pred_check
      _
    $region39: #{tpu_custom_call.1} parent=1 // pred_check_branch
      %2327 = sbr.rel (0) target = $region41
    $region40: #{tpu_custom_call.1} parent=1 // pred_region
      %2329 = vsyncadd [#allocation4], 0
      %s2331 = sshll.u32 [#allocation7], 4
      %s2332 = int_to_ptr.vmem [resolvable:$true] %s2331
      %s2333 = sshll.u32 %s7, 4
      %s2334 = int_to_ptr.hbm [resolvable:$true] %s2333
      %2336 = dma.vmem_to_hbm [thread:$0]  %s2332, 128, %s2334, [#allocation4]
    $region41: #{tpu_custom_call.1} parent=1 // pred_fallthru
      _
    // Predicated region
    $region42: #{tpu_custom_call.1} parent=1 // pred_check
      _
    $region43: #{tpu_custom_call.1} parent=1 // pred_check_branch
      %2338 = sbr.rel (0) target = $region45
    $region44: #{tpu_custom_call.1} parent=1 // pred_region
      %2340 = dma.done [#allocation4], 128
    $region45: #{tpu_custom_call.1} parent=1 // pred_fallthru
      _
    %2341 = vsyncpa [#allocation3], 1
    %2342 = vsyncpa [#allocation6], 1
    %2343 = vsyncpa [#allocation4], 1

</llo_original>
